<compile_context>
chip_gen: v5e
topology: v5e:2x2
jax: 0.10.0
libtpu: 0.0.40
codegen_flags: <defaults>
</compile_context>

<pallas_src>
import jax
import jax.numpy as jnp
from jax import lax
from jax.experimental import pallas as pl
from jax.experimental.pallas import tpu as pltpu

HIDDEN = 128
INPUT_SIZE = 28
NUM_CLASSES = 10
NUM_LAYERS = 2                  # two stacked LSTM layers, hard-wired below
FC_PAD = 128                    # lane-dense FC output width
MXU_DTYPE = jnp.bfloat16        # MXU operands only; gate math stays f32


def lstm_fc_kernel(x_ref,        # ((T+1)*B, IN) bf16 time-major (+1 dummy zero step)
                   wih_ref,      # (IN, 8H)  bf16  layer-0 input weights, interleaved
                   bias_ref,     # (1, 8H)   f32   b0/b1 at their gate slots
                   wf_ref,       # (2H, 8H)  bf16  fused recurrent weights
                   wfc_ref,      # (H, 128)  bf16  padded FC weight
                   bfc_ref,      # (1, 128)  f32   padded FC bias
                   out_ref,      # (B, 128)  f32
                   addend_ref):  # ((T+1)*B, 8H) f32 scratch: hoisted projection
    H = HIDDEN
    B = out_ref.shape[0]
    T = x_ref.shape[0] // B - 1

    # Hoisted input projection + ALL biases for ALL timesteps, in one MXU
    # matmul, already in the interleaved gate layout (i0,i1,f0,f1,o0,o1,g0,g1).
    # (Layer-1 columns of wih are zero, so they end up holding just b1.)
    addend_ref[...] = (
        jnp.dot(x_ref[...], wih_ref[...], preferred_element_type=jnp.float32)
        + bias_ref[...])

    wf = wf_ref[...]   # fused recurrent weight stays resident for the loop

    # Prologue: layer-0 cell at t=0.  h0_{-1}=c0_{-1}=0, so only the input
    # projection contributes and the forget gate (x0) is skipped.
    a0 = addend_ref[pl.ds(0, B), :]
    c0 = jax.nn.sigmoid(a0[:, 0:H]) * jnp.tanh(a0[:, 6 * H:7 * H])
    h0 = jax.nn.sigmoid(a0[:, 4 * H:5 * H]) * jnp.tanh(c0)

    zeros = jnp.zeros_like(c0)
    c = jnp.concatenate([c0, zeros], axis=1)                        # (B,2H) f32
    hin = jnp.concatenate([h0, zeros], axis=1).astype(MXU_DTYPE)    # (B,2H) bf16

    def wavefront(row, hin, c):
        # One fused matmul per serial step: computes layer-1 gates for time t
        # and the recurrent half of layer-0 gates for time t+1.
        fused = jnp.dot(hin, wf, preferred_element_type=jnp.float32)  # (B,8H)
        gates = fused + addend_ref[pl.ds(row, B), :]
        sig = jax.nn.sigmoid(gates[:, 0:6 * H])        # one wide EUP op
        g = jnp.tanh(gates[:, 6 * H:8 * H])
        c_new = sig[:, 2 * H:4 * H] * c + sig[:, 0:2 * H] * g   # [c0'|c1']
        h_new = sig[:, 4 * H:6 * H] * jnp.tanh(c_new)           # [h0'|h1']
        return h_new.astype(MXU_DTYPE), c_new

    if T <= 32:
        # Fully unrolled time loop (T static): no per-step loop scaffolding
        # on this latency-bound recurrence.
        for t in range(T):
            hin, c = wavefront((t + 1) * B, hin, c)
    else:
        def body(t, carry):
            hin, c = carry
            return wavefront(pl.multiple_of((t + 1) * B, 8), hin, c)
        hin, c = lax.fori_loop(0, T, body, (hin, c), unroll=4)

    # FC on the last timestep's top-layer hidden state (== out[:, -1, :]).
    # Lane-dense 128-wide output (sliced back to NUM_CLASSES in the wrapper).
    h1 = hin[:, H:2 * H]
    out_ref[...] = (jnp.dot(h1, wfc_ref[...], preferred_element_type=jnp.float32)
                    + bfc_ref[...])


def _round_up(x, m):
    return (x + m - 1) // m * m


def init_params(key):
    """Deterministic PyTorch-style init: U(-1/sqrt(H), 1/sqrt(H))."""
    k = 1.0 / jnp.sqrt(jnp.float32(HIDDEN))
    keys = jax.random.split(key, 10)

    def u(kk, shape):
        return jax.random.uniform(kk, shape, jnp.float32, -k, k)

    return dict(
        # nn.LSTM layer 0 (PyTorch layout, gate order i,f,g,o along 4H)
        w_ih0=u(keys[0], (4 * HIDDEN, INPUT_SIZE)),
        w_hh0=u(keys[1], (4 * HIDDEN, HIDDEN)),
        b_ih0=u(keys[2], (4 * HIDDEN,)),
        b_hh0=u(keys[3], (4 * HIDDEN,)),
        # nn.LSTM layer 1
        w_ih1=u(keys[4], (4 * HIDDEN, HIDDEN)),
        w_hh1=u(keys[5], (4 * HIDDEN, HIDDEN)),
        b_ih1=u(keys[6], (4 * HIDDEN,)),
        b_hh1=u(keys[7], (4 * HIDDEN,)),
        # nn.Linear(HIDDEN, NUM_CLASSES)
        w_fc=u(keys[8], (NUM_CLASSES, HIDDEN)),
        b_fc=u(keys[9], (NUM_CLASSES,)),
    )


def _prepare_params(p):
    """PyTorch layout -> fused-wavefront kernel layout.

    Gate columns are interleaved as (i0, i1, f0, f1, o0, o1, g0, g1), each of
    width H, so both layers' cells update jointly on (B, 2H) blocks and the
    new hidden state comes out pre-concatenated as [h0 | h1]."""
    H = HIDDEN

    def split4(w):   # (4H, X), PyTorch gate rows (i, f, g, o) -> 4 x (H, X)
        return jnp.split(w, 4, axis=0)

    i0, f0, g0, o0 = split4(p["w_ih0"])          # (H, IN)  x -> layer-0 gates
    hi0, hf0, hg0, ho0 = split4(p["w_hh0"])      # (H, H)   h0 -> layer-0 gates
    i1, f1, g1, o1 = split4(p["w_ih1"])          # (H, H)   h0 -> layer-1 gates
    hi1, hf1, hg1, ho1 = split4(p["w_hh1"])      # (H, H)   h1 -> layer-1 gates

    z_in = jnp.zeros((INPUT_SIZE, H), jnp.float32)
    # (IN, 8H): layer-0 gate slots hold Wih0^T, layer-1 slots are zero.
    wih_big = jnp.concatenate(
        [i0.T, z_in, f0.T, z_in, o0.T, z_in, g0.T, z_in],
        axis=1).astype(MXU_DTYPE)

    b0 = p["b_ih0"] + p["b_hh0"]
    b1 = p["b_ih1"] + p["b_hh1"]
    b0i, b0f, b0g, b0o = jnp.split(b0, 4)
    b1i, b1f, b1g, b1o = jnp.split(b1, 4)
    bias_big = jnp.concatenate(
        [b0i, b1i, b0f, b1f, b0o, b1o, b0g, b1g])[None, :].astype(jnp.float32)

    z_h = jnp.zeros((H, H), jnp.float32)
    # rows 0:H multiply h0_t; rows H:2H multiply h1_{t-1}
    top = jnp.concatenate(
        [hi0.T, i1.T, hf0.T, f1.T, ho0.T, o1.T, hg0.T, g1.T], axis=1)
    bot = jnp.concatenate(
        [z_h, hi1.T, z_h, hf1.T, z_h, ho1.T, z_h, hg1.T], axis=1)
    w_fused = jnp.concatenate([top, bot], axis=0).astype(MXU_DTYPE)   # (2H, 8H)

    wfc = jnp.zeros((H, FC_PAD), jnp.float32).at[:, :NUM_CLASSES].set(p["w_fc"].T)
    bfc = jnp.zeros((1, FC_PAD), jnp.float32).at[0, :NUM_CLASSES].set(p["b_fc"])
    return wih_big, bias_big, w_fused, wfc.astype(MXU_DTYPE), bfc


@jax.jit
def rnn_forward(x, params):
    """x: (B, T, INPUT_SIZE), batch_first=True like the PyTorch module."""
    B, T, D = x.shape
    assert D == INPUT_SIZE
    wih_big, bias_big, w_fused, wfc, bfc = _prepare_params(params)

    # Pad batch to the 8-sublane tile; time-major with ONE extra zero timestep
    # (dummy target for the final wavefront's layer-0 half, which is unused).
    B_pad = max(8, _round_up(B, 8))
    x_p = jnp.zeros((T + 1, B_pad, D), jnp.float32)
    x_p = x_p.at[:T, :B].set(jnp.transpose(x, (1, 0, 2)).astype(jnp.float32))
    x_tm = x_p.reshape((T + 1) * B_pad, D).astype(MXU_DTYPE)

    vspec = pl.BlockSpec(memory_space=pltpu.MemorySpace.VMEM)
    out = pl.pallas_call(
        lstm_fc_kernel,
        out_shape=jax.ShapeDtypeStruct((B_pad, FC_PAD), jnp.float32),
        in_specs=[vspec] * 6,
        out_specs=vspec,
        scratch_shapes=[
            pltpu.VMEM(((T + 1) * B_pad, 8 * HIDDEN), jnp.float32)],
    )(x_tm, wih_big, bias_big, w_fused, wfc, bfc)
    return out[:B, :NUM_CLASSES]


def lstm_fc_reference(x, p):
    """Pure-JAX f32 reference matching nn.LSTM(batch_first=True) + fc."""
    B, T, _ = x.shape
    H = HIDDEN

    def cell(x_t, h, c, w_ih, w_hh, b_ih, b_hh):
        gates = x_t @ w_ih.T + h @ w_hh.T + b_ih + b_hh
        i = jax.nn.sigmoid(gates[:, 0:H])
        f = jax.nn.sigmoid(gates[:, H:2 * H])
        g = jnp.tanh(gates[:, 2 * H:3 * H])
        o = jax.nn.sigmoid(gates[:, 3 * H:4 * H])
        c = f * c + i * g
        h = o * jnp.tanh(c)
        return h, c

    h0 = c0 = jnp.zeros((B, H), jnp.float32)
    h1 = c1 = jnp.zeros((B, H), jnp.float32)
    for t in range(T):
        h0, c0 = cell(x[:, t], h0, c0,
                      p["w_ih0"], p["w_hh0"], p["b_ih0"], p["b_hh0"])
        h1, c1 = cell(h0, h1, c1,
                      p["w_ih1"], p["w_hh1"], p["b_ih1"], p["b_hh1"])
    return h1 @ p["w_fc"].T + p["b_fc"]


if __name__ == "__main__":
    key = jax.random.PRNGKey(0)
    k_param, k_x = jax.random.split(key)
    params = init_params(k_param)

    batch, seq = 2, 8
    x = jax.random.normal(k_x, (batch, seq, INPUT_SIZE), jnp.float32)

    out = rnn_forward(x, params)
    jax.block_until_ready(out)
    assert out.shape == (batch, NUM_CLASSES)

    ref = lstm_fc_reference(x, params)
    max_err = float(jnp.max(jnp.abs(out - ref)))
    assert max_err < 0.1, f"mismatch vs f32 reference: {max_err}"

    print("KERNEL_OK")
</pallas_src>

<mosaic_0001>
module attributes {stable_mosaic.version = 11 : i64} {
  func.func @lstm_fc_kernel(%arg0: memref<72x28xbf16, #tpu.memory_space<vmem>>, %arg1: memref<28x1024xbf16, #tpu.memory_space<vmem>>, %arg2: memref<1x1024xf32, #tpu.memory_space<vmem>>, %arg3: memref<256x1024xbf16, #tpu.memory_space<vmem>>, %arg4: memref<128x128xbf16, #tpu.memory_space<vmem>>, %arg5: memref<1x128xf32, #tpu.memory_space<vmem>>, %arg6: memref<8x128xf32, #tpu.memory_space<vmem>>, %arg7: memref<72x1024xf32, #tpu.memory_space<vmem>>) attributes {dimension_semantics = [], scalar_prefetch = 0 : i64, scratch_operands = 1 : i64, tpu.core_type = #tpu.core_type<tc>} {
    %c0 = arith.constant 0 : index
    %c0_0 = arith.constant 0 : index
    %0 = vector.load %arg0[%c0, %c0_0] : memref<72x28xbf16, #tpu.memory_space<vmem>>, vector<72x28xbf16>
    %c0_1 = arith.constant 0 : index
    %c0_2 = arith.constant 0 : index
    %1 = vector.load %arg1[%c0_1, %c0_2] : memref<28x1024xbf16, #tpu.memory_space<vmem>>, vector<28x1024xbf16>
    %cst = arith.constant dense<0.000000e+00> : vector<72x1024xf32>
    %2 = tpu.matmul %0, %1, %cst {dimension_numbers = #tpu.dot_dimension_numbers<[1], [0], [0], [1], [0, 0, 1, 1], [], []>} : vector<72x28xbf16>, vector<28x1024xbf16>, vector<72x1024xf32> -> vector<72x1024xf32>
    %c0_3 = arith.constant 0 : index
    %c0_4 = arith.constant 0 : index
    %3 = vector.load %arg2[%c0_3, %c0_4] : memref<1x1024xf32, #tpu.memory_space<vmem>>, vector<1x1024xf32>
    %4 = vector.broadcast %3 : vector<1x1024xf32> to vector<72x1024xf32>
    %5 = arith.addf %2, %4 : vector<72x1024xf32>
    %c0_5 = arith.constant 0 : index
    %c0_6 = arith.constant 0 : index
    %6 = vector.load %arg7[%c0_5, %c0_6] : memref<72x1024xf32, #tpu.memory_space<vmem>>, vector<72x1024xf32>
    tpu.vector_store %arg7[%c0_5, %c0_6], %5 {strides = array<i32>} : memref<72x1024xf32, #tpu.memory_space<vmem>>, vector<72x1024xf32>,
    %c0_7 = arith.constant 0 : index
    %c0_8 = arith.constant 0 : index
    %7 = vector.load %arg3[%c0_7, %c0_8] : memref<256x1024xbf16, #tpu.memory_space<vmem>>, vector<256x1024xbf16>
    %c0_9 = arith.constant 0 : index
    %c0_10 = arith.constant 0 : index
    %8 = vector.load %arg7[%c0_9, %c0_10] : memref<72x1024xf32, #tpu.memory_space<vmem>>, vector<8x1024xf32>
    %9 = vector.extract_strided_slice %8 {offsets = [0, 0], sizes = [8, 128], strides = [1, 1]} : vector<8x1024xf32> to vector<8x128xf32>
    %10 = arith.negf %9 : vector<8x128xf32>
    %11 = math.exp %10 : vector<8x128xf32>
    %cst_11 = arith.constant 1.000000e+00 : f32
    %12 = vector.broadcast %cst_11 : f32 to vector<8x128xf32>
    %13 = arith.addf %12, %11 : vector<8x128xf32>
    %14 = arith.divf %12, %13 : vector<8x128xf32>
    %15 = vector.extract_strided_slice %8 {offsets = [0, 768], sizes = [8, 128], strides = [1, 1]} : vector<8x1024xf32> to vector<8x128xf32>
    %16 = math.tanh %15 : vector<8x128xf32>
    %17 = arith.mulf %14, %16 : vector<8x128xf32>
    %18 = vector.extract_strided_slice %8 {offsets = [0, 512], sizes = [8, 128], strides = [1, 1]} : vector<8x1024xf32> to vector<8x128xf32>
    %19 = arith.negf %18 : vector<8x128xf32>
    %20 = math.exp %19 : vector<8x128xf32>
    %cst_12 = arith.constant 1.000000e+00 : f32
    %21 = vector.broadcast %cst_12 : f32 to vector<8x128xf32>
    %22 = arith.addf %21, %20 : vector<8x128xf32>
    %23 = arith.divf %21, %22 : vector<8x128xf32>
    %24 = math.tanh %17 : vector<8x128xf32>
    %25 = arith.mulf %23, %24 : vector<8x128xf32>
    %cst_13 = arith.constant 0.000000e+00 : f32
    %26 = vector.broadcast %cst_13 : f32 to vector<8x128xf32>
    %27 = tpu.concatenate %17, %26 in 1 : vector<8x128xf32>, vector<8x128xf32> -> vector<8x256xf32>
    %28 = tpu.concatenate %25, %26 in 1 : vector<8x128xf32>, vector<8x128xf32> -> vector<8x256xf32>
    %29 = arith.truncf %28 : vector<8x256xf32> to vector<8x256xbf16>
    %cst_14 = arith.constant dense<0.000000e+00> : vector<8x1024xf32>
    %30 = tpu.matmul %29, %7, %cst_14 {dimension_numbers = #tpu.dot_dimension_numbers<[1], [0], [0], [1], [0, 0, 1, 1], [], []>} : vector<8x256xbf16>, vector<256x1024xbf16>, vector<8x1024xf32> -> vector<8x1024xf32>
    %c8 = arith.constant 8 : index
    %c0_15 = arith.constant 0 : index
    %31 = vector.load %arg7[%c8, %c0_15] : memref<72x1024xf32, #tpu.memory_space<vmem>>, vector<8x1024xf32>
    %32 = arith.addf %30, %31 : vector<8x1024xf32>
    %33 = vector.extract_strided_slice %32 {offsets = [0, 0], sizes = [8, 768], strides = [1, 1]} : vector<8x1024xf32> to vector<8x768xf32>
    %34 = arith.negf %33 : vector<8x768xf32>
    %35 = math.exp %34 : vector<8x768xf32>
    %cst_16 = arith.constant 1.000000e+00 : f32
    %36 = vector.broadcast %cst_16 : f32 to vector<8x768xf32>
    %37 = arith.addf %36, %35 : vector<8x768xf32>
    %38 = arith.divf %36, %37 : vector<8x768xf32>
    %39 = vector.extract_strided_slice %32 {offsets = [0, 768], sizes = [8, 256], strides = [1, 1]} : vector<8x1024xf32> to vector<8x256xf32>
    %40 = math.tanh %39 : vector<8x256xf32>
    %41 = vector.extract_strided_slice %38 {offsets = [0, 256], sizes = [8, 256], strides = [1, 1]} : vector<8x768xf32> to vector<8x256xf32>
    %42 = arith.mulf %41, %27 : vector<8x256xf32>
    %43 = vector.extract_strided_slice %38 {offsets = [0, 0], sizes = [8, 256], strides = [1, 1]} : vector<8x768xf32> to vector<8x256xf32>
    %44 = arith.mulf %43, %40 : vector<8x256xf32>
    %45 = arith.addf %42, %44 : vector<8x256xf32>
    %46 = vector.extract_strided_slice %38 {offsets = [0, 512], sizes = [8, 256], strides = [1, 1]} : vector<8x768xf32> to vector<8x256xf32>
    %47 = math.tanh %45 : vector<8x256xf32>
    %48 = arith.mulf %46, %47 : vector<8x256xf32>
    %49 = arith.truncf %48 : vector<8x256xf32> to vector<8x256xbf16>
    %cst_17 = arith.constant dense<0.000000e+00> : vector<8x1024xf32>
    %50 = tpu.matmul %49, %7, %cst_17 {dimension_numbers = #tpu.dot_dimension_numbers<[1], [0], [0], [1], [0, 0, 1, 1], [], []>} : vector<8x256xbf16>, vector<256x1024xbf16>, vector<8x1024xf32> -> vector<8x1024xf32>
    %c16 = arith.constant 16 : index
    %c0_18 = arith.constant 0 : index
    %51 = vector.load %arg7[%c16, %c0_18] : memref<72x1024xf32, #tpu.memory_space<vmem>>, vector<8x1024xf32>
    %52 = arith.addf %50, %51 : vector<8x1024xf32>
    %53 = vector.extract_strided_slice %52 {offsets = [0, 0], sizes = [8, 768], strides = [1, 1]} : vector<8x1024xf32> to vector<8x768xf32>
    %54 = arith.negf %53 : vector<8x768xf32>
    %55 = math.exp %54 : vector<8x768xf32>
    %cst_19 = arith.constant 1.000000e+00 : f32
    %56 = vector.broadcast %cst_19 : f32 to vector<8x768xf32>
    %57 = arith.addf %56, %55 : vector<8x768xf32>
    %58 = arith.divf %56, %57 : vector<8x768xf32>
    %59 = vector.extract_strided_slice %52 {offsets = [0, 768], sizes = [8, 256], strides = [1, 1]} : vector<8x1024xf32> to vector<8x256xf32>
    %60 = math.tanh %59 : vector<8x256xf32>
    %61 = vector.extract_strided_slice %58 {offsets = [0, 256], sizes = [8, 256], strides = [1, 1]} : vector<8x768xf32> to vector<8x256xf32>
    %62 = arith.mulf %61, %45 : vector<8x256xf32>
    %63 = vector.extract_strided_slice %58 {offsets = [0, 0], sizes = [8, 256], strides = [1, 1]} : vector<8x768xf32> to vector<8x256xf32>
    %64 = arith.mulf %63, %60 : vector<8x256xf32>
    %65 = arith.addf %62, %64 : vector<8x256xf32>
    %66 = vector.extract_strided_slice %58 {offsets = [0, 512], sizes = [8, 256], strides = [1, 1]} : vector<8x768xf32> to vector<8x256xf32>
    %67 = math.tanh %65 : vector<8x256xf32>
    %68 = arith.mulf %66, %67 : vector<8x256xf32>
    %69 = arith.truncf %68 : vector<8x256xf32> to vector<8x256xbf16>
    %cst_20 = arith.constant dense<0.000000e+00> : vector<8x1024xf32>
    %70 = tpu.matmul %69, %7, %cst_20 {dimension_numbers = #tpu.dot_dimension_numbers<[1], [0], [0], [1], [0, 0, 1, 1], [], []>} : vector<8x256xbf16>, vector<256x1024xbf16>, vector<8x1024xf32> -> vector<8x1024xf32>
    %c24 = arith.constant 24 : index
    %c0_21 = arith.constant 0 : index
    %71 = vector.load %arg7[%c24, %c0_21] : memref<72x1024xf32, #tpu.memory_space<vmem>>, vector<8x1024xf32>
    %72 = arith.addf %70, %71 : vector<8x1024xf32>
    %73 = vector.extract_strided_slice %72 {offsets = [0, 0], sizes = [8, 768], strides = [1, 1]} : vector<8x1024xf32> to vector<8x768xf32>
    %74 = arith.negf %73 : vector<8x768xf32>
    %75 = math.exp %74 : vector<8x768xf32>
    %cst_22 = arith.constant 1.000000e+00 : f32
    %76 = vector.broadcast %cst_22 : f32 to vector<8x768xf32>
    %77 = arith.addf %76, %75 : vector<8x768xf32>
    %78 = arith.divf %76, %77 : vector<8x768xf32>
    %79 = vector.extract_strided_slice %72 {offsets = [0, 768], sizes = [8, 256], strides = [1, 1]} : vector<8x1024xf32> to vector<8x256xf32>
    %80 = math.tanh %79 : vector<8x256xf32>
    %81 = vector.extract_strided_slice %78 {offsets = [0, 256], sizes = [8, 256], strides = [1, 1]} : vector<8x768xf32> to vector<8x256xf32>
    %82 = arith.mulf %81, %65 : vector<8x256xf32>
    %83 = vector.extract_strided_slice %78 {offsets = [0, 0], sizes = [8, 256], strides = [1, 1]} : vector<8x768xf32> to vector<8x256xf32>
    %84 = arith.mulf %83, %80 : vector<8x256xf32>
    %85 = arith.addf %82, %84 : vector<8x256xf32>
    %86 = vector.extract_strided_slice %78 {offsets = [0, 512], sizes = [8, 256], strides = [1, 1]} : vector<8x768xf32> to vector<8x256xf32>
    %87 = math.tanh %85 : vector<8x256xf32>
    %88 = arith.mulf %86, %87 : vector<8x256xf32>
    %89 = arith.truncf %88 : vector<8x256xf32> to vector<8x256xbf16>
    %cst_23 = arith.constant dense<0.000000e+00> : vector<8x1024xf32>
    %90 = tpu.matmul %89, %7, %cst_23 {dimension_numbers = #tpu.dot_dimension_numbers<[1], [0], [0], [1], [0, 0, 1, 1], [], []>} : vector<8x256xbf16>, vector<256x1024xbf16>, vector<8x1024xf32> -> vector<8x1024xf32>
    %c32 = arith.constant 32 : index
    %c0_24 = arith.constant 0 : index
    %91 = vector.load %arg7[%c32, %c0_24] : memref<72x1024xf32, #tpu.memory_space<vmem>>, vector<8x1024xf32>
    %92 = arith.addf %90, %91 : vector<8x1024xf32>
    %93 = vector.extract_strided_slice %92 {offsets = [0, 0], sizes = [8, 768], strides = [1, 1]} : vector<8x1024xf32> to vector<8x768xf32>
    %94 = arith.negf %93 : vector<8x768xf32>
    %95 = math.exp %94 : vector<8x768xf32>
    %cst_25 = arith.constant 1.000000e+00 : f32
    %96 = vector.broadcast %cst_25 : f32 to vector<8x768xf32>
    %97 = arith.addf %96, %95 : vector<8x768xf32>
    %98 = arith.divf %96, %97 : vector<8x768xf32>
    %99 = vector.extract_strided_slice %92 {offsets = [0, 768], sizes = [8, 256], strides = [1, 1]} : vector<8x1024xf32> to vector<8x256xf32>
    %100 = math.tanh %99 : vector<8x256xf32>
    %101 = vector.extract_strided_slice %98 {offsets = [0, 256], sizes = [8, 256], strides = [1, 1]} : vector<8x768xf32> to vector<8x256xf32>
    %102 = arith.mulf %101, %85 : vector<8x256xf32>
    %103 = vector.extract_strided_slice %98 {offsets = [0, 0], sizes = [8, 256], strides = [1, 1]} : vector<8x768xf32> to vector<8x256xf32>
    %104 = arith.mulf %103, %100 : vector<8x256xf32>
    %105 = arith.addf %102, %104 : vector<8x256xf32>
    %106 = vector.extract_strided_slice %98 {offsets = [0, 512], sizes = [8, 256], strides = [1, 1]} : vector<8x768xf32> to vector<8x256xf32>
    %107 = math.tanh %105 : vector<8x256xf32>
    %108 = arith.mulf %106, %107 : vector<8x256xf32>
    %109 = arith.truncf %108 : vector<8x256xf32> to vector<8x256xbf16>
    %cst_26 = arith.constant dense<0.000000e+00> : vector<8x1024xf32>
    %110 = tpu.matmul %109, %7, %cst_26 {dimension_numbers = #tpu.dot_dimension_numbers<[1], [0], [0], [1], [0, 0, 1, 1], [], []>} : vector<8x256xbf16>, vector<256x1024xbf16>, vector<8x1024xf32> -> vector<8x1024xf32>
    %c40 = arith.constant 40 : index
    %c0_27 = arith.constant 0 : index
    %111 = vector.load %arg7[%c40, %c0_27] : memref<72x1024xf32, #tpu.memory_space<vmem>>, vector<8x1024xf32>
    %112 = arith.addf %110, %111 : vector<8x1024xf32>
    %113 = vector.extract_strided_slice %112 {offsets = [0, 0], sizes = [8, 768], strides = [1, 1]} : vector<8x1024xf32> to vector<8x768xf32>
    %114 = arith.negf %113 : vector<8x768xf32>
    %115 = math.exp %114 : vector<8x768xf32>
    %cst_28 = arith.constant 1.000000e+00 : f32
    %116 = vector.broadcast %cst_28 : f32 to vector<8x768xf32>
    %117 = arith.addf %116, %115 : vector<8x768xf32>
    %118 = arith.divf %116, %117 : vector<8x768xf32>
    %119 = vector.extract_strided_slice %112 {offsets = [0, 768], sizes = [8, 256], strides = [1, 1]} : vector<8x1024xf32> to vector<8x256xf32>
    %120 = math.tanh %119 : vector<8x256xf32>
    %121 = vector.extract_strided_slice %118 {offsets = [0, 256], sizes = [8, 256], strides = [1, 1]} : vector<8x768xf32> to vector<8x256xf32>
    %122 = arith.mulf %121, %105 : vector<8x256xf32>
    %123 = vector.extract_strided_slice %118 {offsets = [0, 0], sizes = [8, 256], strides = [1, 1]} : vector<8x768xf32> to vector<8x256xf32>
    %124 = arith.mulf %123, %120 : vector<8x256xf32>
    %125 = arith.addf %122, %124 : vector<8x256xf32>
    %126 = vector.extract_strided_slice %118 {offsets = [0, 512], sizes = [8, 256], strides = [1, 1]} : vector<8x768xf32> to vector<8x256xf32>
    %127 = math.tanh %125 : vector<8x256xf32>
    %128 = arith.mulf %126, %127 : vector<8x256xf32>
    %129 = arith.truncf %128 : vector<8x256xf32> to vector<8x256xbf16>
    %cst_29 = arith.constant dense<0.000000e+00> : vector<8x1024xf32>
    %130 = tpu.matmul %129, %7, %cst_29 {dimension_numbers = #tpu.dot_dimension_numbers<[1], [0], [0], [1], [0, 0, 1, 1], [], []>} : vector<8x256xbf16>, vector<256x1024xbf16>, vector<8x1024xf32> -> vector<8x1024xf32>
    %c48 = arith.constant 48 : index
    %c0_30 = arith.constant 0 : index
    %131 = vector.load %arg7[%c48, %c0_30] : memref<72x1024xf32, #tpu.memory_space<vmem>>, vector<8x1024xf32>
    %132 = arith.addf %130, %131 : vector<8x1024xf32>
    %133 = vector.extract_strided_slice %132 {offsets = [0, 0], sizes = [8, 768], strides = [1, 1]} : vector<8x1024xf32> to vector<8x768xf32>
    %134 = arith.negf %133 : vector<8x768xf32>
    %135 = math.exp %134 : vector<8x768xf32>
    %cst_31 = arith.constant 1.000000e+00 : f32
    %136 = vector.broadcast %cst_31 : f32 to vector<8x768xf32>
    %137 = arith.addf %136, %135 : vector<8x768xf32>
    %138 = arith.divf %136, %137 : vector<8x768xf32>
    %139 = vector.extract_strided_slice %132 {offsets = [0, 768], sizes = [8, 256], strides = [1, 1]} : vector<8x1024xf32> to vector<8x256xf32>
    %140 = math.tanh %139 : vector<8x256xf32>
    %141 = vector.extract_strided_slice %138 {offsets = [0, 256], sizes = [8, 256], strides = [1, 1]} : vector<8x768xf32> to vector<8x256xf32>
    %142 = arith.mulf %141, %125 : vector<8x256xf32>
    %143 = vector.extract_strided_slice %138 {offsets = [0, 0], sizes = [8, 256], strides = [1, 1]} : vector<8x768xf32> to vector<8x256xf32>
    %144 = arith.mulf %143, %140 : vector<8x256xf32>
    %145 = arith.addf %142, %144 : vector<8x256xf32>
    %146 = vector.extract_strided_slice %138 {offsets = [0, 512], sizes = [8, 256], strides = [1, 1]} : vector<8x768xf32> to vector<8x256xf32>
    %147 = math.tanh %145 : vector<8x256xf32>
    %148 = arith.mulf %146, %147 : vector<8x256xf32>
    %149 = arith.truncf %148 : vector<8x256xf32> to vector<8x256xbf16>
    %cst_32 = arith.constant dense<0.000000e+00> : vector<8x1024xf32>
    %150 = tpu.matmul %149, %7, %cst_32 {dimension_numbers = #tpu.dot_dimension_numbers<[1], [0], [0], [1], [0, 0, 1, 1], [], []>} : vector<8x256xbf16>, vector<256x1024xbf16>, vector<8x1024xf32> -> vector<8x1024xf32>
    %c56 = arith.constant 56 : index
    %c0_33 = arith.constant 0 : index
    %151 = vector.load %arg7[%c56, %c0_33] : memref<72x1024xf32, #tpu.memory_space<vmem>>, vector<8x1024xf32>
    %152 = arith.addf %150, %151 : vector<8x1024xf32>
    %153 = vector.extract_strided_slice %152 {offsets = [0, 0], sizes = [8, 768], strides = [1, 1]} : vector<8x1024xf32> to vector<8x768xf32>
    %154 = arith.negf %153 : vector<8x768xf32>
    %155 = math.exp %154 : vector<8x768xf32>
    %cst_34 = arith.constant 1.000000e+00 : f32
    %156 = vector.broadcast %cst_34 : f32 to vector<8x768xf32>
    %157 = arith.addf %156, %155 : vector<8x768xf32>
    %158 = arith.divf %156, %157 : vector<8x768xf32>
    %159 = vector.extract_strided_slice %152 {offsets = [0, 768], sizes = [8, 256], strides = [1, 1]} : vector<8x1024xf32> to vector<8x256xf32>
    %160 = math.tanh %159 : vector<8x256xf32>
    %161 = vector.extract_strided_slice %158 {offsets = [0, 256], sizes = [8, 256], strides = [1, 1]} : vector<8x768xf32> to vector<8x256xf32>
    %162 = arith.mulf %161, %145 : vector<8x256xf32>
    %163 = vector.extract_strided_slice %158 {offsets = [0, 0], sizes = [8, 256], strides = [1, 1]} : vector<8x768xf32> to vector<8x256xf32>
    %164 = arith.mulf %163, %160 : vector<8x256xf32>
    %165 = arith.addf %162, %164 : vector<8x256xf32>
    %166 = vector.extract_strided_slice %158 {offsets = [0, 512], sizes = [8, 256], strides = [1, 1]} : vector<8x768xf32> to vector<8x256xf32>
    %167 = math.tanh %165 : vector<8x256xf32>
    %168 = arith.mulf %166, %167 : vector<8x256xf32>
    %169 = arith.truncf %168 : vector<8x256xf32> to vector<8x256xbf16>
    %cst_35 = arith.constant dense<0.000000e+00> : vector<8x1024xf32>
    %170 = tpu.matmul %169, %7, %cst_35 {dimension_numbers = #tpu.dot_dimension_numbers<[1], [0], [0], [1], [0, 0, 1, 1], [], []>} : vector<8x256xbf16>, vector<256x1024xbf16>, vector<8x1024xf32> -> vector<8x1024xf32>
    %c64 = arith.constant 64 : index
    %c0_36 = arith.constant 0 : index
    %171 = vector.load %arg7[%c64, %c0_36] : memref<72x1024xf32, #tpu.memory_space<vmem>>, vector<8x1024xf32>
    %172 = arith.addf %170, %171 : vector<8x1024xf32>
    %173 = vector.extract_strided_slice %172 {offsets = [0, 0], sizes = [8, 768], strides = [1, 1]} : vector<8x1024xf32> to vector<8x768xf32>
    %174 = arith.negf %173 : vector<8x768xf32>
    %175 = math.exp %174 : vector<8x768xf32>
    %cst_37 = arith.constant 1.000000e+00 : f32
    %176 = vector.broadcast %cst_37 : f32 to vector<8x768xf32>
    %177 = arith.addf %176, %175 : vector<8x768xf32>
    %178 = arith.divf %176, %177 : vector<8x768xf32>
    %179 = vector.extract_strided_slice %172 {offsets = [0, 768], sizes = [8, 256], strides = [1, 1]} : vector<8x1024xf32> to vector<8x256xf32>
    %180 = math.tanh %179 : vector<8x256xf32>
    %181 = vector.extract_strided_slice %178 {offsets = [0, 256], sizes = [8, 256], strides = [1, 1]} : vector<8x768xf32> to vector<8x256xf32>
    %182 = arith.mulf %181, %165 : vector<8x256xf32>
    %183 = vector.extract_strided_slice %178 {offsets = [0, 0], sizes = [8, 256], strides = [1, 1]} : vector<8x768xf32> to vector<8x256xf32>
    %184 = arith.mulf %183, %180 : vector<8x256xf32>
    %185 = arith.addf %182, %184 : vector<8x256xf32>
    %186 = vector.extract_strided_slice %178 {offsets = [0, 512], sizes = [8, 256], strides = [1, 1]} : vector<8x768xf32> to vector<8x256xf32>
    %187 = math.tanh %185 : vector<8x256xf32>
    %188 = arith.mulf %186, %187 : vector<8x256xf32>
    %189 = arith.truncf %188 : vector<8x256xf32> to vector<8x256xbf16>
    %190 = vector.extract_strided_slice %189 {offsets = [0, 128], sizes = [8, 128], strides = [1, 1]} : vector<8x256xbf16> to vector<8x128xbf16>
    %c0_38 = arith.constant 0 : index
    %c0_39 = arith.constant 0 : index
    %191 = vector.load %arg4[%c0_38, %c0_39] : memref<128x128xbf16, #tpu.memory_space<vmem>>, vector<128x128xbf16>
    %cst_40 = arith.constant dense<0.000000e+00> : vector<8x128xf32>
    %192 = tpu.matmul %190, %191, %cst_40 {dimension_numbers = #tpu.dot_dimension_numbers<[1], [0], [0], [1], [0, 0, 1, 1], [], []>} : vector<8x128xbf16>, vector<128x128xbf16>, vector<8x128xf32> -> vector<8x128xf32>
    %c0_41 = arith.constant 0 : index
    %c0_42 = arith.constant 0 : index
    %193 = vector.load %arg5[%c0_41, %c0_42] : memref<1x128xf32, #tpu.memory_space<vmem>>, vector<1x128xf32>
    %194 = vector.broadcast %193 : vector<1x128xf32> to vector<8x128xf32>
    %195 = arith.addf %192, %194 : vector<8x128xf32>
    %c0_43 = arith.constant 0 : index
    %c0_44 = arith.constant 0 : index
    %196 = vector.load %arg6[%c0_43, %c0_44] : memref<8x128xf32, #tpu.memory_space<vmem>>, vector<8x128xf32>
    tpu.vector_store %arg6[%c0_43, %c0_44], %195 {strides = array<i32>} : memref<8x128xf32, #tpu.memory_space<vmem>>, vector<8x128xf32>,
    return
  }
}

</mosaic_0001>

<llo_original>
// kernel: custom-call.2
$region0: #{custom-call.2}
  %s0 = inlined_call_operand.vmem [shape: f32[1024], index: 0, kind: output, shape index: {}]

// kernel: rnn_forward.1
$region0: #{rnn_forward.1}
  #allocation0 [shape = 'u32[]', space=smem, size = 0x4, offset = 0x4, fixed_abs, tag = 'smem constant byte address 0x4 - core index']
  #allocation1 [shape = 'u32[72,128]{1,0:T(1,128)}', space=vmem, size = 0x9000, scoped, tag = 'internal scratch']
  #allocation2 [shape = 'f32[72,1024]{1,0:T(8,128)}', space=vmem, size = 0x48000, scoped, tag = 'scratch operand']
  %s0 = inlined_call_operand.vmem [shape: bf16[72,28], index: 0, kind: input, shape index: {}]
  %s1 = inlined_call_operand.vmem [shape: bf16[28,1024], index: 1, kind: input, shape index: {}]
  %s2 = inlined_call_operand.vmem [shape: f32[1,1024], index: 2, kind: input, shape index: {}]
  %s3 = inlined_call_operand.vmem [shape: bf16[256,1024], index: 3, kind: input, shape index: {}]
  %s4 = inlined_call_operand.vmem [shape: bf16[128,128], index: 4, kind: input, shape index: {}]
  %s5 = inlined_call_operand.vmem [shape: f32[1,128], index: 5, kind: input, shape index: {}]
  %s6 = inlined_call_operand.vmem [shape: f32[8,128], index: 6, kind: output, shape index: {}]
  %s7 = sld [smem:[#allocation0]]
  $region34: #{rnn_forward.1} parent=0
    _
  %s9 = ssub.s32 1, %s7
  %s10 = scalar_select 0, %s9, %s7
  // Predicated region
  $region2: #{rnn_forward.1} parent=0 // pred_check
    _
  $region3: #{rnn_forward.1} parent=0 // pred_check_branch
    %12 = sbr.rel (0) target = $region5
  $region4: #{rnn_forward.1} parent=0 // pred_region
    _
  $region5: #{rnn_forward.1} parent=0 // pred_fallthru
    _
  // Predicated region
  $region6: #{rnn_forward.1} parent=0 // pred_check
    _
  $region7: #{rnn_forward.1} parent=0 // pred_check_branch
    %14 = sbr.rel (0) target = $region9
  $region8: #{rnn_forward.1} parent=0 // pred_region
    _
  $region9: #{rnn_forward.1} parent=0 // pred_fallthru
    _
  // Predicated region
  $region10: #{rnn_forward.1} parent=0 // pred_check
    _
  $region11: #{rnn_forward.1} parent=0 // pred_check_branch
    %16 = sbr.rel (0) target = $region13
  $region12: #{rnn_forward.1} parent=0 // pred_region
    _
  $region13: #{rnn_forward.1} parent=0 // pred_fallthru
    _
  // Predicated region
  $region14: #{rnn_forward.1} parent=0 // pred_check
    _
  $region15: #{rnn_forward.1} parent=0 // pred_check_branch
    %18 = sbr.rel (0) target = $region17
  $region16: #{rnn_forward.1} parent=0 // pred_region
    _
  $region17: #{rnn_forward.1} parent=0 // pred_fallthru
    _
  // Predicated region
  $region18: #{rnn_forward.1} parent=0 // pred_check
    _
  $region19: #{rnn_forward.1} parent=0 // pred_check_branch
    %20 = sbr.rel (0) target = $region21
  $region20: #{rnn_forward.1} parent=0 // pred_region
    _
  $region21: #{rnn_forward.1} parent=0 // pred_fallthru
    _
  // Predicated region
  $region22: #{rnn_forward.1} parent=0 // pred_check
    _
  $region23: #{rnn_forward.1} parent=0 // pred_check_branch
    %22 = sbr.rel (0) target = $region25
  $region24: #{rnn_forward.1} parent=0 // pred_region
    _
  $region25: #{rnn_forward.1} parent=0 // pred_fallthru
    _
  %v24 = vld [vmem:[%s0] sm:$0xf]
  %v25 = vld [vmem:[%s0 + $0x4] sm:$0xf]
  %v26 = vld [vmem:[%s0 + $0x8] sm:$0xf]
  %v27 = vld [vmem:[%s0 + $0xc] sm:$0xf]
  %v28 = vld [vmem:[%s0 + $0x10] sm:$0xf]
  %v29 = vld [vmem:[%s0 + $0x14] sm:$0xf]
  %v30 = vld [vmem:[%s0 + $0x18] sm:$0xf]
  %v31 = vld [vmem:[%s0 + $0x1c] sm:$0xf]
  %v32 = vld [vmem:[%s0 + $0x20] sm:$0xf]
  %v33 = vld [vmem:[%s1] sm:$0xff]
  %v34 = vld [vmem:[%s1 + $0x8] sm:$0xff]
  %v35 = vld [vmem:[%s1 + $0x10] sm:$0xff]
  %v36 = vld [vmem:[%s1 + $0x18] sm:$0xff]
  %v37 = vld [vmem:[%s1 + $0x20] sm:$0xff]
  %v38 = vld [vmem:[%s1 + $0x28] sm:$0xff]
  %v39 = vld [vmem:[%s1 + $0x30] sm:$0xff]
  %v40 = vld [vmem:[%s1 + $0x38] sm:$0xff]
  %v41 = vld [vmem:[%s1 + $0x40] sm:$0xff]
  %v42 = vld [vmem:[%s1 + $0x48] sm:$0xff]
  %v43 = vld [vmem:[%s1 + $0x50] sm:$0xff]
  %v44 = vld [vmem:[%s1 + $0x58] sm:$0xff]
  %v45 = vld [vmem:[%s1 + $0x60] sm:$0x33]
  %v46 = vld [vmem:[%s1 + $0x68] sm:$0x33]
  %v47 = vld [vmem:[%s1 + $0x70] sm:$0x33]
  %v48 = vld [vmem:[%s1 + $0x78] sm:$0x33]
  %v49 = vld [vmem:[%s2] sm:$0xff]
  %v51 = vperm.slane %v49, 0
  %v52 = vperm.slane %v49, 1
  %v53 = vperm.slane %v49, 2
  %v54 = vperm.slane %v49, 3
  %v55 = vperm.slane %v49, 4
  %v56 = vperm.slane %v49, 5
  %v57 = vperm.slane %v49, 6
  %v58 = vperm.slane %v49, 7
  %v76 = vunpack.c.l.b16 %v24
  %v77 = vunpack.c.l.b16 %v25
  %v78 = vunpack.c.l.b16 %v26
  %v79 = vunpack.c.l.b16 %v27
  %v80 = vunpack.c.l.b16 %v28
  %v81 = vunpack.c.l.b16 %v29
  %v82 = vunpack.c.l.b16 %v30
  %v83 = vunpack.c.l.b16 %v31
  %v84 = vunpack.c.l.b16 %v32
  %v85 = vpack.c.b16 %v77, %v76
  %v86 = vpack.c.b16 %v79, %v78
  %v87 = vpack.c.b16 %v81, %v80
  %v88 = vpack.c.b16 %v83, %v82
  %v89 = vpack.c.b16 %v84, %v84
  %v106 = vunpack.c.l.b16 %v33
  %v107 = vunpack.c.h.b16 %v33
  %v108 = vunpack.c.l.b16 %v34
  %v109 = vunpack.c.h.b16 %v34
  %v110 = vunpack.c.l.b16 %v35
  %v111 = vunpack.c.h.b16 %v35
  %v112 = vunpack.c.l.b16 %v36
  %v113 = vunpack.c.h.b16 %v36
  %v114 = vunpack.c.l.b16 %v37
  %v115 = vunpack.c.h.b16 %v37
  %v116 = vunpack.c.l.b16 %v38
  %v117 = vunpack.c.h.b16 %v38
  %v118 = vunpack.c.l.b16 %v39
  %v119 = vunpack.c.h.b16 %v39
  %v120 = vunpack.c.l.b16 %v40
  %v121 = vunpack.c.h.b16 %v40
  %v122 = vunpack.c.l.b16 %v41
  %v123 = vunpack.c.h.b16 %v41
  %v124 = vunpack.c.l.b16 %v42
  %v125 = vunpack.c.h.b16 %v42
  %v126 = vunpack.c.l.b16 %v43
  %v127 = vunpack.c.h.b16 %v43
  %v128 = vunpack.c.l.b16 %v44
  %v129 = vunpack.c.h.b16 %v44
  %v130 = vunpack.c.l.b16 %v45
  %v131 = vunpack.c.h.b16 %v45
  %v132 = vunpack.c.l.b16 %v46
  %v133 = vunpack.c.h.b16 %v46
  %v134 = vunpack.c.l.b16 %v47
  %v135 = vunpack.c.h.b16 %v47
  %v136 = vunpack.c.l.b16 %v48
  %v137 = vunpack.c.h.b16 %v48
  %v138 = vpack.c.b16 %v114, %v106
  %v139 = vpack.c.b16 %v115, %v107
  %v140 = vpack.c.b16 %v116, %v108
  %v141 = vpack.c.b16 %v117, %v109
  %v142 = vpack.c.b16 %v118, %v110
  %v143 = vpack.c.b16 %v119, %v111
  %v144 = vpack.c.b16 %v120, %v112
  %v145 = vpack.c.b16 %v121, %v113
  %v146 = vpack.c.b16 %v130, %v122
  %v147 = vpack.c.b16 %v131, %v123
  %v148 = vpack.c.b16 %v132, %v124
  %v149 = vpack.c.b16 %v133, %v125
  %v150 = vpack.c.b16 %v134, %v126
  %v151 = vpack.c.b16 %v135, %v127
  %v152 = vpack.c.b16 %v136, %v128
  %v153 = vpack.c.b16 %v137, %v129
  %vm162 = vcmask 228352
  %v164 = vsel %vm162, %v85, 0
  %v167 = vsel %vm162, %v86, 0
  %v170 = vsel %vm162, %v87, 0
  %v173 = vsel %vm162, %v88, 0
  %v176 = vsel %vm162, %v89, 0
  %vm178 = vcmask 1045504
  %v180 = vsel %vm178, %v146, 0
  %v183 = vsel %vm178, %v147, 0
  %v186 = vsel %vm178, %v148, 0
  %v189 = vsel %vm178, %v149, 0
  %v192 = vsel %vm178, %v150, 0
  %v195 = vsel %vm178, %v151, 0
  %v198 = vsel %vm178, %v152, 0
  %v201 = vsel %vm178, %v153, 0
  %203 = vmatpush.bf16.msra.mxu0 0
  %204 = vmatpush.bf16.msra.mxu0 0
  %205 = vmatpush.bf16.msra.mxu0 0
  %206 = vmatpush.bf16.msra.mxu0 0
  %207 = vmatpush.bf16.msra.mxu0 0
  %208 = vmatpush.bf16.msra.mxu0 0
  %209 = vmatpush.bf16.msra.mxu0 %v180
  %210 = vmatpush.bf16.msra.mxu0 %v138
  %211 = vmatmul.bf16.gmra.mxu0 %v164
  %v212 = vpop.f32.mrf.mxu0
  %v213 = vadd.f32 %v51, %v212
  %v214 = vpop.f32.mrf.mxu0
  %v215 = vadd.f32 %v51, %v214
  %216 = vmatmul.bf16.gmra.mxu0 %v167
  %v217 = vpop.f32.mrf.mxu0
  %v218 = vadd.f32 %v51, %v217
  %v219 = vpop.f32.mrf.mxu0
  %v220 = vadd.f32 %v51, %v219
  %221 = vmatmul.bf16.gmra.mxu0 %v170
  %v222 = vpop.f32.mrf.mxu0
  %v223 = vadd.f32 %v51, %v222
  %v224 = vpop.f32.mrf.mxu0
  %v225 = vadd.f32 %v51, %v224
  %226 = vmatmul.bf16.gmra.mxu0 %v173
  %v227 = vpop.f32.mrf.mxu0
  %v228 = vadd.f32 %v51, %v227
  %v229 = vpop.f32.mrf.mxu0
  %v230 = vadd.f32 %v51, %v229
  %231 = vmatmul.bf16.gmra.mxu0 %v176
  %v232 = vpop.f32.mrf.mxu0
  %v233 = vadd.f32 %v51, %v232
  %v234 = vpop.f32.mrf.mxu0
  %235 = vdwg.mxu0
  %236 = vmatpush.bf16.msra.mxu0 0
  %237 = vmatpush.bf16.msra.mxu0 0
  %238 = vmatpush.bf16.msra.mxu0 0
  %239 = vmatpush.bf16.msra.mxu0 0
  %240 = vmatpush.bf16.msra.mxu0 0
  %241 = vmatpush.bf16.msra.mxu0 0
  %242 = vmatpush.bf16.msra.mxu0 %v183
  %243 = vmatpush.bf16.msra.mxu0 %v139
  %244 = vmatmul.bf16.gmra.mxu0 %v164
  %v245 = vpop.f32.mrf.mxu0
  %v246 = vadd.f32 %v52, %v245
  %v247 = vpop.f32.mrf.mxu0
  %v248 = vadd.f32 %v52, %v247
  %249 = vmatmul.bf16.gmra.mxu0 %v167
  %v250 = vpop.f32.mrf.mxu0
  %v251 = vadd.f32 %v52, %v250
  %v252 = vpop.f32.mrf.mxu0
  %v253 = vadd.f32 %v52, %v252
  %254 = vmatmul.bf16.gmra.mxu0 %v170
  %v255 = vpop.f32.mrf.mxu0
  %v256 = vadd.f32 %v52, %v255
  %v257 = vpop.f32.mrf.mxu0
  %v258 = vadd.f32 %v52, %v257
  %259 = vmatmul.bf16.gmra.mxu0 %v173
  %v260 = vpop.f32.mrf.mxu0
  %v261 = vadd.f32 %v52, %v260
  %v262 = vpop.f32.mrf.mxu0
  %v263 = vadd.f32 %v52, %v262
  %264 = vmatmul.bf16.gmra.mxu0 %v176
  %v265 = vpop.f32.mrf.mxu0
  %v266 = vadd.f32 %v52, %v265
  %v267 = vpop.f32.mrf.mxu0
  %268 = vdwg.mxu0
  %269 = vmatpush.bf16.msra.mxu0 0
  %270 = vmatpush.bf16.msra.mxu0 0
  %271 = vmatpush.bf16.msra.mxu0 0
  %272 = vmatpush.bf16.msra.mxu0 0
  %273 = vmatpush.bf16.msra.mxu0 0
  %274 = vmatpush.bf16.msra.mxu0 0
  %275 = vmatpush.bf16.msra.mxu0 %v186
  %276 = vmatpush.bf16.msra.mxu0 %v140
  %277 = vmatmul.bf16.gmra.mxu0 %v164
  %v278 = vpop.f32.mrf.mxu0
  %v279 = vadd.f32 %v53, %v278
  %v280 = vpop.f32.mrf.mxu0
  %v281 = vadd.f32 %v53, %v280
  %282 = vmatmul.bf16.gmra.mxu0 %v167
  %v283 = vpop.f32.mrf.mxu0
  %v284 = vadd.f32 %v53, %v283
  %v285 = vpop.f32.mrf.mxu0
  %v286 = vadd.f32 %v53, %v285
  %287 = vmatmul.bf16.gmra.mxu0 %v170
  %v288 = vpop.f32.mrf.mxu0
  %v289 = vadd.f32 %v53, %v288
  %v290 = vpop.f32.mrf.mxu0
  %v291 = vadd.f32 %v53, %v290
  %292 = vmatmul.bf16.gmra.mxu0 %v173
  %v293 = vpop.f32.mrf.mxu0
  %v294 = vadd.f32 %v53, %v293
  %v295 = vpop.f32.mrf.mxu0
  %v296 = vadd.f32 %v53, %v295
  %297 = vmatmul.bf16.gmra.mxu0 %v176
  %v298 = vpop.f32.mrf.mxu0
  %v299 = vadd.f32 %v53, %v298
  %v300 = vpop.f32.mrf.mxu0
  %301 = vdwg.mxu0
  %302 = vmatpush.bf16.msra.mxu0 0
  %303 = vmatpush.bf16.msra.mxu0 0
  %304 = vmatpush.bf16.msra.mxu0 0
  %305 = vmatpush.bf16.msra.mxu0 0
  %306 = vmatpush.bf16.msra.mxu0 0
  %307 = vmatpush.bf16.msra.mxu0 0
  %308 = vmatpush.bf16.msra.mxu0 %v189
  %309 = vmatpush.bf16.msra.mxu0 %v141
  %310 = vmatmul.bf16.gmra.mxu0 %v164
  %v311 = vpop.f32.mrf.mxu0
  %v312 = vadd.f32 %v54, %v311
  %v313 = vpop.f32.mrf.mxu0
  %v314 = vadd.f32 %v54, %v313
  %315 = vmatmul.bf16.gmra.mxu0 %v167
  %v316 = vpop.f32.mrf.mxu0
  %v317 = vadd.f32 %v54, %v316
  %v318 = vpop.f32.mrf.mxu0
  %v319 = vadd.f32 %v54, %v318
  %320 = vmatmul.bf16.gmra.mxu0 %v170
  %v321 = vpop.f32.mrf.mxu0
  %v322 = vadd.f32 %v54, %v321
  %v323 = vpop.f32.mrf.mxu0
  %v324 = vadd.f32 %v54, %v323
  %325 = vmatmul.bf16.gmra.mxu0 %v173
  %v326 = vpop.f32.mrf.mxu0
  %v327 = vadd.f32 %v54, %v326
  %v328 = vpop.f32.mrf.mxu0
  %v329 = vadd.f32 %v54, %v328
  %330 = vmatmul.bf16.gmra.mxu0 %v176
  %v331 = vpop.f32.mrf.mxu0
  %v332 = vadd.f32 %v54, %v331
  %v333 = vpop.f32.mrf.mxu0
  %334 = vdwg.mxu0
  %335 = vmatpush.bf16.msra.mxu0 0
  %336 = vmatpush.bf16.msra.mxu0 0
  %337 = vmatpush.bf16.msra.mxu0 0
  %338 = vmatpush.bf16.msra.mxu0 0
  %339 = vmatpush.bf16.msra.mxu0 0
  %340 = vmatpush.bf16.msra.mxu0 0
  %341 = vmatpush.bf16.msra.mxu0 %v192
  %342 = vmatpush.bf16.msra.mxu0 %v142
  %343 = vmatmul.bf16.gmra.mxu0 %v164
  %v344 = vpop.f32.mrf.mxu0
  %v345 = vadd.f32 %v55, %v344
  %v346 = vpop.f32.mrf.mxu0
  %v347 = vadd.f32 %v55, %v346
  %348 = vmatmul.bf16.gmra.mxu0 %v167
  %v349 = vpop.f32.mrf.mxu0
  %v350 = vadd.f32 %v55, %v349
  %v351 = vpop.f32.mrf.mxu0
  %v352 = vadd.f32 %v55, %v351
  %353 = vmatmul.bf16.gmra.mxu0 %v170
  %v354 = vpop.f32.mrf.mxu0
  %v355 = vadd.f32 %v55, %v354
  %v356 = vpop.f32.mrf.mxu0
  %v357 = vadd.f32 %v55, %v356
  %358 = vmatmul.bf16.gmra.mxu0 %v173
  %v359 = vpop.f32.mrf.mxu0
  %v360 = vadd.f32 %v55, %v359
  %v361 = vpop.f32.mrf.mxu0
  %v362 = vadd.f32 %v55, %v361
  %363 = vmatmul.bf16.gmra.mxu0 %v176
  %v364 = vpop.f32.mrf.mxu0
  %v365 = vadd.f32 %v55, %v364
  %v366 = vpop.f32.mrf.mxu0
  %367 = vdwg.mxu0
  %368 = vmatpush.bf16.msra.mxu0 0
  %369 = vmatpush.bf16.msra.mxu0 0
  %370 = vmatpush.bf16.msra.mxu0 0
  %371 = vmatpush.bf16.msra.mxu0 0
  %372 = vmatpush.bf16.msra.mxu0 0
  %373 = vmatpush.bf16.msra.mxu0 0
  %374 = vmatpush.bf16.msra.mxu0 %v195
  %375 = vmatpush.bf16.msra.mxu0 %v143
  %376 = vmatmul.bf16.gmra.mxu0 %v164
  %v377 = vpop.f32.mrf.mxu0
  %v378 = vadd.f32 %v56, %v377
  %v379 = vpop.f32.mrf.mxu0
  %v380 = vadd.f32 %v56, %v379
  %381 = vmatmul.bf16.gmra.mxu0 %v167
  %v382 = vpop.f32.mrf.mxu0
  %v383 = vadd.f32 %v56, %v382
  %v384 = vpop.f32.mrf.mxu0
  %v385 = vadd.f32 %v56, %v384
  %386 = vmatmul.bf16.gmra.mxu0 %v170
  %v387 = vpop.f32.mrf.mxu0
  %v388 = vadd.f32 %v56, %v387
  %v389 = vpop.f32.mrf.mxu0
  %v390 = vadd.f32 %v56, %v389
  %391 = vmatmul.bf16.gmra.mxu0 %v173
  %v392 = vpop.f32.mrf.mxu0
  %v393 = vadd.f32 %v56, %v392
  %v394 = vpop.f32.mrf.mxu0
  %v395 = vadd.f32 %v56, %v394
  %396 = vmatmul.bf16.gmra.mxu0 %v176
  %v397 = vpop.f32.mrf.mxu0
  %v398 = vadd.f32 %v56, %v397
  %v399 = vpop.f32.mrf.mxu0
  %400 = vdwg.mxu0
  %401 = vmatpush.bf16.msra.mxu0 0
  %402 = vmatpush.bf16.msra.mxu0 0
  %403 = vmatpush.bf16.msra.mxu0 0
  %404 = vmatpush.bf16.msra.mxu0 0
  %405 = vmatpush.bf16.msra.mxu0 0
  %406 = vmatpush.bf16.msra.mxu0 0
  %407 = vmatpush.bf16.msra.mxu0 %v198
  %408 = vmatpush.bf16.msra.mxu0 %v144
  %409 = vmatmul.bf16.gmra.mxu0 %v164
  %v410 = vpop.f32.mrf.mxu0
  %v411 = vadd.f32 %v57, %v410
  %v412 = vpop.f32.mrf.mxu0
  %v413 = vadd.f32 %v57, %v412
  %414 = vmatmul.bf16.gmra.mxu0 %v167
  %v415 = vpop.f32.mrf.mxu0
  %v416 = vadd.f32 %v57, %v415
  %v417 = vpop.f32.mrf.mxu0
  %v418 = vadd.f32 %v57, %v417
  %419 = vmatmul.bf16.gmra.mxu0 %v170
  %v420 = vpop.f32.mrf.mxu0
  %v421 = vadd.f32 %v57, %v420
  %v422 = vpop.f32.mrf.mxu0
  %v423 = vadd.f32 %v57, %v422
  %424 = vmatmul.bf16.gmra.mxu0 %v173
  %v425 = vpop.f32.mrf.mxu0
  %v426 = vadd.f32 %v57, %v425
  %v427 = vpop.f32.mrf.mxu0
  %v428 = vadd.f32 %v57, %v427
  %429 = vmatmul.bf16.gmra.mxu0 %v176
  %v430 = vpop.f32.mrf.mxu0
  %v431 = vadd.f32 %v57, %v430
  %v432 = vpop.f32.mrf.mxu0
  %433 = vdwg.mxu0
  %434 = vmatpush.bf16.msra.mxu0 0
  %435 = vmatpush.bf16.msra.mxu0 0
  %436 = vmatpush.bf16.msra.mxu0 0
  %437 = vmatpush.bf16.msra.mxu0 0
  %438 = vmatpush.bf16.msra.mxu0 0
  %439 = vmatpush.bf16.msra.mxu0 0
  %440 = vmatpush.bf16.msra.mxu0 %v201
  %441 = vmatpush.bf16.msra.mxu0 %v145
  %442 = vmatmul.bf16.gmra.mxu0 %v164
  %v443 = vpop.f32.mrf.mxu0
  %v444 = vadd.f32 %v58, %v443
  %v445 = vpop.f32.mrf.mxu0
  %v446 = vadd.f32 %v58, %v445
  %447 = vmatmul.bf16.gmra.mxu0 %v167
  %v448 = vpop.f32.mrf.mxu0
  %v449 = vadd.f32 %v58, %v448
  %v450 = vpop.f32.mrf.mxu0
  %v451 = vadd.f32 %v58, %v450
  %452 = vmatmul.bf16.gmra.mxu0 %v170
  %v453 = vpop.f32.mrf.mxu0
  %v454 = vadd.f32 %v58, %v453
  %v455 = vpop.f32.mrf.mxu0
  %v456 = vadd.f32 %v58, %v455
  %457 = vmatmul.bf16.gmra.mxu0 %v173
  %v458 = vpop.f32.mrf.mxu0
  %v459 = vadd.f32 %v58, %v458
  %v460 = vpop.f32.mrf.mxu0
  %v461 = vadd.f32 %v58, %v460
  %462 = vmatmul.bf16.gmra.mxu0 %v176
  %v463 = vpop.f32.mrf.mxu0
  %v464 = vadd.f32 %v58, %v463
  %v465 = vpop.f32.mrf.mxu0
  %466 = vdwg.mxu0
  %467 = vst [vmem:[#allocation2] sm:$0xff] %v213
  %468 = vst [vmem:[#allocation2 + $0x8] sm:$0xff] %v246
  %469 = vst [vmem:[#allocation2 + $0x10] sm:$0xff] %v279
  %470 = vst [vmem:[#allocation2 + $0x18] sm:$0xff] %v312
  %471 = vst [vmem:[#allocation2 + $0x20] sm:$0xff] %v345
  %472 = vst [vmem:[#allocation2 + $0x28] sm:$0xff] %v378
  %473 = vst [vmem:[#allocation2 + $0x30] sm:$0xff] %v411
  %474 = vst [vmem:[#allocation2 + $0x38] sm:$0xff] %v444
  %475 = vst [vmem:[#allocation2 + $0x40] sm:$0xff] %v215
  %476 = vst [vmem:[#allocation2 + $0x48] sm:$0xff] %v248
  %477 = vst [vmem:[#allocation2 + $0x50] sm:$0xff] %v281
  %478 = vst [vmem:[#allocation2 + $0x58] sm:$0xff] %v314
  %479 = vst [vmem:[#allocation2 + $0x60] sm:$0xff] %v347
  %480 = vst [vmem:[#allocation2 + $0x68] sm:$0xff] %v380
  %481 = vst [vmem:[#allocation2 + $0x70] sm:$0xff] %v413
  %482 = vst [vmem:[#allocation2 + $0x78] sm:$0xff] %v446
  %483 = vst [vmem:[#allocation2 + $0x80] sm:$0xff] %v218
  %484 = vst [vmem:[#allocation2 + $0x88] sm:$0xff] %v251
  %485 = vst [vmem:[#allocation2 + $0x90] sm:$0xff] %v284
  %486 = vst [vmem:[#allocation2 + $0x98] sm:$0xff] %v317
  %487 = vst [vmem:[#allocation2 + $0xa0] sm:$0xff] %v350
  %488 = vst [vmem:[#allocation2 + $0xa8] sm:$0xff] %v383
  %489 = vst [vmem:[#allocation2 + $0xb0] sm:$0xff] %v416
  %490 = vst [vmem:[#allocation2 + $0xb8] sm:$0xff] %v449
  %491 = vst [vmem:[#allocation2 + $0xc0] sm:$0xff] %v220
  %492 = vst [vmem:[#allocation2 + $0xc8] sm:$0xff] %v253
  %493 = vst [vmem:[#allocation2 + $0xd0] sm:$0xff] %v286
  %494 = vst [vmem:[#allocation2 + $0xd8] sm:$0xff] %v319
  %495 = vst [vmem:[#allocation2 + $0xe0] sm:$0xff] %v352
  %496 = vst [vmem:[#allocation2 + $0xe8] sm:$0xff] %v385
  %497 = vst [vmem:[#allocation2 + $0xf0] sm:$0xff] %v418
  %498 = vst [vmem:[#allocation2 + $0xf8] sm:$0xff] %v451
  %499 = vst [vmem:[#allocation2 + $0x100] sm:$0xff] %v223
  %500 = vst [vmem:[#allocation2 + $0x108] sm:$0xff] %v256
  %501 = vst [vmem:[#allocation2 + $0x110] sm:$0xff] %v289
  %502 = vst [vmem:[#allocation2 + $0x118] sm:$0xff] %v322
  %503 = vst [vmem:[#allocation2 + $0x120] sm:$0xff] %v355
  %504 = vst [vmem:[#allocation2 + $0x128] sm:$0xff] %v388
  %505 = vst [vmem:[#allocation2 + $0x130] sm:$0xff] %v421
  %506 = vst [vmem:[#allocation2 + $0x138] sm:$0xff] %v454
  %507 = vst [vmem:[#allocation2 + $0x140] sm:$0xff] %v225
  %508 = vst [vmem:[#allocation2 + $0x148] sm:$0xff] %v258
  %509 = vst [vmem:[#allocation2 + $0x150] sm:$0xff] %v291
  %510 = vst [vmem:[#allocation2 + $0x158] sm:$0xff] %v324
  %511 = vst [vmem:[#allocation2 + $0x160] sm:$0xff] %v357
  %512 = vst [vmem:[#allocation2 + $0x168] sm:$0xff] %v390
  %513 = vst [vmem:[#allocation2 + $0x170] sm:$0xff] %v423
  %514 = vst [vmem:[#allocation2 + $0x178] sm:$0xff] %v456
  %515 = vst [vmem:[#allocation2 + $0x180] sm:$0xff] %v228
  %516 = vst [vmem:[#allocation2 + $0x188] sm:$0xff] %v261
  %517 = vst [vmem:[#allocation2 + $0x190] sm:$0xff] %v294
  %518 = vst [vmem:[#allocation2 + $0x198] sm:$0xff] %v327
  %519 = vst [vmem:[#allocation2 + $0x1a0] sm:$0xff] %v360
  %520 = vst [vmem:[#allocation2 + $0x1a8] sm:$0xff] %v393
  %521 = vst [vmem:[#allocation2 + $0x1b0] sm:$0xff] %v426
  %522 = vst [vmem:[#allocation2 + $0x1b8] sm:$0xff] %v459
  %523 = vst [vmem:[#allocation2 + $0x1c0] sm:$0xff] %v230
  %524 = vst [vmem:[#allocation2 + $0x1c8] sm:$0xff] %v263
  %525 = vst [vmem:[#allocation2 + $0x1d0] sm:$0xff] %v296
  %526 = vst [vmem:[#allocation2 + $0x1d8] sm:$0xff] %v329
  %527 = vst [vmem:[#allocation2 + $0x1e0] sm:$0xff] %v362
  %528 = vst [vmem:[#allocation2 + $0x1e8] sm:$0xff] %v395
  %529 = vst [vmem:[#allocation2 + $0x1f0] sm:$0xff] %v428
  %530 = vst [vmem:[#allocation2 + $0x1f8] sm:$0xff] %v461
  %531 = vst [vmem:[#allocation2 + $0x200] sm:$0xff] %v233
  %532 = vst [vmem:[#allocation2 + $0x208] sm:$0xff] %v266
  %533 = vst [vmem:[#allocation2 + $0x210] sm:$0xff] %v299
  %534 = vst [vmem:[#allocation2 + $0x218] sm:$0xff] %v332
  %535 = vst [vmem:[#allocation2 + $0x220] sm:$0xff] %v365
  %536 = vst [vmem:[#allocation2 + $0x228] sm:$0xff] %v398
  %537 = vst [vmem:[#allocation2 + $0x230] sm:$0xff] %v431
  %538 = vst [vmem:[#allocation2 + $0x238] sm:$0xff] %v464
  %v539 = vld [vmem:[%s3] sm:$0xff]
  %v540 = vld [vmem:[%s3 + $0x8] sm:$0xff]
  %v541 = vld [vmem:[%s3 + $0x10] sm:$0xff]
  %v542 = vld [vmem:[%s3 + $0x18] sm:$0xff]
  %v543 = vld [vmem:[%s3 + $0x20] sm:$0xff]
  %v544 = vld [vmem:[%s3 + $0x28] sm:$0xff]
  %v545 = vld [vmem:[%s3 + $0x30] sm:$0xff]
  %v546 = vld [vmem:[%s3 + $0x38] sm:$0xff]
  %v547 = vld [vmem:[%s3 + $0x40] sm:$0xff]
  %v548 = vld [vmem:[%s3 + $0x48] sm:$0xff]
  %v549 = vld [vmem:[%s3 + $0x50] sm:$0xff]
  %v550 = vld [vmem:[%s3 + $0x58] sm:$0xff]
  %v551 = vld [vmem:[%s3 + $0x60] sm:$0xff]
  %v552 = vld [vmem:[%s3 + $0x68] sm:$0xff]
  %v553 = vld [vmem:[%s3 + $0x70] sm:$0xff]
  %v554 = vld [vmem:[%s3 + $0x78] sm:$0xff]
  %v555 = vld [vmem:[%s3 + $0x80] sm:$0xff]
  %v556 = vld [vmem:[%s3 + $0x88] sm:$0xff]
  %v557 = vld [vmem:[%s3 + $0x90] sm:$0xff]
  %v558 = vld [vmem:[%s3 + $0x98] sm:$0xff]
  %v559 = vld [vmem:[%s3 + $0xa0] sm:$0xff]
  %v560 = vld [vmem:[%s3 + $0xa8] sm:$0xff]
  %v561 = vld [vmem:[%s3 + $0xb0] sm:$0xff]
  %v562 = vld [vmem:[%s3 + $0xb8] sm:$0xff]
  %v563 = vld [vmem:[%s3 + $0xc0] sm:$0xff]
  %v564 = vld [vmem:[%s3 + $0xc8] sm:$0xff]
  %v565 = vld [vmem:[%s3 + $0xd0] sm:$0xff]
  %v566 = vld [vmem:[%s3 + $0xd8] sm:$0xff]
  %v567 = vld [vmem:[%s3 + $0xe0] sm:$0xff]
  %v568 = vld [vmem:[%s3 + $0xe8] sm:$0xff]
  %v569 = vld [vmem:[%s3 + $0xf0] sm:$0xff]
  %v570 = vld [vmem:[%s3 + $0xf8] sm:$0xff]
  %v571 = vld [vmem:[%s3 + $0x100] sm:$0xff]
  %v572 = vld [vmem:[%s3 + $0x108] sm:$0xff]
  %v573 = vld [vmem:[%s3 + $0x110] sm:$0xff]
  %v574 = vld [vmem:[%s3 + $0x118] sm:$0xff]
  %v575 = vld [vmem:[%s3 + $0x120] sm:$0xff]
  %v576 = vld [vmem:[%s3 + $0x128] sm:$0xff]
  %v577 = vld [vmem:[%s3 + $0x130] sm:$0xff]
  %v578 = vld [vmem:[%s3 + $0x138] sm:$0xff]
  %v579 = vld [vmem:[%s3 + $0x140] sm:$0xff]
  %v580 = vld [vmem:[%s3 + $0x148] sm:$0xff]
  %v581 = vld [vmem:[%s3 + $0x150] sm:$0xff]
  %v582 = vld [vmem:[%s3 + $0x158] sm:$0xff]
  %v583 = vld [vmem:[%s3 + $0x160] sm:$0xff]
  %v584 = vld [vmem:[%s3 + $0x168] sm:$0xff]
  %v585 = vld [vmem:[%s3 + $0x170] sm:$0xff]
  %v586 = vld [vmem:[%s3 + $0x178] sm:$0xff]
  %v587 = vld [vmem:[%s3 + $0x180] sm:$0xff]
  %v588 = vld [vmem:[%s3 + $0x188] sm:$0xff]
  %v589 = vld [vmem:[%s3 + $0x190] sm:$0xff]
  %v590 = vld [vmem:[%s3 + $0x198] sm:$0xff]
  %v591 = vld [vmem:[%s3 + $0x1a0] sm:$0xff]
  %v592 = vld [vmem:[%s3 + $0x1a8] sm:$0xff]
  %v593 = vld [vmem:[%s3 + $0x1b0] sm:$0xff]
  %v594 = vld [vmem:[%s3 + $0x1b8] sm:$0xff]
  %v595 = vld [vmem:[%s3 + $0x1c0] sm:$0xff]
  %v596 = vld [vmem:[%s3 + $0x1c8] sm:$0xff]
  %v597 = vld [vmem:[%s3 + $0x1d0] sm:$0xff]
  %v598 = vld [vmem:[%s3 + $0x1d8] sm:$0xff]
  %v599 = vld [vmem:[%s3 + $0x1e0] sm:$0xff]
  %v600 = vld [vmem:[%s3 + $0x1e8] sm:$0xff]
  %v601 = vld [vmem:[%s3 + $0x1f0] sm:$0xff]
  %v602 = vld [vmem:[%s3 + $0x1f8] sm:$0xff]
  %v603 = vld [vmem:[%s3 + $0x200] sm:$0xff]
  %v604 = vld [vmem:[%s3 + $0x208] sm:$0xff]
  %v605 = vld [vmem:[%s3 + $0x210] sm:$0xff]
  %v606 = vld [vmem:[%s3 + $0x218] sm:$0xff]
  %v607 = vld [vmem:[%s3 + $0x220] sm:$0xff]
  %v608 = vld [vmem:[%s3 + $0x228] sm:$0xff]
  %v609 = vld [vmem:[%s3 + $0x230] sm:$0xff]
  %v610 = vld [vmem:[%s3 + $0x238] sm:$0xff]
  %v611 = vld [vmem:[%s3 + $0x240] sm:$0xff]
  %v612 = vld [vmem:[%s3 + $0x248] sm:$0xff]
  %v613 = vld [vmem:[%s3 + $0x250] sm:$0xff]
  %v614 = vld [vmem:[%s3 + $0x258] sm:$0xff]
  %v615 = vld [vmem:[%s3 + $0x260] sm:$0xff]
  %v616 = vld [vmem:[%s3 + $0x268] sm:$0xff]
  %v617 = vld [vmem:[%s3 + $0x270] sm:$0xff]
  %v618 = vld [vmem:[%s3 + $0x278] sm:$0xff]
  %v619 = vld [vmem:[%s3 + $0x280] sm:$0xff]
  %v620 = vld [vmem:[%s3 + $0x288] sm:$0xff]
  %v621 = vld [vmem:[%s3 + $0x290] sm:$0xff]
  %v622 = vld [vmem:[%s3 + $0x298] sm:$0xff]
  %v623 = vld [vmem:[%s3 + $0x2a0] sm:$0xff]
  %v624 = vld [vmem:[%s3 + $0x2a8] sm:$0xff]
  %v625 = vld [vmem:[%s3 + $0x2b0] sm:$0xff]
  %v626 = vld [vmem:[%s3 + $0x2b8] sm:$0xff]
  %v627 = vld [vmem:[%s3 + $0x2c0] sm:$0xff]
  %v628 = vld [vmem:[%s3 + $0x2c8] sm:$0xff]
  %v629 = vld [vmem:[%s3 + $0x2d0] sm:$0xff]
  %v630 = vld [vmem:[%s3 + $0x2d8] sm:$0xff]
  %v631 = vld [vmem:[%s3 + $0x2e0] sm:$0xff]
  %v632 = vld [vmem:[%s3 + $0x2e8] sm:$0xff]
  %v633 = vld [vmem:[%s3 + $0x2f0] sm:$0xff]
  %v634 = vld [vmem:[%s3 + $0x2f8] sm:$0xff]
  %v635 = vld [vmem:[%s3 + $0x300] sm:$0xff]
  %v636 = vld [vmem:[%s3 + $0x308] sm:$0xff]
  %v637 = vld [vmem:[%s3 + $0x310] sm:$0xff]
  %v638 = vld [vmem:[%s3 + $0x318] sm:$0xff]
  %v639 = vld [vmem:[%s3 + $0x320] sm:$0xff]
  %v640 = vld [vmem:[%s3 + $0x328] sm:$0xff]
  %v641 = vld [vmem:[%s3 + $0x330] sm:$0xff]
  %v642 = vld [vmem:[%s3 + $0x338] sm:$0xff]
  %v643 = vld [vmem:[%s3 + $0x340] sm:$0xff]
  %v644 = vld [vmem:[%s3 + $0x348] sm:$0xff]
  %v645 = vld [vmem:[%s3 + $0x350] sm:$0xff]
  %v646 = vld [vmem:[%s3 + $0x358] sm:$0xff]
  %v647 = vld [vmem:[%s3 + $0x360] sm:$0xff]
  %v648 = vld [vmem:[%s3 + $0x368] sm:$0xff]
  %v649 = vld [vmem:[%s3 + $0x370] sm:$0xff]
  %v650 = vld [vmem:[%s3 + $0x378] sm:$0xff]
  %v651 = vld [vmem:[%s3 + $0x380] sm:$0xff]
  %v652 = vld [vmem:[%s3 + $0x388] sm:$0xff]
  %v653 = vld [vmem:[%s3 + $0x390] sm:$0xff]
  %v654 = vld [vmem:[%s3 + $0x398] sm:$0xff]
  %v655 = vld [vmem:[%s3 + $0x3a0] sm:$0xff]
  %v656 = vld [vmem:[%s3 + $0x3a8] sm:$0xff]
  %v657 = vld [vmem:[%s3 + $0x3b0] sm:$0xff]
  %v658 = vld [vmem:[%s3 + $0x3b8] sm:$0xff]
  %v659 = vld [vmem:[%s3 + $0x3c0] sm:$0xff]
  %v660 = vld [vmem:[%s3 + $0x3c8] sm:$0xff]
  %v661 = vld [vmem:[%s3 + $0x3d0] sm:$0xff]
  %v662 = vld [vmem:[%s3 + $0x3d8] sm:$0xff]
  %v663 = vld [vmem:[%s3 + $0x3e0] sm:$0xff]
  %v664 = vld [vmem:[%s3 + $0x3e8] sm:$0xff]
  %v665 = vld [vmem:[%s3 + $0x3f0] sm:$0xff]
  %v666 = vld [vmem:[%s3 + $0x3f8] sm:$0xff]
  %v667 = vld [vmem:[#allocation2] sm:$0xff]
  %v668 = vld [vmem:[#allocation2 + $0x20] sm:$0xff]
  %v669 = vld [vmem:[#allocation2 + $0x30] sm:$0xff]
  %v670 = vxor.u32 %v667, 2147483648
  %v671 = vmul.f32 %v670, 1.442695
  %v672 = vpow.pop %v671
  %v673 = vadd.f32 %v672, 1.0
  %v674 = vrcp.pop %v673
  %v675 = vmul.f32 %v673, %v674
  %v676 = vsub.f32 1.0, %v675
  %v677 = vmul.f32 %v674, %v676
  %v678 = vadd.f32 %v674, %v677
  %vm679 = vweird.f32 %v673
  %vm680 = vweird.f32 %v674
  %vm681 = vmor %vm679, %vm680
  %v682 = vsel %vm681, %v674, %v678
  %v683 = vand.u32 2147483647, %v673
  %vm684 = vcmp.eq.f32.partialorder %v683, 8.507059e+37
  %v685 = vand.u32 %v673, 2147483648
  %v686 = vor.u32 1.1754944e-38, %v685
  %v687 = vsel %vm684, %v686, %v682
  %v688 = vmul.f32 1.0, %v687
  %v689 = vtanh.pop %v669
  %v690 = vmul.f32 %v688, %v689
  %v691 = vxor.u32 %v668, 2147483648
  %v692 = vmul.f32 %v691, 1.442695
  %v693 = vpow.pop %v692
  %v694 = vadd.f32 %v693, 1.0
  %v695 = vrcp.pop %v694
  %v696 = vmul.f32 %v694, %v695
  %v697 = vsub.f32 1.0, %v696
  %v698 = vmul.f32 %v695, %v697
  %v699 = vadd.f32 %v695, %v698
  %vm700 = vweird.f32 %v694
  %vm701 = vweird.f32 %v695
  %vm702 = vmor %vm700, %vm701
  %v703 = vsel %vm702, %v695, %v699
  %v704 = vand.u32 2147483647, %v694
  %vm705 = vcmp.eq.f32.partialorder %v704, 8.507059e+37
  %v706 = vand.u32 %v694, 2147483648
  %v707 = vor.u32 1.1754944e-38, %v706
  %v708 = vsel %vm705, %v707, %v703
  %v709 = vmul.f32 1.0, %v708
  %v710 = vtanh.pop %v690
  %v711 = vmul.f32 %v709, %v710
  %v712 = vpack.c.bf16 %v711, %v711
  %v713 = vpack.c.bf16 0.0, 0.0
  %v714 = vld [vmem:[#allocation2 + $0x40] sm:$0xff]
  %v715 = vld [vmem:[#allocation2 + $0x48] sm:$0xff]
  %v716 = vld [vmem:[#allocation2 + $0x50] sm:$0xff]
  %v717 = vld [vmem:[#allocation2 + $0x58] sm:$0xff]
  %v718 = vld [vmem:[#allocation2 + $0x60] sm:$0xff]
  %v719 = vld [vmem:[#allocation2 + $0x68] sm:$0xff]
  %v720 = vld [vmem:[#allocation2 + $0x70] sm:$0xff]
  %v721 = vld [vmem:[#allocation2 + $0x78] sm:$0xff]
  %v850 = vunpack.c.l.b16 %v539
  %v851 = vunpack.c.h.b16 %v539
  %v852 = vunpack.c.l.b16 %v540
  %v853 = vunpack.c.h.b16 %v540
  %v854 = vunpack.c.l.b16 %v541
  %v855 = vunpack.c.h.b16 %v541
  %v856 = vunpack.c.l.b16 %v542
  %v857 = vunpack.c.h.b16 %v542
  %v858 = vunpack.c.l.b16 %v543
  %v859 = vunpack.c.h.b16 %v543
  %v860 = vunpack.c.l.b16 %v544
  %v861 = vunpack.c.h.b16 %v544
  %v862 = vunpack.c.l.b16 %v545
  %v863 = vunpack.c.h.b16 %v545
  %v864 = vunpack.c.l.b16 %v546
  %v865 = vunpack.c.h.b16 %v546
  %v866 = vunpack.c.l.b16 %v547
  %v867 = vunpack.c.h.b16 %v547
  %v868 = vunpack.c.l.b16 %v548
  %v869 = vunpack.c.h.b16 %v548
  %v870 = vunpack.c.l.b16 %v549
  %v871 = vunpack.c.h.b16 %v549
  %v872 = vunpack.c.l.b16 %v550
  %v873 = vunpack.c.h.b16 %v550
  %v874 = vunpack.c.l.b16 %v551
  %v875 = vunpack.c.h.b16 %v551
  %v876 = vunpack.c.l.b16 %v552
  %v877 = vunpack.c.h.b16 %v552
  %v878 = vunpack.c.l.b16 %v553
  %v879 = vunpack.c.h.b16 %v553
  %v880 = vunpack.c.l.b16 %v554
  %v881 = vunpack.c.h.b16 %v554
  %v882 = vunpack.c.l.b16 %v555
  %v883 = vunpack.c.h.b16 %v555
  %v884 = vunpack.c.l.b16 %v556
  %v885 = vunpack.c.h.b16 %v556
  %v886 = vunpack.c.l.b16 %v557
  %v887 = vunpack.c.h.b16 %v557
  %v888 = vunpack.c.l.b16 %v558
  %v889 = vunpack.c.h.b16 %v558
  %v890 = vunpack.c.l.b16 %v559
  %v891 = vunpack.c.h.b16 %v559
  %v892 = vunpack.c.l.b16 %v560
  %v893 = vunpack.c.h.b16 %v560
  %v894 = vunpack.c.l.b16 %v561
  %v895 = vunpack.c.h.b16 %v561
  %v896 = vunpack.c.l.b16 %v562
  %v897 = vunpack.c.h.b16 %v562
  %v898 = vunpack.c.l.b16 %v563
  %v899 = vunpack.c.h.b16 %v563
  %v900 = vunpack.c.l.b16 %v564
  %v901 = vunpack.c.h.b16 %v564
  %v902 = vunpack.c.l.b16 %v565
  %v903 = vunpack.c.h.b16 %v565
  %v904 = vunpack.c.l.b16 %v566
  %v905 = vunpack.c.h.b16 %v566
  %v906 = vunpack.c.l.b16 %v567
  %v907 = vunpack.c.h.b16 %v567
  %v908 = vunpack.c.l.b16 %v568
  %v909 = vunpack.c.h.b16 %v568
  %v910 = vunpack.c.l.b16 %v569
  %v911 = vunpack.c.h.b16 %v569
  %v912 = vunpack.c.l.b16 %v570
  %v913 = vunpack.c.h.b16 %v570
  %v914 = vunpack.c.l.b16 %v571
  %v915 = vunpack.c.h.b16 %v571
  %v916 = vunpack.c.l.b16 %v572
  %v917 = vunpack.c.h.b16 %v572
  %v918 = vunpack.c.l.b16 %v573
  %v919 = vunpack.c.h.b16 %v573
  %v920 = vunpack.c.l.b16 %v574
  %v921 = vunpack.c.h.b16 %v574
  %v922 = vunpack.c.l.b16 %v575
  %v923 = vunpack.c.h.b16 %v575
  %v924 = vunpack.c.l.b16 %v576
  %v925 = vunpack.c.h.b16 %v576
  %v926 = vunpack.c.l.b16 %v577
  %v927 = vunpack.c.h.b16 %v577
  %v928 = vunpack.c.l.b16 %v578
  %v929 = vunpack.c.h.b16 %v578
  %v930 = vunpack.c.l.b16 %v579
  %v931 = vunpack.c.h.b16 %v579
  %v932 = vunpack.c.l.b16 %v580
  %v933 = vunpack.c.h.b16 %v580
  %v934 = vunpack.c.l.b16 %v581
  %v935 = vunpack.c.h.b16 %v581
  %v936 = vunpack.c.l.b16 %v582
  %v937 = vunpack.c.h.b16 %v582
  %v938 = vunpack.c.l.b16 %v583
  %v939 = vunpack.c.h.b16 %v583
  %v940 = vunpack.c.l.b16 %v584
  %v941 = vunpack.c.h.b16 %v584
  %v942 = vunpack.c.l.b16 %v585
  %v943 = vunpack.c.h.b16 %v585
  %v944 = vunpack.c.l.b16 %v586
  %v945 = vunpack.c.h.b16 %v586
  %v946 = vunpack.c.l.b16 %v587
  %v947 = vunpack.c.h.b16 %v587
  %v948 = vunpack.c.l.b16 %v588
  %v949 = vunpack.c.h.b16 %v588
  %v950 = vunpack.c.l.b16 %v589
  %v951 = vunpack.c.h.b16 %v589
  %v952 = vunpack.c.l.b16 %v590
  %v953 = vunpack.c.h.b16 %v590
  %v954 = vunpack.c.l.b16 %v591
  %v955 = vunpack.c.h.b16 %v591
  %v956 = vunpack.c.l.b16 %v592
  %v957 = vunpack.c.h.b16 %v592
  %v958 = vunpack.c.l.b16 %v593
  %v959 = vunpack.c.h.b16 %v593
  %v960 = vunpack.c.l.b16 %v594
  %v961 = vunpack.c.h.b16 %v594
  %v962 = vunpack.c.l.b16 %v595
  %v963 = vunpack.c.h.b16 %v595
  %v964 = vunpack.c.l.b16 %v596
  %v965 = vunpack.c.h.b16 %v596
  %v966 = vunpack.c.l.b16 %v597
  %v967 = vunpack.c.h.b16 %v597
  %v968 = vunpack.c.l.b16 %v598
  %v969 = vunpack.c.h.b16 %v598
  %v970 = vunpack.c.l.b16 %v599
  %v971 = vunpack.c.h.b16 %v599
  %v972 = vunpack.c.l.b16 %v600
  %v973 = vunpack.c.h.b16 %v600
  %v974 = vunpack.c.l.b16 %v601
  %v975 = vunpack.c.h.b16 %v601
  %v976 = vunpack.c.l.b16 %v602
  %v977 = vunpack.c.h.b16 %v602
  %v978 = vunpack.c.l.b16 %v603
  %v979 = vunpack.c.h.b16 %v603
  %v980 = vunpack.c.l.b16 %v604
  %v981 = vunpack.c.h.b16 %v604
  %v982 = vunpack.c.l.b16 %v605
  %v983 = vunpack.c.h.b16 %v605
  %v984 = vunpack.c.l.b16 %v606
  %v985 = vunpack.c.h.b16 %v606
  %v986 = vunpack.c.l.b16 %v607
  %v987 = vunpack.c.h.b16 %v607
  %v988 = vunpack.c.l.b16 %v608
  %v989 = vunpack.c.h.b16 %v608
  %v990 = vunpack.c.l.b16 %v609
  %v991 = vunpack.c.h.b16 %v609
  %v992 = vunpack.c.l.b16 %v610
  %v993 = vunpack.c.h.b16 %v610
  %v994 = vunpack.c.l.b16 %v611
  %v995 = vunpack.c.h.b16 %v611
  %v996 = vunpack.c.l.b16 %v612
  %v997 = vunpack.c.h.b16 %v612
  %v998 = vunpack.c.l.b16 %v613
  %v999 = vunpack.c.h.b16 %v613
  %v1000 = vunpack.c.l.b16 %v614
  %v1001 = vunpack.c.h.b16 %v614
  %v1002 = vunpack.c.l.b16 %v615
  %v1003 = vunpack.c.h.b16 %v615
  %v1004 = vunpack.c.l.b16 %v616
  %v1005 = vunpack.c.h.b16 %v616
  %v1006 = vunpack.c.l.b16 %v617
  %v1007 = vunpack.c.h.b16 %v617
  %v1008 = vunpack.c.l.b16 %v618
  %v1009 = vunpack.c.h.b16 %v618
  %v1010 = vunpack.c.l.b16 %v619
  %v1011 = vunpack.c.h.b16 %v619
  %v1012 = vunpack.c.l.b16 %v620
  %v1013 = vunpack.c.h.b16 %v620
  %v1014 = vunpack.c.l.b16 %v621
  %v1015 = vunpack.c.h.b16 %v621
  %v1016 = vunpack.c.l.b16 %v622
  %v1017 = vunpack.c.h.b16 %v622
  %v1018 = vunpack.c.l.b16 %v623
  %v1019 = vunpack.c.h.b16 %v623
  %v1020 = vunpack.c.l.b16 %v624
  %v1021 = vunpack.c.h.b16 %v624
  %v1022 = vunpack.c.l.b16 %v625
  %v1023 = vunpack.c.h.b16 %v625
  %v1024 = vunpack.c.l.b16 %v626
  %v1025 = vunpack.c.h.b16 %v626
  %v1026 = vunpack.c.l.b16 %v627
  %v1027 = vunpack.c.h.b16 %v627
  %v1028 = vunpack.c.l.b16 %v628
  %v1029 = vunpack.c.h.b16 %v628
  %v1030 = vunpack.c.l.b16 %v629
  %v1031 = vunpack.c.h.b16 %v629
  %v1032 = vunpack.c.l.b16 %v630
  %v1033 = vunpack.c.h.b16 %v630
  %v1034 = vunpack.c.l.b16 %v631
  %v1035 = vunpack.c.h.b16 %v631
  %v1036 = vunpack.c.l.b16 %v632
  %v1037 = vunpack.c.h.b16 %v632
  %v1038 = vunpack.c.l.b16 %v633
  %v1039 = vunpack.c.h.b16 %v633
  %v1040 = vunpack.c.l.b16 %v634
  %v1041 = vunpack.c.h.b16 %v634
  %v1042 = vunpack.c.l.b16 %v635
  %v1043 = vunpack.c.h.b16 %v635
  %v1044 = vunpack.c.l.b16 %v636
  %v1045 = vunpack.c.h.b16 %v636
  %v1046 = vunpack.c.l.b16 %v637
  %v1047 = vunpack.c.h.b16 %v637
  %v1048 = vunpack.c.l.b16 %v638
  %v1049 = vunpack.c.h.b16 %v638
  %v1050 = vunpack.c.l.b16 %v639
  %v1051 = vunpack.c.h.b16 %v639
  %v1052 = vunpack.c.l.b16 %v640
  %v1053 = vunpack.c.h.b16 %v640
  %v1054 = vunpack.c.l.b16 %v641
  %v1055 = vunpack.c.h.b16 %v641
  %v1056 = vunpack.c.l.b16 %v642
  %v1057 = vunpack.c.h.b16 %v642
  %v1058 = vunpack.c.l.b16 %v643
  %v1059 = vunpack.c.h.b16 %v643
  %v1060 = vunpack.c.l.b16 %v644
  %v1061 = vunpack.c.h.b16 %v644
  %v1062 = vunpack.c.l.b16 %v645
  %v1063 = vunpack.c.h.b16 %v645
  %v1064 = vunpack.c.l.b16 %v646
  %v1065 = vunpack.c.h.b16 %v646
  %v1066 = vunpack.c.l.b16 %v647
  %v1067 = vunpack.c.h.b16 %v647
  %v1068 = vunpack.c.l.b16 %v648
  %v1069 = vunpack.c.h.b16 %v648
  %v1070 = vunpack.c.l.b16 %v649
  %v1071 = vunpack.c.h.b16 %v649
  %v1072 = vunpack.c.l.b16 %v650
  %v1073 = vunpack.c.h.b16 %v650
  %v1074 = vunpack.c.l.b16 %v651
  %v1075 = vunpack.c.h.b16 %v651
  %v1076 = vunpack.c.l.b16 %v652
  %v1077 = vunpack.c.h.b16 %v652
  %v1078 = vunpack.c.l.b16 %v653
  %v1079 = vunpack.c.h.b16 %v653
  %v1080 = vunpack.c.l.b16 %v654
  %v1081 = vunpack.c.h.b16 %v654
  %v1082 = vunpack.c.l.b16 %v655
  %v1083 = vunpack.c.h.b16 %v655
  %v1084 = vunpack.c.l.b16 %v656
  %v1085 = vunpack.c.h.b16 %v656
  %v1086 = vunpack.c.l.b16 %v657
  %v1087 = vunpack.c.h.b16 %v657
  %v1088 = vunpack.c.l.b16 %v658
  %v1089 = vunpack.c.h.b16 %v658
  %v1090 = vunpack.c.l.b16 %v659
  %v1091 = vunpack.c.h.b16 %v659
  %v1092 = vunpack.c.l.b16 %v660
  %v1093 = vunpack.c.h.b16 %v660
  %v1094 = vunpack.c.l.b16 %v661
  %v1095 = vunpack.c.h.b16 %v661
  %v1096 = vunpack.c.l.b16 %v662
  %v1097 = vunpack.c.h.b16 %v662
  %v1098 = vunpack.c.l.b16 %v663
  %v1099 = vunpack.c.h.b16 %v663
  %v1100 = vunpack.c.l.b16 %v664
  %v1101 = vunpack.c.h.b16 %v664
  %v1102 = vunpack.c.l.b16 %v665
  %v1103 = vunpack.c.h.b16 %v665
  %v1104 = vunpack.c.l.b16 %v666
  %v1105 = vunpack.c.h.b16 %v666
  %v1106 = vpack.c.b16 %v858, %v850
  %v1107 = vpack.c.b16 %v859, %v851
  %v1108 = vpack.c.b16 %v860, %v852
  %v1109 = vpack.c.b16 %v861, %v853
  %v1110 = vpack.c.b16 %v862, %v854
  %v1111 = vpack.c.b16 %v863, %v855
  %v1112 = vpack.c.b16 %v864, %v856
  %v1113 = vpack.c.b16 %v865, %v857
  %v1114 = vpack.c.b16 %v874, %v866
  %v1115 = vpack.c.b16 %v875, %v867
  %v1116 = vpack.c.b16 %v876, %v868
  %v1117 = vpack.c.b16 %v877, %v869
  %v1118 = vpack.c.b16 %v878, %v870
  %v1119 = vpack.c.b16 %v879, %v871
  %v1120 = vpack.c.b16 %v880, %v872
  %v1121 = vpack.c.b16 %v881, %v873
  %v1122 = vpack.c.b16 %v890, %v882
  %v1123 = vpack.c.b16 %v891, %v883
  %v1124 = vpack.c.b16 %v892, %v884
  %v1125 = vpack.c.b16 %v893, %v885
  %v1126 = vpack.c.b16 %v894, %v886
  %v1127 = vpack.c.b16 %v895, %v887
  %v1128 = vpack.c.b16 %v896, %v888
  %v1129 = vpack.c.b16 %v897, %v889
  %v1130 = vpack.c.b16 %v906, %v898
  %v1131 = vpack.c.b16 %v907, %v899
  %v1132 = vpack.c.b16 %v908, %v900
  %v1133 = vpack.c.b16 %v909, %v901
  %v1134 = vpack.c.b16 %v910, %v902
  %v1135 = vpack.c.b16 %v911, %v903
  %v1136 = vpack.c.b16 %v912, %v904
  %v1137 = vpack.c.b16 %v913, %v905
  %v1138 = vpack.c.b16 %v922, %v914
  %v1139 = vpack.c.b16 %v923, %v915
  %v1140 = vpack.c.b16 %v924, %v916
  %v1141 = vpack.c.b16 %v925, %v917
  %v1142 = vpack.c.b16 %v926, %v918
  %v1143 = vpack.c.b16 %v927, %v919
  %v1144 = vpack.c.b16 %v928, %v920
  %v1145 = vpack.c.b16 %v929, %v921
  %v1146 = vpack.c.b16 %v938, %v930
  %v1147 = vpack.c.b16 %v939, %v931
  %v1148 = vpack.c.b16 %v940, %v932
  %v1149 = vpack.c.b16 %v941, %v933
  %v1150 = vpack.c.b16 %v942, %v934
  %v1151 = vpack.c.b16 %v943, %v935
  %v1152 = vpack.c.b16 %v944, %v936
  %v1153 = vpack.c.b16 %v945, %v937
  %v1154 = vpack.c.b16 %v954, %v946
  %v1155 = vpack.c.b16 %v955, %v947
  %v1156 = vpack.c.b16 %v956, %v948
  %v1157 = vpack.c.b16 %v957, %v949
  %v1158 = vpack.c.b16 %v958, %v950
  %v1159 = vpack.c.b16 %v959, %v951
  %v1160 = vpack.c.b16 %v960, %v952
  %v1161 = vpack.c.b16 %v961, %v953
  %v1162 = vpack.c.b16 %v970, %v962
  %v1163 = vpack.c.b16 %v971, %v963
  %v1164 = vpack.c.b16 %v972, %v964
  %v1165 = vpack.c.b16 %v973, %v965
  %v1166 = vpack.c.b16 %v974, %v966
  %v1167 = vpack.c.b16 %v975, %v967
  %v1168 = vpack.c.b16 %v976, %v968
  %v1169 = vpack.c.b16 %v977, %v969
  %v1170 = vpack.c.b16 %v986, %v978
  %v1171 = vpack.c.b16 %v987, %v979
  %v1172 = vpack.c.b16 %v988, %v980
  %v1173 = vpack.c.b16 %v989, %v981
  %v1174 = vpack.c.b16 %v990, %v982
  %v1175 = vpack.c.b16 %v991, %v983
  %v1176 = vpack.c.b16 %v992, %v984
  %v1177 = vpack.c.b16 %v993, %v985
  %v1178 = vpack.c.b16 %v1002, %v994
  %v1179 = vpack.c.b16 %v1003, %v995
  %v1180 = vpack.c.b16 %v1004, %v996
  %v1181 = vpack.c.b16 %v1005, %v997
  %v1182 = vpack.c.b16 %v1006, %v998
  %v1183 = vpack.c.b16 %v1007, %v999
  %v1184 = vpack.c.b16 %v1008, %v1000
  %v1185 = vpack.c.b16 %v1009, %v1001
  %v1186 = vpack.c.b16 %v1018, %v1010
  %v1187 = vpack.c.b16 %v1019, %v1011
  %v1188 = vpack.c.b16 %v1020, %v1012
  %v1189 = vpack.c.b16 %v1021, %v1013
  %v1190 = vpack.c.b16 %v1022, %v1014
  %v1191 = vpack.c.b16 %v1023, %v1015
  %v1192 = vpack.c.b16 %v1024, %v1016
  %v1193 = vpack.c.b16 %v1025, %v1017
  %v1194 = vpack.c.b16 %v1034, %v1026
  %v1195 = vpack.c.b16 %v1035, %v1027
  %v1196 = vpack.c.b16 %v1036, %v1028
  %v1197 = vpack.c.b16 %v1037, %v1029
  %v1198 = vpack.c.b16 %v1038, %v1030
  %v1199 = vpack.c.b16 %v1039, %v1031
  %v1200 = vpack.c.b16 %v1040, %v1032
  %v1201 = vpack.c.b16 %v1041, %v1033
  %v1202 = vpack.c.b16 %v1050, %v1042
  %v1203 = vpack.c.b16 %v1051, %v1043
  %v1204 = vpack.c.b16 %v1052, %v1044
  %v1205 = vpack.c.b16 %v1053, %v1045
  %v1206 = vpack.c.b16 %v1054, %v1046
  %v1207 = vpack.c.b16 %v1055, %v1047
  %v1208 = vpack.c.b16 %v1056, %v1048
  %v1209 = vpack.c.b16 %v1057, %v1049
  %v1210 = vpack.c.b16 %v1066, %v1058
  %v1211 = vpack.c.b16 %v1067, %v1059
  %v1212 = vpack.c.b16 %v1068, %v1060
  %v1213 = vpack.c.b16 %v1069, %v1061
  %v1214 = vpack.c.b16 %v1070, %v1062
  %v1215 = vpack.c.b16 %v1071, %v1063
  %v1216 = vpack.c.b16 %v1072, %v1064
  %v1217 = vpack.c.b16 %v1073, %v1065
  %v1218 = vpack.c.b16 %v1082, %v1074
  %v1219 = vpack.c.b16 %v1083, %v1075
  %v1220 = vpack.c.b16 %v1084, %v1076
  %v1221 = vpack.c.b16 %v1085, %v1077
  %v1222 = vpack.c.b16 %v1086, %v1078
  %v1223 = vpack.c.b16 %v1087, %v1079
  %v1224 = vpack.c.b16 %v1088, %v1080
  %v1225 = vpack.c.b16 %v1089, %v1081
  %v1226 = vpack.c.b16 %v1098, %v1090
  %v1227 = vpack.c.b16 %v1099, %v1091
  %v1228 = vpack.c.b16 %v1100, %v1092
  %v1229 = vpack.c.b16 %v1101, %v1093
  %v1230 = vpack.c.b16 %v1102, %v1094
  %v1231 = vpack.c.b16 %v1103, %v1095
  %v1232 = vpack.c.b16 %v1104, %v1096
  %v1233 = vpack.c.b16 %v1105, %v1097
  %1362 = vmatpush.bf16.msra.mxu0 %v1162
  %1363 = vmatpush.bf16.msra.mxu0 %v1154
  %1364 = vmatpush.bf16.msra.mxu0 %v1146
  %1365 = vmatpush.bf16.msra.mxu0 %v1138
  %1366 = vmatpush.bf16.msra.mxu0 %v1130
  %1367 = vmatpush.bf16.msra.mxu0 %v1122
  %1368 = vmatpush.bf16.msra.mxu0 %v1114
  %1369 = vmatpush.bf16.msra.mxu0 %v1106
  %1370 = vmatmul.bf16.gmra.mxu0 %v712
  %v1371 = vpop.f32.mrf.mxu0
  %v1372 = vadd.f32 %v714, %v1371
  %v1373 = vpop.f32.mrf.mxu0
  %1374 = vdwg.mxu0
  %1375 = vmatpush.bf16.msra.mxu0 %v1226
  %1376 = vmatpush.bf16.msra.mxu0 %v1218
  %1377 = vmatpush.bf16.msra.mxu0 %v1210
  %1378 = vmatpush.bf16.msra.mxu0 %v1202
  %1379 = vmatpush.bf16.msra.mxu0 %v1194
  %1380 = vmatpush.bf16.msra.mxu0 %v1186
  %1381 = vmatpush.bf16.msra.mxu0 %v1178
  %1382 = vmatpush.bf16.msra.mxu0 %v1170
  %1383 = vmatmul.bf16.gmra.mxu0 %v713
  %v1384 = vpop.f32.mrf.mxu0
  %v1385 = vadd.f32 %v1372, %v1384
  %v1386 = vpop.f32.mrf.mxu0
  %1387 = vdwg.mxu0
  %1388 = vmatpush.bf16.msra.mxu0 %v1163
  %1389 = vmatpush.bf16.msra.mxu0 %v1155
  %1390 = vmatpush.bf16.msra.mxu0 %v1147
  %1391 = vmatpush.bf16.msra.mxu0 %v1139
  %1392 = vmatpush.bf16.msra.mxu0 %v1131
  %1393 = vmatpush.bf16.msra.mxu0 %v1123
  %1394 = vmatpush.bf16.msra.mxu0 %v1115
  %1395 = vmatpush.bf16.msra.mxu0 %v1107
  %1396 = vmatmul.bf16.gmra.mxu0 %v712
  %v1397 = vpop.f32.mrf.mxu0
  %v1398 = vadd.f32 %v715, %v1397
  %v1399 = vpop.f32.mrf.mxu0
  %1400 = vdwg.mxu0
  %1401 = vmatpush.bf16.msra.mxu0 %v1227
  %1402 = vmatpush.bf16.msra.mxu0 %v1219
  %1403 = vmatpush.bf16.msra.mxu0 %v1211
  %1404 = vmatpush.bf16.msra.mxu0 %v1203
  %1405 = vmatpush.bf16.msra.mxu0 %v1195
  %1406 = vmatpush.bf16.msra.mxu0 %v1187
  %1407 = vmatpush.bf16.msra.mxu0 %v1179
  %1408 = vmatpush.bf16.msra.mxu0 %v1171
  %1409 = vmatmul.bf16.gmra.mxu0 %v713
  %v1410 = vpop.f32.mrf.mxu0
  %v1411 = vadd.f32 %v1398, %v1410
  %v1412 = vpop.f32.mrf.mxu0
  %1413 = vdwg.mxu0
  %1414 = vmatpush.bf16.msra.mxu0 %v1164
  %1415 = vmatpush.bf16.msra.mxu0 %v1156
  %1416 = vmatpush.bf16.msra.mxu0 %v1148
  %1417 = vmatpush.bf16.msra.mxu0 %v1140
  %1418 = vmatpush.bf16.msra.mxu0 %v1132
  %1419 = vmatpush.bf16.msra.mxu0 %v1124
  %1420 = vmatpush.bf16.msra.mxu0 %v1116
  %1421 = vmatpush.bf16.msra.mxu0 %v1108
  %1422 = vmatmul.bf16.gmra.mxu0 %v712
  %v1423 = vpop.f32.mrf.mxu0
  %v1424 = vadd.f32 %v716, %v1423
  %v1425 = vpop.f32.mrf.mxu0
  %1426 = vdwg.mxu0
  %1427 = vmatpush.bf16.msra.mxu0 %v1228
  %1428 = vmatpush.bf16.msra.mxu0 %v1220
  %1429 = vmatpush.bf16.msra.mxu0 %v1212
  %1430 = vmatpush.bf16.msra.mxu0 %v1204
  %1431 = vmatpush.bf16.msra.mxu0 %v1196
  %1432 = vmatpush.bf16.msra.mxu0 %v1188
  %1433 = vmatpush.bf16.msra.mxu0 %v1180
  %1434 = vmatpush.bf16.msra.mxu0 %v1172
  %1435 = vmatmul.bf16.gmra.mxu0 %v713
  %v1436 = vpop.f32.mrf.mxu0
  %v1437 = vadd.f32 %v1424, %v1436
  %v1438 = vpop.f32.mrf.mxu0
  %1439 = vdwg.mxu0
  %1440 = vmatpush.bf16.msra.mxu0 %v1165
  %1441 = vmatpush.bf16.msra.mxu0 %v1157
  %1442 = vmatpush.bf16.msra.mxu0 %v1149
  %1443 = vmatpush.bf16.msra.mxu0 %v1141
  %1444 = vmatpush.bf16.msra.mxu0 %v1133
  %1445 = vmatpush.bf16.msra.mxu0 %v1125
  %1446 = vmatpush.bf16.msra.mxu0 %v1117
  %1447 = vmatpush.bf16.msra.mxu0 %v1109
  %1448 = vmatmul.bf16.gmra.mxu0 %v712
  %v1449 = vpop.f32.mrf.mxu0
  %v1450 = vadd.f32 %v717, %v1449
  %v1451 = vpop.f32.mrf.mxu0
  %1452 = vdwg.mxu0
  %1453 = vmatpush.bf16.msra.mxu0 %v1229
  %1454 = vmatpush.bf16.msra.mxu0 %v1221
  %1455 = vmatpush.bf16.msra.mxu0 %v1213
  %1456 = vmatpush.bf16.msra.mxu0 %v1205
  %1457 = vmatpush.bf16.msra.mxu0 %v1197
  %1458 = vmatpush.bf16.msra.mxu0 %v1189
  %1459 = vmatpush.bf16.msra.mxu0 %v1181
  %1460 = vmatpush.bf16.msra.mxu0 %v1173
  %1461 = vmatmul.bf16.gmra.mxu0 %v713
  %v1462 = vpop.f32.mrf.mxu0
  %v1463 = vadd.f32 %v1450, %v1462
  %v1464 = vpop.f32.mrf.mxu0
  %1465 = vdwg.mxu0
  %1466 = vmatpush.bf16.msra.mxu0 %v1166
  %1467 = vmatpush.bf16.msra.mxu0 %v1158
  %1468 = vmatpush.bf16.msra.mxu0 %v1150
  %1469 = vmatpush.bf16.msra.mxu0 %v1142
  %1470 = vmatpush.bf16.msra.mxu0 %v1134
  %1471 = vmatpush.bf16.msra.mxu0 %v1126
  %1472 = vmatpush.bf16.msra.mxu0 %v1118
  %1473 = vmatpush.bf16.msra.mxu0 %v1110
  %1474 = vmatmul.bf16.gmra.mxu0 %v712
  %v1475 = vpop.f32.mrf.mxu0
  %v1476 = vadd.f32 %v718, %v1475
  %v1477 = vpop.f32.mrf.mxu0
  %1478 = vdwg.mxu0
  %1479 = vmatpush.bf16.msra.mxu0 %v1230
  %1480 = vmatpush.bf16.msra.mxu0 %v1222
  %1481 = vmatpush.bf16.msra.mxu0 %v1214
  %1482 = vmatpush.bf16.msra.mxu0 %v1206
  %1483 = vmatpush.bf16.msra.mxu0 %v1198
  %1484 = vmatpush.bf16.msra.mxu0 %v1190
  %1485 = vmatpush.bf16.msra.mxu0 %v1182
  %1486 = vmatpush.bf16.msra.mxu0 %v1174
  %1487 = vmatmul.bf16.gmra.mxu0 %v713
  %v1488 = vpop.f32.mrf.mxu0
  %v1489 = vadd.f32 %v1476, %v1488
  %v1490 = vpop.f32.mrf.mxu0
  %1491 = vdwg.mxu0
  %1492 = vmatpush.bf16.msra.mxu0 %v1167
  %1493 = vmatpush.bf16.msra.mxu0 %v1159
  %1494 = vmatpush.bf16.msra.mxu0 %v1151
  %1495 = vmatpush.bf16.msra.mxu0 %v1143
  %1496 = vmatpush.bf16.msra.mxu0 %v1135
  %1497 = vmatpush.bf16.msra.mxu0 %v1127
  %1498 = vmatpush.bf16.msra.mxu0 %v1119
  %1499 = vmatpush.bf16.msra.mxu0 %v1111
  %1500 = vmatmul.bf16.gmra.mxu0 %v712
  %v1501 = vpop.f32.mrf.mxu0
  %v1502 = vadd.f32 %v719, %v1501
  %v1503 = vpop.f32.mrf.mxu0
  %1504 = vdwg.mxu0
  %1505 = vmatpush.bf16.msra.mxu0 %v1231
  %1506 = vmatpush.bf16.msra.mxu0 %v1223
  %1507 = vmatpush.bf16.msra.mxu0 %v1215
  %1508 = vmatpush.bf16.msra.mxu0 %v1207
  %1509 = vmatpush.bf16.msra.mxu0 %v1199
  %1510 = vmatpush.bf16.msra.mxu0 %v1191
  %1511 = vmatpush.bf16.msra.mxu0 %v1183
  %1512 = vmatpush.bf16.msra.mxu0 %v1175
  %1513 = vmatmul.bf16.gmra.mxu0 %v713
  %v1514 = vpop.f32.mrf.mxu0
  %v1515 = vadd.f32 %v1502, %v1514
  %v1516 = vpop.f32.mrf.mxu0
  %1517 = vdwg.mxu0
  %1518 = vmatpush.bf16.msra.mxu0 %v1168
  %1519 = vmatpush.bf16.msra.mxu0 %v1160
  %1520 = vmatpush.bf16.msra.mxu0 %v1152
  %1521 = vmatpush.bf16.msra.mxu0 %v1144
  %1522 = vmatpush.bf16.msra.mxu0 %v1136
  %1523 = vmatpush.bf16.msra.mxu0 %v1128
  %1524 = vmatpush.bf16.msra.mxu0 %v1120
  %1525 = vmatpush.bf16.msra.mxu0 %v1112
  %1526 = vmatmul.bf16.gmra.mxu0 %v712
  %v1527 = vpop.f32.mrf.mxu0
  %v1528 = vadd.f32 %v720, %v1527
  %v1529 = vpop.f32.mrf.mxu0
  %1530 = vdwg.mxu0
  %1531 = vmatpush.bf16.msra.mxu0 %v1232
  %1532 = vmatpush.bf16.msra.mxu0 %v1224
  %1533 = vmatpush.bf16.msra.mxu0 %v1216
  %1534 = vmatpush.bf16.msra.mxu0 %v1208
  %1535 = vmatpush.bf16.msra.mxu0 %v1200
  %1536 = vmatpush.bf16.msra.mxu0 %v1192
  %1537 = vmatpush.bf16.msra.mxu0 %v1184
  %1538 = vmatpush.bf16.msra.mxu0 %v1176
  %1539 = vmatmul.bf16.gmra.mxu0 %v713
  %v1540 = vpop.f32.mrf.mxu0
  %v1541 = vadd.f32 %v1528, %v1540
  %v1542 = vpop.f32.mrf.mxu0
  %1543 = vdwg.mxu0
  %1544 = vmatpush.bf16.msra.mxu0 %v1169
  %1545 = vmatpush.bf16.msra.mxu0 %v1161
  %1546 = vmatpush.bf16.msra.mxu0 %v1153
  %1547 = vmatpush.bf16.msra.mxu0 %v1145
  %1548 = vmatpush.bf16.msra.mxu0 %v1137
  %1549 = vmatpush.bf16.msra.mxu0 %v1129
  %1550 = vmatpush.bf16.msra.mxu0 %v1121
  %1551 = vmatpush.bf16.msra.mxu0 %v1113
  %1552 = vmatmul.bf16.gmra.mxu0 %v712
  %v1553 = vpop.f32.mrf.mxu0
  %v1554 = vadd.f32 %v721, %v1553
  %v1555 = vpop.f32.mrf.mxu0
  %1556 = vdwg.mxu0
  %1557 = vmatpush.bf16.msra.mxu0 %v1233
  %1558 = vmatpush.bf16.msra.mxu0 %v1225
  %1559 = vmatpush.bf16.msra.mxu0 %v1217
  %1560 = vmatpush.bf16.msra.mxu0 %v1209
  %1561 = vmatpush.bf16.msra.mxu0 %v1201
  %1562 = vmatpush.bf16.msra.mxu0 %v1193
  %1563 = vmatpush.bf16.msra.mxu0 %v1185
  %1564 = vmatpush.bf16.msra.mxu0 %v1177
  %1565 = vmatmul.bf16.gmra.mxu0 %v713
  %v1566 = vpop.f32.mrf.mxu0
  %v1567 = vadd.f32 %v1554, %v1566
  %v1568 = vpop.f32.mrf.mxu0
  %1569 = vdwg.mxu0
  %v1570 = vxor.u32 %v1385, 2147483648
  %v1571 = vxor.u32 %v1411, 2147483648
  %v1572 = vxor.u32 %v1437, 2147483648
  %v1573 = vxor.u32 %v1463, 2147483648
  %v1574 = vxor.u32 %v1489, 2147483648
  %v1575 = vxor.u32 %v1515, 2147483648
  %v1576 = vmul.f32 %v1570, 1.442695
  %v1577 = vpow.pop %v1576
  %v1578 = vmul.f32 %v1571, 1.442695
  %v1579 = vpow.pop %v1578
  %v1580 = vmul.f32 %v1572, 1.442695
  %v1581 = vpow.pop %v1580
  %v1582 = vmul.f32 %v1573, 1.442695
  %v1583 = vpow.pop %v1582
  %v1584 = vmul.f32 %v1574, 1.442695
  %v1585 = vpow.pop %v1584
  %v1586 = vmul.f32 %v1575, 1.442695
  %v1587 = vpow.pop %v1586
  %v1588 = vadd.f32 %v1577, 1.0
  %v1589 = vadd.f32 %v1579, 1.0
  %v1590 = vadd.f32 %v1581, 1.0
  %v1591 = vadd.f32 %v1583, 1.0
  %v1592 = vadd.f32 %v1585, 1.0
  %v1593 = vadd.f32 %v1587, 1.0
  %v1594 = vrcp.pop %v1588
  %v1595 = vmul.f32 %v1588, %v1594
  %v1596 = vsub.f32 1.0, %v1595
  %v1597 = vmul.f32 %v1594, %v1596
  %v1598 = vadd.f32 %v1594, %v1597
  %vm1599 = vweird.f32 %v1588
  %vm1600 = vweird.f32 %v1594
  %vm1601 = vmor %vm1599, %vm1600
  %v1602 = vsel %vm1601, %v1594, %v1598
  %v1603 = vand.u32 2147483647, %v1588
  %vm1604 = vcmp.eq.f32.partialorder %v1603, 8.507059e+37
  %v1605 = vand.u32 %v1588, 2147483648
  %v1606 = vor.u32 1.1754944e-38, %v1605
  %v1607 = vsel %vm1604, %v1606, %v1602
  %v1608 = vmul.f32 1.0, %v1607
  %v1609 = vrcp.pop %v1589
  %v1610 = vmul.f32 %v1589, %v1609
  %v1611 = vsub.f32 1.0, %v1610
  %v1612 = vmul.f32 %v1609, %v1611
  %v1613 = vadd.f32 %v1609, %v1612
  %vm1614 = vweird.f32 %v1589
  %vm1615 = vweird.f32 %v1609
  %vm1616 = vmor %vm1614, %vm1615
  %v1617 = vsel %vm1616, %v1609, %v1613
  %v1618 = vand.u32 2147483647, %v1589
  %vm1619 = vcmp.eq.f32.partialorder %v1618, 8.507059e+37
  %v1620 = vand.u32 %v1589, 2147483648
  %v1621 = vor.u32 1.1754944e-38, %v1620
  %v1622 = vsel %vm1619, %v1621, %v1617
  %v1623 = vmul.f32 1.0, %v1622
  %v1624 = vrcp.pop %v1590
  %v1625 = vmul.f32 %v1590, %v1624
  %v1626 = vsub.f32 1.0, %v1625
  %v1627 = vmul.f32 %v1624, %v1626
  %v1628 = vadd.f32 %v1624, %v1627
  %vm1629 = vweird.f32 %v1590
  %vm1630 = vweird.f32 %v1624
  %vm1631 = vmor %vm1629, %vm1630
  %v1632 = vsel %vm1631, %v1624, %v1628
  %v1633 = vand.u32 2147483647, %v1590
  %vm1634 = vcmp.eq.f32.partialorder %v1633, 8.507059e+37
  %v1635 = vand.u32 %v1590, 2147483648
  %v1636 = vor.u32 1.1754944e-38, %v1635
  %v1637 = vsel %vm1634, %v1636, %v1632
  %v1638 = vmul.f32 1.0, %v1637
  %v1639 = vrcp.pop %v1591
  %v1640 = vmul.f32 %v1591, %v1639
  %v1641 = vsub.f32 1.0, %v1640
  %v1642 = vmul.f32 %v1639, %v1641
  %v1643 = vadd.f32 %v1639, %v1642
  %vm1644 = vweird.f32 %v1591
  %vm1645 = vweird.f32 %v1639
  %vm1646 = vmor %vm1644, %vm1645
  %v1647 = vsel %vm1646, %v1639, %v1643
  %v1648 = vand.u32 2147483647, %v1591
  %vm1649 = vcmp.eq.f32.partialorder %v1648, 8.507059e+37
  %v1650 = vand.u32 %v1591, 2147483648
  %v1651 = vor.u32 1.1754944e-38, %v1650
  %v1652 = vsel %vm1649, %v1651, %v1647
  %v1653 = vmul.f32 1.0, %v1652
  %v1654 = vrcp.pop %v1592
  %v1655 = vmul.f32 %v1592, %v1654
  %v1656 = vsub.f32 1.0, %v1655
  %v1657 = vmul.f32 %v1654, %v1656
  %v1658 = vadd.f32 %v1654, %v1657
  %vm1659 = vweird.f32 %v1592
  %vm1660 = vweird.f32 %v1654
  %vm1661 = vmor %vm1659, %vm1660
  %v1662 = vsel %vm1661, %v1654, %v1658
  %v1663 = vand.u32 2147483647, %v1592
  %vm1664 = vcmp.eq.f32.partialorder %v1663, 8.507059e+37
  %v1665 = vand.u32 %v1592, 2147483648
  %v1666 = vor.u32 1.1754944e-38, %v1665
  %v1667 = vsel %vm1664, %v1666, %v1662
  %v1668 = vmul.f32 1.0, %v1667
  %v1669 = vrcp.pop %v1593
  %v1670 = vmul.f32 %v1593, %v1669
  %v1671 = vsub.f32 1.0, %v1670
  %v1672 = vmul.f32 %v1669, %v1671
  %v1673 = vadd.f32 %v1669, %v1672
  %vm1674 = vweird.f32 %v1593
  %vm1675 = vweird.f32 %v1669
  %vm1676 = vmor %vm1674, %vm1675
  %v1677 = vsel %vm1676, %v1669, %v1673
  %v1678 = vand.u32 2147483647, %v1593
  %vm1679 = vcmp.eq.f32.partialorder %v1678, 8.507059e+37
  %v1680 = vand.u32 %v1593, 2147483648
  %v1681 = vor.u32 1.1754944e-38, %v1680
  %v1682 = vsel %vm1679, %v1681, %v1677
  %v1683 = vmul.f32 1.0, %v1682
  %v1684 = vtanh.pop %v1541
  %v1685 = vtanh.pop %v1567
  %v1686 = vmul.f32 %v1638, %v690
  %v1687 = vmul.f32 %v1653, 0.0
  %v1688 = vmul.f32 %v1608, %v1684
  %v1689 = vmul.f32 %v1623, %v1685
  %v1690 = vadd.f32 %v1686, %v1688
  %v1691 = vadd.f32 %v1687, %v1689
  %v1692 = vtanh.pop %v1690
  %v1693 = vtanh.pop %v1691
  %v1694 = vmul.f32 %v1668, %v1692
  %v1695 = vmul.f32 %v1683, %v1693
  %v1696 = vpack.c.bf16 %v1694, %v1694
  %v1697 = vpack.c.bf16 %v1695, %v1695
  %v1698 = vld [vmem:[#allocation2 + $0x80] sm:$0xff]
  %v1699 = vld [vmem:[#allocation2 + $0x88] sm:$0xff]
  %v1700 = vld [vmem:[#allocation2 + $0x90] sm:$0xff]
  %v1701 = vld [vmem:[#allocation2 + $0x98] sm:$0xff]
  %v1702 = vld [vmem:[#allocation2 + $0xa0] sm:$0xff]
  %v1703 = vld [vmem:[#allocation2 + $0xa8] sm:$0xff]
  %v1704 = vld [vmem:[#allocation2 + $0xb0] sm:$0xff]
  %v1705 = vld [vmem:[#allocation2 + $0xb8] sm:$0xff]
  %1706 = vmatpush.bf16.msra.mxu0 %v1162
  %1707 = vmatpush.bf16.msra.mxu0 %v1154
  %1708 = vmatpush.bf16.msra.mxu0 %v1146
  %1709 = vmatpush.bf16.msra.mxu0 %v1138
  %1710 = vmatpush.bf16.msra.mxu0 %v1130
  %1711 = vmatpush.bf16.msra.mxu0 %v1122
  %1712 = vmatpush.bf16.msra.mxu0 %v1114
  %1713 = vmatpush.bf16.msra.mxu0 %v1106
  %1714 = vmatmul.bf16.gmra.mxu0 %v1696
  %v1715 = vpop.f32.mrf.mxu0
  %v1716 = vadd.f32 %v1698, %v1715
  %v1717 = vpop.f32.mrf.mxu0
  %1718 = vdwg.mxu0
  %1719 = vmatpush.bf16.msra.mxu0 %v1226
  %1720 = vmatpush.bf16.msra.mxu0 %v1218
  %1721 = vmatpush.bf16.msra.mxu0 %v1210
  %1722 = vmatpush.bf16.msra.mxu0 %v1202
  %1723 = vmatpush.bf16.msra.mxu0 %v1194
  %1724 = vmatpush.bf16.msra.mxu0 %v1186
  %1725 = vmatpush.bf16.msra.mxu0 %v1178
  %1726 = vmatpush.bf16.msra.mxu0 %v1170
  %1727 = vmatmul.bf16.gmra.mxu0 %v1697
  %v1728 = vpop.f32.mrf.mxu0
  %v1729 = vadd.f32 %v1716, %v1728
  %v1730 = vpop.f32.mrf.mxu0
  %1731 = vdwg.mxu0
  %1732 = vmatpush.bf16.msra.mxu0 %v1163
  %1733 = vmatpush.bf16.msra.mxu0 %v1155
  %1734 = vmatpush.bf16.msra.mxu0 %v1147
  %1735 = vmatpush.bf16.msra.mxu0 %v1139
  %1736 = vmatpush.bf16.msra.mxu0 %v1131
  %1737 = vmatpush.bf16.msra.mxu0 %v1123
  %1738 = vmatpush.bf16.msra.mxu0 %v1115
  %1739 = vmatpush.bf16.msra.mxu0 %v1107
  %1740 = vmatmul.bf16.gmra.mxu0 %v1696
  %v1741 = vpop.f32.mrf.mxu0
  %v1742 = vadd.f32 %v1699, %v1741
  %v1743 = vpop.f32.mrf.mxu0
  %1744 = vdwg.mxu0
  %1745 = vmatpush.bf16.msra.mxu0 %v1227
  %1746 = vmatpush.bf16.msra.mxu0 %v1219
  %1747 = vmatpush.bf16.msra.mxu0 %v1211
  %1748 = vmatpush.bf16.msra.mxu0 %v1203
  %1749 = vmatpush.bf16.msra.mxu0 %v1195
  %1750 = vmatpush.bf16.msra.mxu0 %v1187
  %1751 = vmatpush.bf16.msra.mxu0 %v1179
  %1752 = vmatpush.bf16.msra.mxu0 %v1171
  %1753 = vmatmul.bf16.gmra.mxu0 %v1697
  %v1754 = vpop.f32.mrf.mxu0
  %v1755 = vadd.f32 %v1742, %v1754
  %v1756 = vpop.f32.mrf.mxu0
  %1757 = vdwg.mxu0
  %1758 = vmatpush.bf16.msra.mxu0 %v1164
  %1759 = vmatpush.bf16.msra.mxu0 %v1156
  %1760 = vmatpush.bf16.msra.mxu0 %v1148
  %1761 = vmatpush.bf16.msra.mxu0 %v1140
  %1762 = vmatpush.bf16.msra.mxu0 %v1132
  %1763 = vmatpush.bf16.msra.mxu0 %v1124
  %1764 = vmatpush.bf16.msra.mxu0 %v1116
  %1765 = vmatpush.bf16.msra.mxu0 %v1108
  %1766 = vmatmul.bf16.gmra.mxu0 %v1696
  %v1767 = vpop.f32.mrf.mxu0
  %v1768 = vadd.f32 %v1700, %v1767
  %v1769 = vpop.f32.mrf.mxu0
  %1770 = vdwg.mxu0
  %1771 = vmatpush.bf16.msra.mxu0 %v1228
  %1772 = vmatpush.bf16.msra.mxu0 %v1220
  %1773 = vmatpush.bf16.msra.mxu0 %v1212
  %1774 = vmatpush.bf16.msra.mxu0 %v1204
  %1775 = vmatpush.bf16.msra.mxu0 %v1196
  %1776 = vmatpush.bf16.msra.mxu0 %v1188
  %1777 = vmatpush.bf16.msra.mxu0 %v1180
  %1778 = vmatpush.bf16.msra.mxu0 %v1172
  %1779 = vmatmul.bf16.gmra.mxu0 %v1697
  %v1780 = vpop.f32.mrf.mxu0
  %v1781 = vadd.f32 %v1768, %v1780
  %v1782 = vpop.f32.mrf.mxu0
  %1783 = vdwg.mxu0
  %1784 = vmatpush.bf16.msra.mxu0 %v1165
  %1785 = vmatpush.bf16.msra.mxu0 %v1157
  %1786 = vmatpush.bf16.msra.mxu0 %v1149
  %1787 = vmatpush.bf16.msra.mxu0 %v1141
  %1788 = vmatpush.bf16.msra.mxu0 %v1133
  %1789 = vmatpush.bf16.msra.mxu0 %v1125
  %1790 = vmatpush.bf16.msra.mxu0 %v1117
  %1791 = vmatpush.bf16.msra.mxu0 %v1109
  %1792 = vmatmul.bf16.gmra.mxu0 %v1696
  %v1793 = vpop.f32.mrf.mxu0
  %v1794 = vadd.f32 %v1701, %v1793
  %v1795 = vpop.f32.mrf.mxu0
  %1796 = vdwg.mxu0
  %1797 = vmatpush.bf16.msra.mxu0 %v1229
  %1798 = vmatpush.bf16.msra.mxu0 %v1221
  %1799 = vmatpush.bf16.msra.mxu0 %v1213
  %1800 = vmatpush.bf16.msra.mxu0 %v1205
  %1801 = vmatpush.bf16.msra.mxu0 %v1197
  %1802 = vmatpush.bf16.msra.mxu0 %v1189
  %1803 = vmatpush.bf16.msra.mxu0 %v1181
  %1804 = vmatpush.bf16.msra.mxu0 %v1173
  %1805 = vmatmul.bf16.gmra.mxu0 %v1697
  %v1806 = vpop.f32.mrf.mxu0
  %v1807 = vadd.f32 %v1794, %v1806
  %v1808 = vpop.f32.mrf.mxu0
  %1809 = vdwg.mxu0
  %1810 = vmatpush.bf16.msra.mxu0 %v1166
  %1811 = vmatpush.bf16.msra.mxu0 %v1158
  %1812 = vmatpush.bf16.msra.mxu0 %v1150
  %1813 = vmatpush.bf16.msra.mxu0 %v1142
  %1814 = vmatpush.bf16.msra.mxu0 %v1134
  %1815 = vmatpush.bf16.msra.mxu0 %v1126
  %1816 = vmatpush.bf16.msra.mxu0 %v1118
  %1817 = vmatpush.bf16.msra.mxu0 %v1110
  %1818 = vmatmul.bf16.gmra.mxu0 %v1696
  %v1819 = vpop.f32.mrf.mxu0
  %v1820 = vadd.f32 %v1702, %v1819
  %v1821 = vpop.f32.mrf.mxu0
  %1822 = vdwg.mxu0
  %1823 = vmatpush.bf16.msra.mxu0 %v1230
  %1824 = vmatpush.bf16.msra.mxu0 %v1222
  %1825 = vmatpush.bf16.msra.mxu0 %v1214
  %1826 = vmatpush.bf16.msra.mxu0 %v1206
  %1827 = vmatpush.bf16.msra.mxu0 %v1198
  %1828 = vmatpush.bf16.msra.mxu0 %v1190
  %1829 = vmatpush.bf16.msra.mxu0 %v1182
  %1830 = vmatpush.bf16.msra.mxu0 %v1174
  %1831 = vmatmul.bf16.gmra.mxu0 %v1697
  %v1832 = vpop.f32.mrf.mxu0
  %v1833 = vadd.f32 %v1820, %v1832
  %v1834 = vpop.f32.mrf.mxu0
  %1835 = vdwg.mxu0
  %1836 = vmatpush.bf16.msra.mxu0 %v1167
  %1837 = vmatpush.bf16.msra.mxu0 %v1159
  %1838 = vmatpush.bf16.msra.mxu0 %v1151
  %1839 = vmatpush.bf16.msra.mxu0 %v1143
  %1840 = vmatpush.bf16.msra.mxu0 %v1135
  %1841 = vmatpush.bf16.msra.mxu0 %v1127
  %1842 = vmatpush.bf16.msra.mxu0 %v1119
  %1843 = vmatpush.bf16.msra.mxu0 %v1111
  %1844 = vmatmul.bf16.gmra.mxu0 %v1696
  %v1845 = vpop.f32.mrf.mxu0
  %v1846 = vadd.f32 %v1703, %v1845
  %v1847 = vpop.f32.mrf.mxu0
  %1848 = vdwg.mxu0
  %1849 = vmatpush.bf16.msra.mxu0 %v1231
  %1850 = vmatpush.bf16.msra.mxu0 %v1223
  %1851 = vmatpush.bf16.msra.mxu0 %v1215
  %1852 = vmatpush.bf16.msra.mxu0 %v1207
  %1853 = vmatpush.bf16.msra.mxu0 %v1199
  %1854 = vmatpush.bf16.msra.mxu0 %v1191
  %1855 = vmatpush.bf16.msra.mxu0 %v1183
  %1856 = vmatpush.bf16.msra.mxu0 %v1175
  %1857 = vmatmul.bf16.gmra.mxu0 %v1697
  %v1858 = vpop.f32.mrf.mxu0
  %v1859 = vadd.f32 %v1846, %v1858
  %v1860 = vpop.f32.mrf.mxu0
  %1861 = vdwg.mxu0
  %1862 = vmatpush.bf16.msra.mxu0 %v1168
  %1863 = vmatpush.bf16.msra.mxu0 %v1160
  %1864 = vmatpush.bf16.msra.mxu0 %v1152
  %1865 = vmatpush.bf16.msra.mxu0 %v1144
  %1866 = vmatpush.bf16.msra.mxu0 %v1136
  %1867 = vmatpush.bf16.msra.mxu0 %v1128
  %1868 = vmatpush.bf16.msra.mxu0 %v1120
  %1869 = vmatpush.bf16.msra.mxu0 %v1112
  %1870 = vmatmul.bf16.gmra.mxu0 %v1696
  %v1871 = vpop.f32.mrf.mxu0
  %v1872 = vadd.f32 %v1704, %v1871
  %v1873 = vpop.f32.mrf.mxu0
  %1874 = vdwg.mxu0
  %1875 = vmatpush.bf16.msra.mxu0 %v1232
  %1876 = vmatpush.bf16.msra.mxu0 %v1224
  %1877 = vmatpush.bf16.msra.mxu0 %v1216
  %1878 = vmatpush.bf16.msra.mxu0 %v1208
  %1879 = vmatpush.bf16.msra.mxu0 %v1200
  %1880 = vmatpush.bf16.msra.mxu0 %v1192
  %1881 = vmatpush.bf16.msra.mxu0 %v1184
  %1882 = vmatpush.bf16.msra.mxu0 %v1176
  %1883 = vmatmul.bf16.gmra.mxu0 %v1697
  %v1884 = vpop.f32.mrf.mxu0
  %v1885 = vadd.f32 %v1872, %v1884
  %v1886 = vpop.f32.mrf.mxu0
  %1887 = vdwg.mxu0
  %1888 = vmatpush.bf16.msra.mxu0 %v1169
  %1889 = vmatpush.bf16.msra.mxu0 %v1161
  %1890 = vmatpush.bf16.msra.mxu0 %v1153
  %1891 = vmatpush.bf16.msra.mxu0 %v1145
  %1892 = vmatpush.bf16.msra.mxu0 %v1137
  %1893 = vmatpush.bf16.msra.mxu0 %v1129
  %1894 = vmatpush.bf16.msra.mxu0 %v1121
  %1895 = vmatpush.bf16.msra.mxu0 %v1113
  %1896 = vmatmul.bf16.gmra.mxu0 %v1696
  %v1897 = vpop.f32.mrf.mxu0
  %v1898 = vadd.f32 %v1705, %v1897
  %v1899 = vpop.f32.mrf.mxu0
  %1900 = vdwg.mxu0
  %1901 = vmatpush.bf16.msra.mxu0 %v1233
  %1902 = vmatpush.bf16.msra.mxu0 %v1225
  %1903 = vmatpush.bf16.msra.mxu0 %v1217
  %1904 = vmatpush.bf16.msra.mxu0 %v1209
  %1905 = vmatpush.bf16.msra.mxu0 %v1201
  %1906 = vmatpush.bf16.msra.mxu0 %v1193
  %1907 = vmatpush.bf16.msra.mxu0 %v1185
  %1908 = vmatpush.bf16.msra.mxu0 %v1177
  %1909 = vmatmul.bf16.gmra.mxu0 %v1697
  %v1910 = vpop.f32.mrf.mxu0
  %v1911 = vadd.f32 %v1898, %v1910
  %v1912 = vpop.f32.mrf.mxu0
  %1913 = vdwg.mxu0
  %v1914 = vxor.u32 %v1729, 2147483648
  %v1915 = vxor.u32 %v1755, 2147483648
  %v1916 = vxor.u32 %v1781, 2147483648
  %v1917 = vxor.u32 %v1807, 2147483648
  %v1918 = vxor.u32 %v1833, 2147483648
  %v1919 = vxor.u32 %v1859, 2147483648
  %v1920 = vmul.f32 %v1914, 1.442695
  %v1921 = vpow.pop %v1920
  %v1922 = vmul.f32 %v1915, 1.442695
  %v1923 = vpow.pop %v1922
  %v1924 = vmul.f32 %v1916, 1.442695
  %v1925 = vpow.pop %v1924
  %v1926 = vmul.f32 %v1917, 1.442695
  %v1927 = vpow.pop %v1926
  %v1928 = vmul.f32 %v1918, 1.442695
  %v1929 = vpow.pop %v1928
  %v1930 = vmul.f32 %v1919, 1.442695
  %v1931 = vpow.pop %v1930
  %v1932 = vadd.f32 %v1921, 1.0
  %v1933 = vadd.f32 %v1923, 1.0
  %v1934 = vadd.f32 %v1925, 1.0
  %v1935 = vadd.f32 %v1927, 1.0
  %v1936 = vadd.f32 %v1929, 1.0
  %v1937 = vadd.f32 %v1931, 1.0
  %v1938 = vrcp.pop %v1932
  %v1939 = vmul.f32 %v1932, %v1938
  %v1940 = vsub.f32 1.0, %v1939
  %v1941 = vmul.f32 %v1938, %v1940
  %v1942 = vadd.f32 %v1938, %v1941
  %vm1943 = vweird.f32 %v1932
  %vm1944 = vweird.f32 %v1938
  %vm1945 = vmor %vm1943, %vm1944
  %v1946 = vsel %vm1945, %v1938, %v1942
  %v1947 = vand.u32 2147483647, %v1932
  %vm1948 = vcmp.eq.f32.partialorder %v1947, 8.507059e+37
  %v1949 = vand.u32 %v1932, 2147483648
  %v1950 = vor.u32 1.1754944e-38, %v1949
  %v1951 = vsel %vm1948, %v1950, %v1946
  %v1952 = vmul.f32 1.0, %v1951
  %v1953 = vrcp.pop %v1933
  %v1954 = vmul.f32 %v1933, %v1953
  %v1955 = vsub.f32 1.0, %v1954
  %v1956 = vmul.f32 %v1953, %v1955
  %v1957 = vadd.f32 %v1953, %v1956
  %vm1958 = vweird.f32 %v1933
  %vm1959 = vweird.f32 %v1953
  %vm1960 = vmor %vm1958, %vm1959
  %v1961 = vsel %vm1960, %v1953, %v1957
  %v1962 = vand.u32 2147483647, %v1933
  %vm1963 = vcmp.eq.f32.partialorder %v1962, 8.507059e+37
  %v1964 = vand.u32 %v1933, 2147483648
  %v1965 = vor.u32 1.1754944e-38, %v1964
  %v1966 = vsel %vm1963, %v1965, %v1961
  %v1967 = vmul.f32 1.0, %v1966
  %v1968 = vrcp.pop %v1934
  %v1969 = vmul.f32 %v1934, %v1968
  %v1970 = vsub.f32 1.0, %v1969
  %v1971 = vmul.f32 %v1968, %v1970
  %v1972 = vadd.f32 %v1968, %v1971
  %vm1973 = vweird.f32 %v1934
  %vm1974 = vweird.f32 %v1968
  %vm1975 = vmor %vm1973, %vm1974
  %v1976 = vsel %vm1975, %v1968, %v1972
  %v1977 = vand.u32 2147483647, %v1934
  %vm1978 = vcmp.eq.f32.partialorder %v1977, 8.507059e+37
  %v1979 = vand.u32 %v1934, 2147483648
  %v1980 = vor.u32 1.1754944e-38, %v1979
  %v1981 = vsel %vm1978, %v1980, %v1976
  %v1982 = vmul.f32 1.0, %v1981
  %v1983 = vrcp.pop %v1935
  %v1984 = vmul.f32 %v1935, %v1983
  %v1985 = vsub.f32 1.0, %v1984
  %v1986 = vmul.f32 %v1983, %v1985
  %v1987 = vadd.f32 %v1983, %v1986
  %vm1988 = vweird.f32 %v1935
  %vm1989 = vweird.f32 %v1983
  %vm1990 = vmor %vm1988, %vm1989
  %v1991 = vsel %vm1990, %v1983, %v1987
  %v1992 = vand.u32 2147483647, %v1935
  %vm1993 = vcmp.eq.f32.partialorder %v1992, 8.507059e+37
  %v1994 = vand.u32 %v1935, 2147483648
  %v1995 = vor.u32 1.1754944e-38, %v1994
  %v1996 = vsel %vm1993, %v1995, %v1991
  %v1997 = vmul.f32 1.0, %v1996
  %v1998 = vrcp.pop %v1936
  %v1999 = vmul.f32 %v1936, %v1998
  %v2000 = vsub.f32 1.0, %v1999
  %v2001 = vmul.f32 %v1998, %v2000
  %v2002 = vadd.f32 %v1998, %v2001
  %vm2003 = vweird.f32 %v1936
  %vm2004 = vweird.f32 %v1998
  %vm2005 = vmor %vm2003, %vm2004
  %v2006 = vsel %vm2005, %v1998, %v2002
  %v2007 = vand.u32 2147483647, %v1936
  %vm2008 = vcmp.eq.f32.partialorder %v2007, 8.507059e+37
  %v2009 = vand.u32 %v1936, 2147483648
  %v2010 = vor.u32 1.1754944e-38, %v2009
  %v2011 = vsel %vm2008, %v2010, %v2006
  %v2012 = vmul.f32 1.0, %v2011
  %v2013 = vrcp.pop %v1937
  %v2014 = vmul.f32 %v1937, %v2013
  %v2015 = vsub.f32 1.0, %v2014
  %v2016 = vmul.f32 %v2013, %v2015
  %v2017 = vadd.f32 %v2013, %v2016
  %vm2018 = vweird.f32 %v1937
  %vm2019 = vweird.f32 %v2013
  %vm2020 = vmor %vm2018, %vm2019
  %v2021 = vsel %vm2020, %v2013, %v2017
  %v2022 = vand.u32 2147483647, %v1937
  %vm2023 = vcmp.eq.f32.partialorder %v2022, 8.507059e+37
  %v2024 = vand.u32 %v1937, 2147483648
  %v2025 = vor.u32 1.1754944e-38, %v2024
  %v2026 = vsel %vm2023, %v2025, %v2021
  %v2027 = vmul.f32 1.0, %v2026
  %v2028 = vtanh.pop %v1885
  %v2029 = vtanh.pop %v1911
  %v2030 = vmul.f32 %v1982, %v1690
  %v2031 = vmul.f32 %v1997, %v1691
  %v2032 = vmul.f32 %v1952, %v2028
  %v2033 = vmul.f32 %v1967, %v2029
  %v2034 = vadd.f32 %v2030, %v2032
  %v2035 = vadd.f32 %v2031, %v2033
  %v2036 = vtanh.pop %v2034
  %v2037 = vtanh.pop %v2035
  %v2038 = vmul.f32 %v2012, %v2036
  %v2039 = vmul.f32 %v2027, %v2037
  %v2040 = vpack.c.bf16 %v2038, %v2038
  %v2041 = vpack.c.bf16 %v2039, %v2039
  %v2042 = vld [vmem:[#allocation2 + $0xc0] sm:$0xff]
  %v2043 = vld [vmem:[#allocation2 + $0xc8] sm:$0xff]
  %v2044 = vld [vmem:[#allocation2 + $0xd0] sm:$0xff]
  %v2045 = vld [vmem:[#allocation2 + $0xd8] sm:$0xff]
  %v2046 = vld [vmem:[#allocation2 + $0xe0] sm:$0xff]
  %v2047 = vld [vmem:[#allocation2 + $0xe8] sm:$0xff]
  %v2048 = vld [vmem:[#allocation2 + $0xf0] sm:$0xff]
  %v2049 = vld [vmem:[#allocation2 + $0xf8] sm:$0xff]
  %2050 = vmatpush.bf16.msra.mxu0 %v1162
  %2051 = vmatpush.bf16.msra.mxu0 %v1154
  %2052 = vmatpush.bf16.msra.mxu0 %v1146
  %2053 = vmatpush.bf16.msra.mxu0 %v1138
  %2054 = vmatpush.bf16.msra.mxu0 %v1130
  %2055 = vmatpush.bf16.msra.mxu0 %v1122
  %2056 = vmatpush.bf16.msra.mxu0 %v1114
  %2057 = vmatpush.bf16.msra.mxu0 %v1106
  %2058 = vmatmul.bf16.gmra.mxu0 %v2040
  %v2059 = vpop.f32.mrf.mxu0
  %v2060 = vadd.f32 %v2042, %v2059
  %v2061 = vpop.f32.mrf.mxu0
  %2062 = vdwg.mxu0
  %2063 = vmatpush.bf16.msra.mxu0 %v1226
  %2064 = vmatpush.bf16.msra.mxu0 %v1218
  %2065 = vmatpush.bf16.msra.mxu0 %v1210
  %2066 = vmatpush.bf16.msra.mxu0 %v1202
  %2067 = vmatpush.bf16.msra.mxu0 %v1194
  %2068 = vmatpush.bf16.msra.mxu0 %v1186
  %2069 = vmatpush.bf16.msra.mxu0 %v1178
  %2070 = vmatpush.bf16.msra.mxu0 %v1170
  %2071 = vmatmul.bf16.gmra.mxu0 %v2041
  %v2072 = vpop.f32.mrf.mxu0
  %v2073 = vadd.f32 %v2060, %v2072
  %v2074 = vpop.f32.mrf.mxu0
  %2075 = vdwg.mxu0
  %2076 = vmatpush.bf16.msra.mxu0 %v1163
  %2077 = vmatpush.bf16.msra.mxu0 %v1155
  %2078 = vmatpush.bf16.msra.mxu0 %v1147
  %2079 = vmatpush.bf16.msra.mxu0 %v1139
  %2080 = vmatpush.bf16.msra.mxu0 %v1131
  %2081 = vmatpush.bf16.msra.mxu0 %v1123
  %2082 = vmatpush.bf16.msra.mxu0 %v1115
  %2083 = vmatpush.bf16.msra.mxu0 %v1107
  %2084 = vmatmul.bf16.gmra.mxu0 %v2040
  %v2085 = vpop.f32.mrf.mxu0
  %v2086 = vadd.f32 %v2043, %v2085
  %v2087 = vpop.f32.mrf.mxu0
  %2088 = vdwg.mxu0
  %2089 = vmatpush.bf16.msra.mxu0 %v1227
  %2090 = vmatpush.bf16.msra.mxu0 %v1219
  %2091 = vmatpush.bf16.msra.mxu0 %v1211
  %2092 = vmatpush.bf16.msra.mxu0 %v1203
  %2093 = vmatpush.bf16.msra.mxu0 %v1195
  %2094 = vmatpush.bf16.msra.mxu0 %v1187
  %2095 = vmatpush.bf16.msra.mxu0 %v1179
  %2096 = vmatpush.bf16.msra.mxu0 %v1171
  %2097 = vmatmul.bf16.gmra.mxu0 %v2041
  %v2098 = vpop.f32.mrf.mxu0
  %v2099 = vadd.f32 %v2086, %v2098
  %v2100 = vpop.f32.mrf.mxu0
  %2101 = vdwg.mxu0
  %2102 = vmatpush.bf16.msra.mxu0 %v1164
  %2103 = vmatpush.bf16.msra.mxu0 %v1156
  %2104 = vmatpush.bf16.msra.mxu0 %v1148
  %2105 = vmatpush.bf16.msra.mxu0 %v1140
  %2106 = vmatpush.bf16.msra.mxu0 %v1132
  %2107 = vmatpush.bf16.msra.mxu0 %v1124
  %2108 = vmatpush.bf16.msra.mxu0 %v1116
  %2109 = vmatpush.bf16.msra.mxu0 %v1108
  %2110 = vmatmul.bf16.gmra.mxu0 %v2040
  %v2111 = vpop.f32.mrf.mxu0
  %v2112 = vadd.f32 %v2044, %v2111
  %v2113 = vpop.f32.mrf.mxu0
  %2114 = vdwg.mxu0
  %2115 = vmatpush.bf16.msra.mxu0 %v1228
  %2116 = vmatpush.bf16.msra.mxu0 %v1220
  %2117 = vmatpush.bf16.msra.mxu0 %v1212
  %2118 = vmatpush.bf16.msra.mxu0 %v1204
  %2119 = vmatpush.bf16.msra.mxu0 %v1196
  %2120 = vmatpush.bf16.msra.mxu0 %v1188
  %2121 = vmatpush.bf16.msra.mxu0 %v1180
  %2122 = vmatpush.bf16.msra.mxu0 %v1172
  %2123 = vmatmul.bf16.gmra.mxu0 %v2041
  %v2124 = vpop.f32.mrf.mxu0
  %v2125 = vadd.f32 %v2112, %v2124
  %v2126 = vpop.f32.mrf.mxu0
  %2127 = vdwg.mxu0
  %2128 = vmatpush.bf16.msra.mxu0 %v1165
  %2129 = vmatpush.bf16.msra.mxu0 %v1157
  %2130 = vmatpush.bf16.msra.mxu0 %v1149
  %2131 = vmatpush.bf16.msra.mxu0 %v1141
  %2132 = vmatpush.bf16.msra.mxu0 %v1133
  %2133 = vmatpush.bf16.msra.mxu0 %v1125
  %2134 = vmatpush.bf16.msra.mxu0 %v1117
  %2135 = vmatpush.bf16.msra.mxu0 %v1109
  %2136 = vmatmul.bf16.gmra.mxu0 %v2040
  %v2137 = vpop.f32.mrf.mxu0
  %v2138 = vadd.f32 %v2045, %v2137
  %v2139 = vpop.f32.mrf.mxu0
  %2140 = vdwg.mxu0
  %2141 = vmatpush.bf16.msra.mxu0 %v1229
  %2142 = vmatpush.bf16.msra.mxu0 %v1221
  %2143 = vmatpush.bf16.msra.mxu0 %v1213
  %2144 = vmatpush.bf16.msra.mxu0 %v1205
  %2145 = vmatpush.bf16.msra.mxu0 %v1197
  %2146 = vmatpush.bf16.msra.mxu0 %v1189
  %2147 = vmatpush.bf16.msra.mxu0 %v1181
  %2148 = vmatpush.bf16.msra.mxu0 %v1173
  %2149 = vmatmul.bf16.gmra.mxu0 %v2041
  %v2150 = vpop.f32.mrf.mxu0
  %v2151 = vadd.f32 %v2138, %v2150
  %v2152 = vpop.f32.mrf.mxu0
  %2153 = vdwg.mxu0
  %2154 = vmatpush.bf16.msra.mxu0 %v1166
  %2155 = vmatpush.bf16.msra.mxu0 %v1158
  %2156 = vmatpush.bf16.msra.mxu0 %v1150
  %2157 = vmatpush.bf16.msra.mxu0 %v1142
  %2158 = vmatpush.bf16.msra.mxu0 %v1134
  %2159 = vmatpush.bf16.msra.mxu0 %v1126
  %2160 = vmatpush.bf16.msra.mxu0 %v1118
  %2161 = vmatpush.bf16.msra.mxu0 %v1110
  %2162 = vmatmul.bf16.gmra.mxu0 %v2040
  %v2163 = vpop.f32.mrf.mxu0
  %v2164 = vadd.f32 %v2046, %v2163
  %v2165 = vpop.f32.mrf.mxu0
  %2166 = vdwg.mxu0
  %2167 = vmatpush.bf16.msra.mxu0 %v1230
  %2168 = vmatpush.bf16.msra.mxu0 %v1222
  %2169 = vmatpush.bf16.msra.mxu0 %v1214
  %2170 = vmatpush.bf16.msra.mxu0 %v1206
  %2171 = vmatpush.bf16.msra.mxu0 %v1198
  %2172 = vmatpush.bf16.msra.mxu0 %v1190
  %2173 = vmatpush.bf16.msra.mxu0 %v1182
  %2174 = vmatpush.bf16.msra.mxu0 %v1174
  %2175 = vmatmul.bf16.gmra.mxu0 %v2041
  %v2176 = vpop.f32.mrf.mxu0
  %v2177 = vadd.f32 %v2164, %v2176
  %v2178 = vpop.f32.mrf.mxu0
  %2179 = vdwg.mxu0
  %2180 = vmatpush.bf16.msra.mxu0 %v1167
  %2181 = vmatpush.bf16.msra.mxu0 %v1159
  %2182 = vmatpush.bf16.msra.mxu0 %v1151
  %2183 = vmatpush.bf16.msra.mxu0 %v1143
  %2184 = vmatpush.bf16.msra.mxu0 %v1135
  %2185 = vmatpush.bf16.msra.mxu0 %v1127
  %2186 = vmatpush.bf16.msra.mxu0 %v1119
  %2187 = vmatpush.bf16.msra.mxu0 %v1111
  %2188 = vmatmul.bf16.gmra.mxu0 %v2040
  %v2189 = vpop.f32.mrf.mxu0
  %v2190 = vadd.f32 %v2047, %v2189
  %v2191 = vpop.f32.mrf.mxu0
  %2192 = vdwg.mxu0
  %2193 = vmatpush.bf16.msra.mxu0 %v1231
  %2194 = vmatpush.bf16.msra.mxu0 %v1223
  %2195 = vmatpush.bf16.msra.mxu0 %v1215
  %2196 = vmatpush.bf16.msra.mxu0 %v1207
  %2197 = vmatpush.bf16.msra.mxu0 %v1199
  %2198 = vmatpush.bf16.msra.mxu0 %v1191
  %2199 = vmatpush.bf16.msra.mxu0 %v1183
  %2200 = vmatpush.bf16.msra.mxu0 %v1175
  %2201 = vmatmul.bf16.gmra.mxu0 %v2041
  %v2202 = vpop.f32.mrf.mxu0
  %v2203 = vadd.f32 %v2190, %v2202
  %v2204 = vpop.f32.mrf.mxu0
  %2205 = vdwg.mxu0
  %2206 = vmatpush.bf16.msra.mxu0 %v1168
  %2207 = vmatpush.bf16.msra.mxu0 %v1160
  %2208 = vmatpush.bf16.msra.mxu0 %v1152
  %2209 = vmatpush.bf16.msra.mxu0 %v1144
  %2210 = vmatpush.bf16.msra.mxu0 %v1136
  %2211 = vmatpush.bf16.msra.mxu0 %v1128
  %2212 = vmatpush.bf16.msra.mxu0 %v1120
  %2213 = vmatpush.bf16.msra.mxu0 %v1112
  %2214 = vmatmul.bf16.gmra.mxu0 %v2040
  %v2215 = vpop.f32.mrf.mxu0
  %v2216 = vadd.f32 %v2048, %v2215
  %v2217 = vpop.f32.mrf.mxu0
  %2218 = vdwg.mxu0
  %2219 = vmatpush.bf16.msra.mxu0 %v1232
  %2220 = vmatpush.bf16.msra.mxu0 %v1224
  %2221 = vmatpush.bf16.msra.mxu0 %v1216
  %2222 = vmatpush.bf16.msra.mxu0 %v1208
  %2223 = vmatpush.bf16.msra.mxu0 %v1200
  %2224 = vmatpush.bf16.msra.mxu0 %v1192
  %2225 = vmatpush.bf16.msra.mxu0 %v1184
  %2226 = vmatpush.bf16.msra.mxu0 %v1176
  %2227 = vmatmul.bf16.gmra.mxu0 %v2041
  %v2228 = vpop.f32.mrf.mxu0
  %v2229 = vadd.f32 %v2216, %v2228
  %v2230 = vpop.f32.mrf.mxu0
  %2231 = vdwg.mxu0
  %2232 = vmatpush.bf16.msra.mxu0 %v1169
  %2233 = vmatpush.bf16.msra.mxu0 %v1161
  %2234 = vmatpush.bf16.msra.mxu0 %v1153
  %2235 = vmatpush.bf16.msra.mxu0 %v1145
  %2236 = vmatpush.bf16.msra.mxu0 %v1137
  %2237 = vmatpush.bf16.msra.mxu0 %v1129
  %2238 = vmatpush.bf16.msra.mxu0 %v1121
  %2239 = vmatpush.bf16.msra.mxu0 %v1113
  %2240 = vmatmul.bf16.gmra.mxu0 %v2040
  %v2241 = vpop.f32.mrf.mxu0
  %v2242 = vadd.f32 %v2049, %v2241
  %v2243 = vpop.f32.mrf.mxu0
  %2244 = vdwg.mxu0
  %2245 = vmatpush.bf16.msra.mxu0 %v1233
  %2246 = vmatpush.bf16.msra.mxu0 %v1225
  %2247 = vmatpush.bf16.msra.mxu0 %v1217
  %2248 = vmatpush.bf16.msra.mxu0 %v1209
  %2249 = vmatpush.bf16.msra.mxu0 %v1201
  %2250 = vmatpush.bf16.msra.mxu0 %v1193
  %2251 = vmatpush.bf16.msra.mxu0 %v1185
  %2252 = vmatpush.bf16.msra.mxu0 %v1177
  %2253 = vmatmul.bf16.gmra.mxu0 %v2041
  %v2254 = vpop.f32.mrf.mxu0
  %v2255 = vadd.f32 %v2242, %v2254
  %v2256 = vpop.f32.mrf.mxu0
  %2257 = vdwg.mxu0
  %v2258 = vxor.u32 %v2073, 2147483648
  %v2259 = vxor.u32 %v2099, 2147483648
  %v2260 = vxor.u32 %v2125, 2147483648
  %v2261 = vxor.u32 %v2151, 2147483648
  %v2262 = vxor.u32 %v2177, 2147483648
  %v2263 = vxor.u32 %v2203, 2147483648
  %v2264 = vmul.f32 %v2258, 1.442695
  %v2265 = vpow.pop %v2264
  %v2266 = vmul.f32 %v2259, 1.442695
  %v2267 = vpow.pop %v2266
  %v2268 = vmul.f32 %v2260, 1.442695
  %v2269 = vpow.pop %v2268
  %v2270 = vmul.f32 %v2261, 1.442695
  %v2271 = vpow.pop %v2270
  %v2272 = vmul.f32 %v2262, 1.442695
  %v2273 = vpow.pop %v2272
  %v2274 = vmul.f32 %v2263, 1.442695
  %v2275 = vpow.pop %v2274
  %v2276 = vadd.f32 %v2265, 1.0
  %v2277 = vadd.f32 %v2267, 1.0
  %v2278 = vadd.f32 %v2269, 1.0
  %v2279 = vadd.f32 %v2271, 1.0
  %v2280 = vadd.f32 %v2273, 1.0
  %v2281 = vadd.f32 %v2275, 1.0
  %v2282 = vrcp.pop %v2276
  %v2283 = vmul.f32 %v2276, %v2282
  %v2284 = vsub.f32 1.0, %v2283
  %v2285 = vmul.f32 %v2282, %v2284
  %v2286 = vadd.f32 %v2282, %v2285
  %vm2287 = vweird.f32 %v2276
  %vm2288 = vweird.f32 %v2282
  %vm2289 = vmor %vm2287, %vm2288
  %v2290 = vsel %vm2289, %v2282, %v2286
  %v2291 = vand.u32 2147483647, %v2276
  %vm2292 = vcmp.eq.f32.partialorder %v2291, 8.507059e+37
  %v2293 = vand.u32 %v2276, 2147483648
  %v2294 = vor.u32 1.1754944e-38, %v2293
  %v2295 = vsel %vm2292, %v2294, %v2290
  %v2296 = vmul.f32 1.0, %v2295
  %v2297 = vrcp.pop %v2277
  %v2298 = vmul.f32 %v2277, %v2297
  %v2299 = vsub.f32 1.0, %v2298
  %v2300 = vmul.f32 %v2297, %v2299
  %v2301 = vadd.f32 %v2297, %v2300
  %vm2302 = vweird.f32 %v2277
  %vm2303 = vweird.f32 %v2297
  %vm2304 = vmor %vm2302, %vm2303
  %v2305 = vsel %vm2304, %v2297, %v2301
  %v2306 = vand.u32 2147483647, %v2277
  %vm2307 = vcmp.eq.f32.partialorder %v2306, 8.507059e+37
  %v2308 = vand.u32 %v2277, 2147483648
  %v2309 = vor.u32 1.1754944e-38, %v2308
  %v2310 = vsel %vm2307, %v2309, %v2305
  %v2311 = vmul.f32 1.0, %v2310
  %v2312 = vrcp.pop %v2278
  %v2313 = vmul.f32 %v2278, %v2312
  %v2314 = vsub.f32 1.0, %v2313
  %v2315 = vmul.f32 %v2312, %v2314
  %v2316 = vadd.f32 %v2312, %v2315
  %vm2317 = vweird.f32 %v2278
  %vm2318 = vweird.f32 %v2312
  %vm2319 = vmor %vm2317, %vm2318
  %v2320 = vsel %vm2319, %v2312, %v2316
  %v2321 = vand.u32 2147483647, %v2278
  %vm2322 = vcmp.eq.f32.partialorder %v2321, 8.507059e+37
  %v2323 = vand.u32 %v2278, 2147483648
  %v2324 = vor.u32 1.1754944e-38, %v2323
  %v2325 = vsel %vm2322, %v2324, %v2320
  %v2326 = vmul.f32 1.0, %v2325
  %v2327 = vrcp.pop %v2279
  %v2328 = vmul.f32 %v2279, %v2327
  %v2329 = vsub.f32 1.0, %v2328
  %v2330 = vmul.f32 %v2327, %v2329
  %v2331 = vadd.f32 %v2327, %v2330
  %vm2332 = vweird.f32 %v2279
  %vm2333 = vweird.f32 %v2327
  %vm2334 = vmor %vm2332, %vm2333
  %v2335 = vsel %vm2334, %v2327, %v2331
  %v2336 = vand.u32 2147483647, %v2279
  %vm2337 = vcmp.eq.f32.partialorder %v2336, 8.507059e+37
  %v2338 = vand.u32 %v2279, 2147483648
  %v2339 = vor.u32 1.1754944e-38, %v2338
  %v2340 = vsel %vm2337, %v2339, %v2335
  %v2341 = vmul.f32 1.0, %v2340
  %v2342 = vrcp.pop %v2280
  %v2343 = vmul.f32 %v2280, %v2342
  %v2344 = vsub.f32 1.0, %v2343
  %v2345 = vmul.f32 %v2342, %v2344
  %v2346 = vadd.f32 %v2342, %v2345
  %vm2347 = vweird.f32 %v2280
  %vm2348 = vweird.f32 %v2342
  %vm2349 = vmor %vm2347, %vm2348
  %v2350 = vsel %vm2349, %v2342, %v2346
  %v2351 = vand.u32 2147483647, %v2280
  %vm2352 = vcmp.eq.f32.partialorder %v2351, 8.507059e+37
  %v2353 = vand.u32 %v2280, 2147483648
  %v2354 = vor.u32 1.1754944e-38, %v2353
  %v2355 = vsel %vm2352, %v2354, %v2350
  %v2356 = vmul.f32 1.0, %v2355
  %v2357 = vrcp.pop %v2281
  %v2358 = vmul.f32 %v2281, %v2357
  %v2359 = vsub.f32 1.0, %v2358
  %v2360 = vmul.f32 %v2357, %v2359
  %v2361 = vadd.f32 %v2357, %v2360
  %vm2362 = vweird.f32 %v2281
  %vm2363 = vweird.f32 %v2357
  %vm2364 = vmor %vm2362, %vm2363
  %v2365 = vsel %vm2364, %v2357, %v2361
  %v2366 = vand.u32 2147483647, %v2281
  %vm2367 = vcmp.eq.f32.partialorder %v2366, 8.507059e+37
  %v2368 = vand.u32 %v2281, 2147483648
  %v2369 = vor.u32 1.1754944e-38, %v2368
  %v2370 = vsel %vm2367, %v2369, %v2365
  %v2371 = vmul.f32 1.0, %v2370
  %v2372 = vtanh.pop %v2229
  %v2373 = vtanh.pop %v2255
  %v2374 = vmul.f32 %v2326, %v2034
  %v2375 = vmul.f32 %v2341, %v2035
  %v2376 = vmul.f32 %v2296, %v2372
  %v2377 = vmul.f32 %v2311, %v2373
  %v2378 = vadd.f32 %v2374, %v2376
  %v2379 = vadd.f32 %v2375, %v2377
  %v2380 = vtanh.pop %v2378
  %v2381 = vtanh.pop %v2379
  %v2382 = vmul.f32 %v2356, %v2380
  %v2383 = vmul.f32 %v2371, %v2381
  %v2384 = vpack.c.bf16 %v2382, %v2382
  %v2385 = vpack.c.bf16 %v2383, %v2383
  %v2386 = vld [vmem:[#allocation2 + $0x100] sm:$0xff]
  %v2387 = vld [vmem:[#allocation2 + $0x108] sm:$0xff]
  %v2388 = vld [vmem:[#allocation2 + $0x110] sm:$0xff]
  %v2389 = vld [vmem:[#allocation2 + $0x118] sm:$0xff]
  %v2390 = vld [vmem:[#allocation2 + $0x120] sm:$0xff]
  %v2391 = vld [vmem:[#allocation2 + $0x128] sm:$0xff]
  %v2392 = vld [vmem:[#allocation2 + $0x130] sm:$0xff]
  %v2393 = vld [vmem:[#allocation2 + $0x138] sm:$0xff]
  %2394 = vmatpush.bf16.msra.mxu0 %v1162
  %2395 = vmatpush.bf16.msra.mxu0 %v1154
  %2396 = vmatpush.bf16.msra.mxu0 %v1146
  %2397 = vmatpush.bf16.msra.mxu0 %v1138
  %2398 = vmatpush.bf16.msra.mxu0 %v1130
  %2399 = vmatpush.bf16.msra.mxu0 %v1122
  %2400 = vmatpush.bf16.msra.mxu0 %v1114
  %2401 = vmatpush.bf16.msra.mxu0 %v1106
  %2402 = vmatmul.bf16.gmra.mxu0 %v2384
  %v2403 = vpop.f32.mrf.mxu0
  %v2404 = vadd.f32 %v2386, %v2403
  %v2405 = vpop.f32.mrf.mxu0
  %2406 = vdwg.mxu0
  %2407 = vmatpush.bf16.msra.mxu0 %v1226
  %2408 = vmatpush.bf16.msra.mxu0 %v1218
  %2409 = vmatpush.bf16.msra.mxu0 %v1210
  %2410 = vmatpush.bf16.msra.mxu0 %v1202
  %2411 = vmatpush.bf16.msra.mxu0 %v1194
  %2412 = vmatpush.bf16.msra.mxu0 %v1186
  %2413 = vmatpush.bf16.msra.mxu0 %v1178
  %2414 = vmatpush.bf16.msra.mxu0 %v1170
  %2415 = vmatmul.bf16.gmra.mxu0 %v2385
  %v2416 = vpop.f32.mrf.mxu0
  %v2417 = vadd.f32 %v2404, %v2416
  %v2418 = vpop.f32.mrf.mxu0
  %2419 = vdwg.mxu0
  %2420 = vmatpush.bf16.msra.mxu0 %v1163
  %2421 = vmatpush.bf16.msra.mxu0 %v1155
  %2422 = vmatpush.bf16.msra.mxu0 %v1147
  %2423 = vmatpush.bf16.msra.mxu0 %v1139
  %2424 = vmatpush.bf16.msra.mxu0 %v1131
  %2425 = vmatpush.bf16.msra.mxu0 %v1123
  %2426 = vmatpush.bf16.msra.mxu0 %v1115
  %2427 = vmatpush.bf16.msra.mxu0 %v1107
  %2428 = vmatmul.bf16.gmra.mxu0 %v2384
  %v2429 = vpop.f32.mrf.mxu0
  %v2430 = vadd.f32 %v2387, %v2429
  %v2431 = vpop.f32.mrf.mxu0
  %2432 = vdwg.mxu0
  %2433 = vmatpush.bf16.msra.mxu0 %v1227
  %2434 = vmatpush.bf16.msra.mxu0 %v1219
  %2435 = vmatpush.bf16.msra.mxu0 %v1211
  %2436 = vmatpush.bf16.msra.mxu0 %v1203
  %2437 = vmatpush.bf16.msra.mxu0 %v1195
  %2438 = vmatpush.bf16.msra.mxu0 %v1187
  %2439 = vmatpush.bf16.msra.mxu0 %v1179
  %2440 = vmatpush.bf16.msra.mxu0 %v1171
  %2441 = vmatmul.bf16.gmra.mxu0 %v2385
  %v2442 = vpop.f32.mrf.mxu0
  %v2443 = vadd.f32 %v2430, %v2442
  %v2444 = vpop.f32.mrf.mxu0
  %2445 = vdwg.mxu0
  %2446 = vmatpush.bf16.msra.mxu0 %v1164
  %2447 = vmatpush.bf16.msra.mxu0 %v1156
  %2448 = vmatpush.bf16.msra.mxu0 %v1148
  %2449 = vmatpush.bf16.msra.mxu0 %v1140
  %2450 = vmatpush.bf16.msra.mxu0 %v1132
  %2451 = vmatpush.bf16.msra.mxu0 %v1124
  %2452 = vmatpush.bf16.msra.mxu0 %v1116
  %2453 = vmatpush.bf16.msra.mxu0 %v1108
  %2454 = vmatmul.bf16.gmra.mxu0 %v2384
  %v2455 = vpop.f32.mrf.mxu0
  %v2456 = vadd.f32 %v2388, %v2455
  %v2457 = vpop.f32.mrf.mxu0
  %2458 = vdwg.mxu0
  %2459 = vmatpush.bf16.msra.mxu0 %v1228
  %2460 = vmatpush.bf16.msra.mxu0 %v1220
  %2461 = vmatpush.bf16.msra.mxu0 %v1212
  %2462 = vmatpush.bf16.msra.mxu0 %v1204
  %2463 = vmatpush.bf16.msra.mxu0 %v1196
  %2464 = vmatpush.bf16.msra.mxu0 %v1188
  %2465 = vmatpush.bf16.msra.mxu0 %v1180
  %2466 = vmatpush.bf16.msra.mxu0 %v1172
  %2467 = vmatmul.bf16.gmra.mxu0 %v2385
  %v2468 = vpop.f32.mrf.mxu0
  %v2469 = vadd.f32 %v2456, %v2468
  %v2470 = vpop.f32.mrf.mxu0
  %2471 = vdwg.mxu0
  %2472 = vmatpush.bf16.msra.mxu0 %v1165
  %2473 = vmatpush.bf16.msra.mxu0 %v1157
  %2474 = vmatpush.bf16.msra.mxu0 %v1149
  %2475 = vmatpush.bf16.msra.mxu0 %v1141
  %2476 = vmatpush.bf16.msra.mxu0 %v1133
  %2477 = vmatpush.bf16.msra.mxu0 %v1125
  %2478 = vmatpush.bf16.msra.mxu0 %v1117
  %2479 = vmatpush.bf16.msra.mxu0 %v1109
  %2480 = vmatmul.bf16.gmra.mxu0 %v2384
  %v2481 = vpop.f32.mrf.mxu0
  %v2482 = vadd.f32 %v2389, %v2481
  %v2483 = vpop.f32.mrf.mxu0
  %2484 = vdwg.mxu0
  %2485 = vmatpush.bf16.msra.mxu0 %v1229
  %2486 = vmatpush.bf16.msra.mxu0 %v1221
  %2487 = vmatpush.bf16.msra.mxu0 %v1213
  %2488 = vmatpush.bf16.msra.mxu0 %v1205
  %2489 = vmatpush.bf16.msra.mxu0 %v1197
  %2490 = vmatpush.bf16.msra.mxu0 %v1189
  %2491 = vmatpush.bf16.msra.mxu0 %v1181
  %2492 = vmatpush.bf16.msra.mxu0 %v1173
  %2493 = vmatmul.bf16.gmra.mxu0 %v2385
  %v2494 = vpop.f32.mrf.mxu0
  %v2495 = vadd.f32 %v2482, %v2494
  %v2496 = vpop.f32.mrf.mxu0
  %2497 = vdwg.mxu0
  %2498 = vmatpush.bf16.msra.mxu0 %v1166
  %2499 = vmatpush.bf16.msra.mxu0 %v1158
  %2500 = vmatpush.bf16.msra.mxu0 %v1150
  %2501 = vmatpush.bf16.msra.mxu0 %v1142
  %2502 = vmatpush.bf16.msra.mxu0 %v1134
  %2503 = vmatpush.bf16.msra.mxu0 %v1126
  %2504 = vmatpush.bf16.msra.mxu0 %v1118
  %2505 = vmatpush.bf16.msra.mxu0 %v1110
  %2506 = vmatmul.bf16.gmra.mxu0 %v2384
  %v2507 = vpop.f32.mrf.mxu0
  %v2508 = vadd.f32 %v2390, %v2507
  %v2509 = vpop.f32.mrf.mxu0
  %2510 = vdwg.mxu0
  %2511 = vmatpush.bf16.msra.mxu0 %v1230
  %2512 = vmatpush.bf16.msra.mxu0 %v1222
  %2513 = vmatpush.bf16.msra.mxu0 %v1214
  %2514 = vmatpush.bf16.msra.mxu0 %v1206
  %2515 = vmatpush.bf16.msra.mxu0 %v1198
  %2516 = vmatpush.bf16.msra.mxu0 %v1190
  %2517 = vmatpush.bf16.msra.mxu0 %v1182
  %2518 = vmatpush.bf16.msra.mxu0 %v1174
  %2519 = vmatmul.bf16.gmra.mxu0 %v2385
  %v2520 = vpop.f32.mrf.mxu0
  %v2521 = vadd.f32 %v2508, %v2520
  %v2522 = vpop.f32.mrf.mxu0
  %2523 = vdwg.mxu0
  %2524 = vmatpush.bf16.msra.mxu0 %v1167
  %2525 = vmatpush.bf16.msra.mxu0 %v1159
  %2526 = vmatpush.bf16.msra.mxu0 %v1151
  %2527 = vmatpush.bf16.msra.mxu0 %v1143
  %2528 = vmatpush.bf16.msra.mxu0 %v1135
  %2529 = vmatpush.bf16.msra.mxu0 %v1127
  %2530 = vmatpush.bf16.msra.mxu0 %v1119
  %2531 = vmatpush.bf16.msra.mxu0 %v1111
  %2532 = vmatmul.bf16.gmra.mxu0 %v2384
  %v2533 = vpop.f32.mrf.mxu0
  %v2534 = vadd.f32 %v2391, %v2533
  %v2535 = vpop.f32.mrf.mxu0
  %2536 = vdwg.mxu0
  %2537 = vmatpush.bf16.msra.mxu0 %v1231
  %2538 = vmatpush.bf16.msra.mxu0 %v1223
  %2539 = vmatpush.bf16.msra.mxu0 %v1215
  %2540 = vmatpush.bf16.msra.mxu0 %v1207
  %2541 = vmatpush.bf16.msra.mxu0 %v1199
  %2542 = vmatpush.bf16.msra.mxu0 %v1191
  %2543 = vmatpush.bf16.msra.mxu0 %v1183
  %2544 = vmatpush.bf16.msra.mxu0 %v1175
  %2545 = vmatmul.bf16.gmra.mxu0 %v2385
  %v2546 = vpop.f32.mrf.mxu0
  %v2547 = vadd.f32 %v2534, %v2546
  %v2548 = vpop.f32.mrf.mxu0
  %2549 = vdwg.mxu0
  %2550 = vmatpush.bf16.msra.mxu0 %v1168
  %2551 = vmatpush.bf16.msra.mxu0 %v1160
  %2552 = vmatpush.bf16.msra.mxu0 %v1152
  %2553 = vmatpush.bf16.msra.mxu0 %v1144
  %2554 = vmatpush.bf16.msra.mxu0 %v1136
  %2555 = vmatpush.bf16.msra.mxu0 %v1128
  %2556 = vmatpush.bf16.msra.mxu0 %v1120
  %2557 = vmatpush.bf16.msra.mxu0 %v1112
  %2558 = vmatmul.bf16.gmra.mxu0 %v2384
  %v2559 = vpop.f32.mrf.mxu0
  %v2560 = vadd.f32 %v2392, %v2559
  %v2561 = vpop.f32.mrf.mxu0
  %2562 = vdwg.mxu0
  %2563 = vmatpush.bf16.msra.mxu0 %v1232
  %2564 = vmatpush.bf16.msra.mxu0 %v1224
  %2565 = vmatpush.bf16.msra.mxu0 %v1216
  %2566 = vmatpush.bf16.msra.mxu0 %v1208
  %2567 = vmatpush.bf16.msra.mxu0 %v1200
  %2568 = vmatpush.bf16.msra.mxu0 %v1192
  %2569 = vmatpush.bf16.msra.mxu0 %v1184
  %2570 = vmatpush.bf16.msra.mxu0 %v1176
  %2571 = vmatmul.bf16.gmra.mxu0 %v2385
  %v2572 = vpop.f32.mrf.mxu0
  %v2573 = vadd.f32 %v2560, %v2572
  %v2574 = vpop.f32.mrf.mxu0
  %2575 = vdwg.mxu0
  %2576 = vmatpush.bf16.msra.mxu0 %v1169
  %2577 = vmatpush.bf16.msra.mxu0 %v1161
  %2578 = vmatpush.bf16.msra.mxu0 %v1153
  %2579 = vmatpush.bf16.msra.mxu0 %v1145
  %2580 = vmatpush.bf16.msra.mxu0 %v1137
  %2581 = vmatpush.bf16.msra.mxu0 %v1129
  %2582 = vmatpush.bf16.msra.mxu0 %v1121
  %2583 = vmatpush.bf16.msra.mxu0 %v1113
  %2584 = vmatmul.bf16.gmra.mxu0 %v2384
  %v2585 = vpop.f32.mrf.mxu0
  %v2586 = vadd.f32 %v2393, %v2585
  %v2587 = vpop.f32.mrf.mxu0
  %2588 = vdwg.mxu0
  %2589 = vmatpush.bf16.msra.mxu0 %v1233
  %2590 = vmatpush.bf16.msra.mxu0 %v1225
  %2591 = vmatpush.bf16.msra.mxu0 %v1217
  %2592 = vmatpush.bf16.msra.mxu0 %v1209
  %2593 = vmatpush.bf16.msra.mxu0 %v1201
  %2594 = vmatpush.bf16.msra.mxu0 %v1193
  %2595 = vmatpush.bf16.msra.mxu0 %v1185
  %2596 = vmatpush.bf16.msra.mxu0 %v1177
  %2597 = vmatmul.bf16.gmra.mxu0 %v2385
  %v2598 = vpop.f32.mrf.mxu0
  %v2599 = vadd.f32 %v2586, %v2598
  %v2600 = vpop.f32.mrf.mxu0
  %2601 = vdwg.mxu0
  %v2602 = vxor.u32 %v2417, 2147483648
  %v2603 = vxor.u32 %v2443, 2147483648
  %v2604 = vxor.u32 %v2469, 2147483648
  %v2605 = vxor.u32 %v2495, 2147483648
  %v2606 = vxor.u32 %v2521, 2147483648
  %v2607 = vxor.u32 %v2547, 2147483648
  %v2608 = vmul.f32 %v2602, 1.442695
  %v2609 = vpow.pop %v2608
  %v2610 = vmul.f32 %v2603, 1.442695
  %v2611 = vpow.pop %v2610
  %v2612 = vmul.f32 %v2604, 1.442695
  %v2613 = vpow.pop %v2612
  %v2614 = vmul.f32 %v2605, 1.442695
  %v2615 = vpow.pop %v2614
  %v2616 = vmul.f32 %v2606, 1.442695
  %v2617 = vpow.pop %v2616
  %v2618 = vmul.f32 %v2607, 1.442695
  %v2619 = vpow.pop %v2618
  %v2620 = vadd.f32 %v2609, 1.0
  %v2621 = vadd.f32 %v2611, 1.0
  %v2622 = vadd.f32 %v2613, 1.0
  %v2623 = vadd.f32 %v2615, 1.0
  %v2624 = vadd.f32 %v2617, 1.0
  %v2625 = vadd.f32 %v2619, 1.0
  %v2626 = vrcp.pop %v2620
  %v2627 = vmul.f32 %v2620, %v2626
  %v2628 = vsub.f32 1.0, %v2627
  %v2629 = vmul.f32 %v2626, %v2628
  %v2630 = vadd.f32 %v2626, %v2629
  %vm2631 = vweird.f32 %v2620
  %vm2632 = vweird.f32 %v2626
  %vm2633 = vmor %vm2631, %vm2632
  %v2634 = vsel %vm2633, %v2626, %v2630
  %v2635 = vand.u32 2147483647, %v2620
  %vm2636 = vcmp.eq.f32.partialorder %v2635, 8.507059e+37
  %v2637 = vand.u32 %v2620, 2147483648
  %v2638 = vor.u32 1.1754944e-38, %v2637
  %v2639 = vsel %vm2636, %v2638, %v2634
  %v2640 = vmul.f32 1.0, %v2639
  %v2641 = vrcp.pop %v2621
  %v2642 = vmul.f32 %v2621, %v2641
  %v2643 = vsub.f32 1.0, %v2642
  %v2644 = vmul.f32 %v2641, %v2643
  %v2645 = vadd.f32 %v2641, %v2644
  %vm2646 = vweird.f32 %v2621
  %vm2647 = vweird.f32 %v2641
  %vm2648 = vmor %vm2646, %vm2647
  %v2649 = vsel %vm2648, %v2641, %v2645
  %v2650 = vand.u32 2147483647, %v2621
  %vm2651 = vcmp.eq.f32.partialorder %v2650, 8.507059e+37
  %v2652 = vand.u32 %v2621, 2147483648
  %v2653 = vor.u32 1.1754944e-38, %v2652
  %v2654 = vsel %vm2651, %v2653, %v2649
  %v2655 = vmul.f32 1.0, %v2654
  %v2656 = vrcp.pop %v2622
  %v2657 = vmul.f32 %v2622, %v2656
  %v2658 = vsub.f32 1.0, %v2657
  %v2659 = vmul.f32 %v2656, %v2658
  %v2660 = vadd.f32 %v2656, %v2659
  %vm2661 = vweird.f32 %v2622
  %vm2662 = vweird.f32 %v2656
  %vm2663 = vmor %vm2661, %vm2662
  %v2664 = vsel %vm2663, %v2656, %v2660
  %v2665 = vand.u32 2147483647, %v2622
  %vm2666 = vcmp.eq.f32.partialorder %v2665, 8.507059e+37
  %v2667 = vand.u32 %v2622, 2147483648
  %v2668 = vor.u32 1.1754944e-38, %v2667
  %v2669 = vsel %vm2666, %v2668, %v2664
  %v2670 = vmul.f32 1.0, %v2669
  %v2671 = vrcp.pop %v2623
  %v2672 = vmul.f32 %v2623, %v2671
  %v2673 = vsub.f32 1.0, %v2672
  %v2674 = vmul.f32 %v2671, %v2673
  %v2675 = vadd.f32 %v2671, %v2674
  %vm2676 = vweird.f32 %v2623
  %vm2677 = vweird.f32 %v2671
  %vm2678 = vmor %vm2676, %vm2677
  %v2679 = vsel %vm2678, %v2671, %v2675
  %v2680 = vand.u32 2147483647, %v2623
  %vm2681 = vcmp.eq.f32.partialorder %v2680, 8.507059e+37
  %v2682 = vand.u32 %v2623, 2147483648
  %v2683 = vor.u32 1.1754944e-38, %v2682
  %v2684 = vsel %vm2681, %v2683, %v2679
  %v2685 = vmul.f32 1.0, %v2684
  %v2686 = vrcp.pop %v2624
  %v2687 = vmul.f32 %v2624, %v2686
  %v2688 = vsub.f32 1.0, %v2687
  %v2689 = vmul.f32 %v2686, %v2688
  %v2690 = vadd.f32 %v2686, %v2689
  %vm2691 = vweird.f32 %v2624
  %vm2692 = vweird.f32 %v2686
  %vm2693 = vmor %vm2691, %vm2692
  %v2694 = vsel %vm2693, %v2686, %v2690
  %v2695 = vand.u32 2147483647, %v2624
  %vm2696 = vcmp.eq.f32.partialorder %v2695, 8.507059e+37
  %v2697 = vand.u32 %v2624, 2147483648
  %v2698 = vor.u32 1.1754944e-38, %v2697
  %v2699 = vsel %vm2696, %v2698, %v2694
  %v2700 = vmul.f32 1.0, %v2699
  %v2701 = vrcp.pop %v2625
  %v2702 = vmul.f32 %v2625, %v2701
  %v2703 = vsub.f32 1.0, %v2702
  %v2704 = vmul.f32 %v2701, %v2703
  %v2705 = vadd.f32 %v2701, %v2704
  %vm2706 = vweird.f32 %v2625
  %vm2707 = vweird.f32 %v2701
  %vm2708 = vmor %vm2706, %vm2707
  %v2709 = vsel %vm2708, %v2701, %v2705
  %v2710 = vand.u32 2147483647, %v2625
  %vm2711 = vcmp.eq.f32.partialorder %v2710, 8.507059e+37
  %v2712 = vand.u32 %v2625, 2147483648
  %v2713 = vor.u32 1.1754944e-38, %v2712
  %v2714 = vsel %vm2711, %v2713, %v2709
  %v2715 = vmul.f32 1.0, %v2714
  %v2716 = vtanh.pop %v2573
  %v2717 = vtanh.pop %v2599
  %v2718 = vmul.f32 %v2670, %v2378
  %v2719 = vmul.f32 %v2685, %v2379
  %v2720 = vmul.f32 %v2640, %v2716
  %v2721 = vmul.f32 %v2655, %v2717
  %v2722 = vadd.f32 %v2718, %v2720
  %v2723 = vadd.f32 %v2719, %v2721
  %v2724 = vtanh.pop %v2722
  %v2725 = vtanh.pop %v2723
  %v2726 = vmul.f32 %v2700, %v2724
  %v2727 = vmul.f32 %v2715, %v2725
  %v2728 = vpack.c.bf16 %v2726, %v2726
  %v2729 = vpack.c.bf16 %v2727, %v2727
  %v2730 = vld [vmem:[#allocation2 + $0x140] sm:$0xff]
  %v2731 = vld [vmem:[#allocation2 + $0x148] sm:$0xff]
  %v2732 = vld [vmem:[#allocation2 + $0x150] sm:$0xff]
  %v2733 = vld [vmem:[#allocation2 + $0x158] sm:$0xff]
  %v2734 = vld [vmem:[#allocation2 + $0x160] sm:$0xff]
  %v2735 = vld [vmem:[#allocation2 + $0x168] sm:$0xff]
  %v2736 = vld [vmem:[#allocation2 + $0x170] sm:$0xff]
  %v2737 = vld [vmem:[#allocation2 + $0x178] sm:$0xff]
  %2738 = vmatpush.bf16.msra.mxu0 %v1162
  %2739 = vmatpush.bf16.msra.mxu0 %v1154
  %2740 = vmatpush.bf16.msra.mxu0 %v1146
  %2741 = vmatpush.bf16.msra.mxu0 %v1138
  %2742 = vmatpush.bf16.msra.mxu0 %v1130
  %2743 = vmatpush.bf16.msra.mxu0 %v1122
  %2744 = vmatpush.bf16.msra.mxu0 %v1114
  %2745 = vmatpush.bf16.msra.mxu0 %v1106
  %2746 = vmatmul.bf16.gmra.mxu0 %v2728
  %v2747 = vpop.f32.mrf.mxu0
  %v2748 = vadd.f32 %v2730, %v2747
  %v2749 = vpop.f32.mrf.mxu0
  %2750 = vdwg.mxu0
  %2751 = vmatpush.bf16.msra.mxu0 %v1226
  %2752 = vmatpush.bf16.msra.mxu0 %v1218
  %2753 = vmatpush.bf16.msra.mxu0 %v1210
  %2754 = vmatpush.bf16.msra.mxu0 %v1202
  %2755 = vmatpush.bf16.msra.mxu0 %v1194
  %2756 = vmatpush.bf16.msra.mxu0 %v1186
  %2757 = vmatpush.bf16.msra.mxu0 %v1178
  %2758 = vmatpush.bf16.msra.mxu0 %v1170
  %2759 = vmatmul.bf16.gmra.mxu0 %v2729
  %v2760 = vpop.f32.mrf.mxu0
  %v2761 = vadd.f32 %v2748, %v2760
  %v2762 = vpop.f32.mrf.mxu0
  %2763 = vdwg.mxu0
  %2764 = vmatpush.bf16.msra.mxu0 %v1163
  %2765 = vmatpush.bf16.msra.mxu0 %v1155
  %2766 = vmatpush.bf16.msra.mxu0 %v1147
  %2767 = vmatpush.bf16.msra.mxu0 %v1139
  %2768 = vmatpush.bf16.msra.mxu0 %v1131
  %2769 = vmatpush.bf16.msra.mxu0 %v1123
  %2770 = vmatpush.bf16.msra.mxu0 %v1115
  %2771 = vmatpush.bf16.msra.mxu0 %v1107
  %2772 = vmatmul.bf16.gmra.mxu0 %v2728
  %v2773 = vpop.f32.mrf.mxu0
  %v2774 = vadd.f32 %v2731, %v2773
  %v2775 = vpop.f32.mrf.mxu0
  %2776 = vdwg.mxu0
  %2777 = vmatpush.bf16.msra.mxu0 %v1227
  %2778 = vmatpush.bf16.msra.mxu0 %v1219
  %2779 = vmatpush.bf16.msra.mxu0 %v1211
  %2780 = vmatpush.bf16.msra.mxu0 %v1203
  %2781 = vmatpush.bf16.msra.mxu0 %v1195
  %2782 = vmatpush.bf16.msra.mxu0 %v1187
  %2783 = vmatpush.bf16.msra.mxu0 %v1179
  %2784 = vmatpush.bf16.msra.mxu0 %v1171
  %2785 = vmatmul.bf16.gmra.mxu0 %v2729
  %v2786 = vpop.f32.mrf.mxu0
  %v2787 = vadd.f32 %v2774, %v2786
  %v2788 = vpop.f32.mrf.mxu0
  %2789 = vdwg.mxu0
  %2790 = vmatpush.bf16.msra.mxu0 %v1164
  %2791 = vmatpush.bf16.msra.mxu0 %v1156
  %2792 = vmatpush.bf16.msra.mxu0 %v1148
  %2793 = vmatpush.bf16.msra.mxu0 %v1140
  %2794 = vmatpush.bf16.msra.mxu0 %v1132
  %2795 = vmatpush.bf16.msra.mxu0 %v1124
  %2796 = vmatpush.bf16.msra.mxu0 %v1116
  %2797 = vmatpush.bf16.msra.mxu0 %v1108
  %2798 = vmatmul.bf16.gmra.mxu0 %v2728
  %v2799 = vpop.f32.mrf.mxu0
  %v2800 = vadd.f32 %v2732, %v2799
  %v2801 = vpop.f32.mrf.mxu0
  %2802 = vdwg.mxu0
  %2803 = vmatpush.bf16.msra.mxu0 %v1228
  %2804 = vmatpush.bf16.msra.mxu0 %v1220
  %2805 = vmatpush.bf16.msra.mxu0 %v1212
  %2806 = vmatpush.bf16.msra.mxu0 %v1204
  %2807 = vmatpush.bf16.msra.mxu0 %v1196
  %2808 = vmatpush.bf16.msra.mxu0 %v1188
  %2809 = vmatpush.bf16.msra.mxu0 %v1180
  %2810 = vmatpush.bf16.msra.mxu0 %v1172
  %2811 = vmatmul.bf16.gmra.mxu0 %v2729
  %v2812 = vpop.f32.mrf.mxu0
  %v2813 = vadd.f32 %v2800, %v2812
  %v2814 = vpop.f32.mrf.mxu0
  %2815 = vdwg.mxu0
  %2816 = vmatpush.bf16.msra.mxu0 %v1165
  %2817 = vmatpush.bf16.msra.mxu0 %v1157
  %2818 = vmatpush.bf16.msra.mxu0 %v1149
  %2819 = vmatpush.bf16.msra.mxu0 %v1141
  %2820 = vmatpush.bf16.msra.mxu0 %v1133
  %2821 = vmatpush.bf16.msra.mxu0 %v1125
  %2822 = vmatpush.bf16.msra.mxu0 %v1117
  %2823 = vmatpush.bf16.msra.mxu0 %v1109
  %2824 = vmatmul.bf16.gmra.mxu0 %v2728
  %v2825 = vpop.f32.mrf.mxu0
  %v2826 = vadd.f32 %v2733, %v2825
  %v2827 = vpop.f32.mrf.mxu0
  %2828 = vdwg.mxu0
  %2829 = vmatpush.bf16.msra.mxu0 %v1229
  %2830 = vmatpush.bf16.msra.mxu0 %v1221
  %2831 = vmatpush.bf16.msra.mxu0 %v1213
  %2832 = vmatpush.bf16.msra.mxu0 %v1205
  %2833 = vmatpush.bf16.msra.mxu0 %v1197
  %2834 = vmatpush.bf16.msra.mxu0 %v1189
  %2835 = vmatpush.bf16.msra.mxu0 %v1181
  %2836 = vmatpush.bf16.msra.mxu0 %v1173
  %2837 = vmatmul.bf16.gmra.mxu0 %v2729
  %v2838 = vpop.f32.mrf.mxu0
  %v2839 = vadd.f32 %v2826, %v2838
  %v2840 = vpop.f32.mrf.mxu0
  %2841 = vdwg.mxu0
  %2842 = vmatpush.bf16.msra.mxu0 %v1166
  %2843 = vmatpush.bf16.msra.mxu0 %v1158
  %2844 = vmatpush.bf16.msra.mxu0 %v1150
  %2845 = vmatpush.bf16.msra.mxu0 %v1142
  %2846 = vmatpush.bf16.msra.mxu0 %v1134
  %2847 = vmatpush.bf16.msra.mxu0 %v1126
  %2848 = vmatpush.bf16.msra.mxu0 %v1118
  %2849 = vmatpush.bf16.msra.mxu0 %v1110
  %2850 = vmatmul.bf16.gmra.mxu0 %v2728
  %v2851 = vpop.f32.mrf.mxu0
  %v2852 = vadd.f32 %v2734, %v2851
  %v2853 = vpop.f32.mrf.mxu0
  %2854 = vdwg.mxu0
  %2855 = vmatpush.bf16.msra.mxu0 %v1230
  %2856 = vmatpush.bf16.msra.mxu0 %v1222
  %2857 = vmatpush.bf16.msra.mxu0 %v1214
  %2858 = vmatpush.bf16.msra.mxu0 %v1206
  %2859 = vmatpush.bf16.msra.mxu0 %v1198
  %2860 = vmatpush.bf16.msra.mxu0 %v1190
  %2861 = vmatpush.bf16.msra.mxu0 %v1182
  %2862 = vmatpush.bf16.msra.mxu0 %v1174
  %2863 = vmatmul.bf16.gmra.mxu0 %v2729
  %v2864 = vpop.f32.mrf.mxu0
  %v2865 = vadd.f32 %v2852, %v2864
  %v2866 = vpop.f32.mrf.mxu0
  %2867 = vdwg.mxu0
  %2868 = vmatpush.bf16.msra.mxu0 %v1167
  %2869 = vmatpush.bf16.msra.mxu0 %v1159
  %2870 = vmatpush.bf16.msra.mxu0 %v1151
  %2871 = vmatpush.bf16.msra.mxu0 %v1143
  %2872 = vmatpush.bf16.msra.mxu0 %v1135
  %2873 = vmatpush.bf16.msra.mxu0 %v1127
  %2874 = vmatpush.bf16.msra.mxu0 %v1119
  %2875 = vmatpush.bf16.msra.mxu0 %v1111
  %2876 = vmatmul.bf16.gmra.mxu0 %v2728
  %v2877 = vpop.f32.mrf.mxu0
  %v2878 = vadd.f32 %v2735, %v2877
  %v2879 = vpop.f32.mrf.mxu0
  %2880 = vdwg.mxu0
  %2881 = vmatpush.bf16.msra.mxu0 %v1231
  %2882 = vmatpush.bf16.msra.mxu0 %v1223
  %2883 = vmatpush.bf16.msra.mxu0 %v1215
  %2884 = vmatpush.bf16.msra.mxu0 %v1207
  %2885 = vmatpush.bf16.msra.mxu0 %v1199
  %2886 = vmatpush.bf16.msra.mxu0 %v1191
  %2887 = vmatpush.bf16.msra.mxu0 %v1183
  %2888 = vmatpush.bf16.msra.mxu0 %v1175
  %2889 = vmatmul.bf16.gmra.mxu0 %v2729
  %v2890 = vpop.f32.mrf.mxu0
  %v2891 = vadd.f32 %v2878, %v2890
  %v2892 = vpop.f32.mrf.mxu0
  %2893 = vdwg.mxu0
  %2894 = vmatpush.bf16.msra.mxu0 %v1168
  %2895 = vmatpush.bf16.msra.mxu0 %v1160
  %2896 = vmatpush.bf16.msra.mxu0 %v1152
  %2897 = vmatpush.bf16.msra.mxu0 %v1144
  %2898 = vmatpush.bf16.msra.mxu0 %v1136
  %2899 = vmatpush.bf16.msra.mxu0 %v1128
  %2900 = vmatpush.bf16.msra.mxu0 %v1120
  %2901 = vmatpush.bf16.msra.mxu0 %v1112
  %2902 = vmatmul.bf16.gmra.mxu0 %v2728
  %v2903 = vpop.f32.mrf.mxu0
  %v2904 = vadd.f32 %v2736, %v2903
  %v2905 = vpop.f32.mrf.mxu0
  %2906 = vdwg.mxu0
  %2907 = vmatpush.bf16.msra.mxu0 %v1232
  %2908 = vmatpush.bf16.msra.mxu0 %v1224
  %2909 = vmatpush.bf16.msra.mxu0 %v1216
  %2910 = vmatpush.bf16.msra.mxu0 %v1208
  %2911 = vmatpush.bf16.msra.mxu0 %v1200
  %2912 = vmatpush.bf16.msra.mxu0 %v1192
  %2913 = vmatpush.bf16.msra.mxu0 %v1184
  %2914 = vmatpush.bf16.msra.mxu0 %v1176
  %2915 = vmatmul.bf16.gmra.mxu0 %v2729
  %v2916 = vpop.f32.mrf.mxu0
  %v2917 = vadd.f32 %v2904, %v2916
  %v2918 = vpop.f32.mrf.mxu0
  %2919 = vdwg.mxu0
  %2920 = vmatpush.bf16.msra.mxu0 %v1169
  %2921 = vmatpush.bf16.msra.mxu0 %v1161
  %2922 = vmatpush.bf16.msra.mxu0 %v1153
  %2923 = vmatpush.bf16.msra.mxu0 %v1145
  %2924 = vmatpush.bf16.msra.mxu0 %v1137
  %2925 = vmatpush.bf16.msra.mxu0 %v1129
  %2926 = vmatpush.bf16.msra.mxu0 %v1121
  %2927 = vmatpush.bf16.msra.mxu0 %v1113
  %2928 = vmatmul.bf16.gmra.mxu0 %v2728
  %v2929 = vpop.f32.mrf.mxu0
  %v2930 = vadd.f32 %v2737, %v2929
  %v2931 = vpop.f32.mrf.mxu0
  %2932 = vdwg.mxu0
  %2933 = vmatpush.bf16.msra.mxu0 %v1233
  %2934 = vmatpush.bf16.msra.mxu0 %v1225
  %2935 = vmatpush.bf16.msra.mxu0 %v1217
  %2936 = vmatpush.bf16.msra.mxu0 %v1209
  %2937 = vmatpush.bf16.msra.mxu0 %v1201
  %2938 = vmatpush.bf16.msra.mxu0 %v1193
  %2939 = vmatpush.bf16.msra.mxu0 %v1185
  %2940 = vmatpush.bf16.msra.mxu0 %v1177
  %2941 = vmatmul.bf16.gmra.mxu0 %v2729
  %v2942 = vpop.f32.mrf.mxu0
  %v2943 = vadd.f32 %v2930, %v2942
  %v2944 = vpop.f32.mrf.mxu0
  %2945 = vdwg.mxu0
  %v2946 = vxor.u32 %v2761, 2147483648
  %v2947 = vxor.u32 %v2787, 2147483648
  %v2948 = vxor.u32 %v2813, 2147483648
  %v2949 = vxor.u32 %v2839, 2147483648
  %v2950 = vxor.u32 %v2865, 2147483648
  %v2951 = vxor.u32 %v2891, 2147483648
  %v2952 = vmul.f32 %v2946, 1.442695
  %v2953 = vpow.pop %v2952
  %v2954 = vmul.f32 %v2947, 1.442695
  %v2955 = vpow.pop %v2954
  %v2956 = vmul.f32 %v2948, 1.442695
  %v2957 = vpow.pop %v2956
  %v2958 = vmul.f32 %v2949, 1.442695
  %v2959 = vpow.pop %v2958
  %v2960 = vmul.f32 %v2950, 1.442695
  %v2961 = vpow.pop %v2960
  %v2962 = vmul.f32 %v2951, 1.442695
  %v2963 = vpow.pop %v2962
  %v2964 = vadd.f32 %v2953, 1.0
  %v2965 = vadd.f32 %v2955, 1.0
  %v2966 = vadd.f32 %v2957, 1.0
  %v2967 = vadd.f32 %v2959, 1.0
  %v2968 = vadd.f32 %v2961, 1.0
  %v2969 = vadd.f32 %v2963, 1.0
  %v2970 = vrcp.pop %v2964
  %v2971 = vmul.f32 %v2964, %v2970
  %v2972 = vsub.f32 1.0, %v2971
  %v2973 = vmul.f32 %v2970, %v2972
  %v2974 = vadd.f32 %v2970, %v2973
  %vm2975 = vweird.f32 %v2964
  %vm2976 = vweird.f32 %v2970
  %vm2977 = vmor %vm2975, %vm2976
  %v2978 = vsel %vm2977, %v2970, %v2974
  %v2979 = vand.u32 2147483647, %v2964
  %vm2980 = vcmp.eq.f32.partialorder %v2979, 8.507059e+37
  %v2981 = vand.u32 %v2964, 2147483648
  %v2982 = vor.u32 1.1754944e-38, %v2981
  %v2983 = vsel %vm2980, %v2982, %v2978
  %v2984 = vmul.f32 1.0, %v2983
  %v2985 = vrcp.pop %v2965
  %v2986 = vmul.f32 %v2965, %v2985
  %v2987 = vsub.f32 1.0, %v2986
  %v2988 = vmul.f32 %v2985, %v2987
  %v2989 = vadd.f32 %v2985, %v2988
  %vm2990 = vweird.f32 %v2965
  %vm2991 = vweird.f32 %v2985
  %vm2992 = vmor %vm2990, %vm2991
  %v2993 = vsel %vm2992, %v2985, %v2989
  %v2994 = vand.u32 2147483647, %v2965
  %vm2995 = vcmp.eq.f32.partialorder %v2994, 8.507059e+37
  %v2996 = vand.u32 %v2965, 2147483648
  %v2997 = vor.u32 1.1754944e-38, %v2996
  %v2998 = vsel %vm2995, %v2997, %v2993
  %v2999 = vmul.f32 1.0, %v2998
  %v3000 = vrcp.pop %v2966
  %v3001 = vmul.f32 %v2966, %v3000
  %v3002 = vsub.f32 1.0, %v3001
  %v3003 = vmul.f32 %v3000, %v3002
  %v3004 = vadd.f32 %v3000, %v3003
  %vm3005 = vweird.f32 %v2966
  %vm3006 = vweird.f32 %v3000
  %vm3007 = vmor %vm3005, %vm3006
  %v3008 = vsel %vm3007, %v3000, %v3004
  %v3009 = vand.u32 2147483647, %v2966
  %vm3010 = vcmp.eq.f32.partialorder %v3009, 8.507059e+37
  %v3011 = vand.u32 %v2966, 2147483648
  %v3012 = vor.u32 1.1754944e-38, %v3011
  %v3013 = vsel %vm3010, %v3012, %v3008
  %v3014 = vmul.f32 1.0, %v3013
  %v3015 = vrcp.pop %v2967
  %v3016 = vmul.f32 %v2967, %v3015
  %v3017 = vsub.f32 1.0, %v3016
  %v3018 = vmul.f32 %v3015, %v3017
  %v3019 = vadd.f32 %v3015, %v3018
  %vm3020 = vweird.f32 %v2967
  %vm3021 = vweird.f32 %v3015
  %vm3022 = vmor %vm3020, %vm3021
  %v3023 = vsel %vm3022, %v3015, %v3019
  %v3024 = vand.u32 2147483647, %v2967
  %vm3025 = vcmp.eq.f32.partialorder %v3024, 8.507059e+37
  %v3026 = vand.u32 %v2967, 2147483648
  %v3027 = vor.u32 1.1754944e-38, %v3026
  %v3028 = vsel %vm3025, %v3027, %v3023
  %v3029 = vmul.f32 1.0, %v3028
  %v3030 = vrcp.pop %v2968
  %v3031 = vmul.f32 %v2968, %v3030
  %v3032 = vsub.f32 1.0, %v3031
  %v3033 = vmul.f32 %v3030, %v3032
  %v3034 = vadd.f32 %v3030, %v3033
  %vm3035 = vweird.f32 %v2968
  %vm3036 = vweird.f32 %v3030
  %vm3037 = vmor %vm3035, %vm3036
  %v3038 = vsel %vm3037, %v3030, %v3034
  %v3039 = vand.u32 2147483647, %v2968
  %vm3040 = vcmp.eq.f32.partialorder %v3039, 8.507059e+37
  %v3041 = vand.u32 %v2968, 2147483648
  %v3042 = vor.u32 1.1754944e-38, %v3041
  %v3043 = vsel %vm3040, %v3042, %v3038
  %v3044 = vmul.f32 1.0, %v3043
  %v3045 = vrcp.pop %v2969
  %v3046 = vmul.f32 %v2969, %v3045
  %v3047 = vsub.f32 1.0, %v3046
  %v3048 = vmul.f32 %v3045, %v3047
  %v3049 = vadd.f32 %v3045, %v3048
  %vm3050 = vweird.f32 %v2969
  %vm3051 = vweird.f32 %v3045
  %vm3052 = vmor %vm3050, %vm3051
  %v3053 = vsel %vm3052, %v3045, %v3049
  %v3054 = vand.u32 2147483647, %v2969
  %vm3055 = vcmp.eq.f32.partialorder %v3054, 8.507059e+37
  %v3056 = vand.u32 %v2969, 2147483648
  %v3057 = vor.u32 1.1754944e-38, %v3056
  %v3058 = vsel %vm3055, %v3057, %v3053
  %v3059 = vmul.f32 1.0, %v3058
  %v3060 = vtanh.pop %v2917
  %v3061 = vtanh.pop %v2943
  %v3062 = vmul.f32 %v3014, %v2722
  %v3063 = vmul.f32 %v3029, %v2723
  %v3064 = vmul.f32 %v2984, %v3060
  %v3065 = vmul.f32 %v2999, %v3061
  %v3066 = vadd.f32 %v3062, %v3064
  %v3067 = vadd.f32 %v3063, %v3065
  %v3068 = vtanh.pop %v3066
  %v3069 = vtanh.pop %v3067
  %v3070 = vmul.f32 %v3044, %v3068
  %v3071 = vmul.f32 %v3059, %v3069
  %v3072 = vpack.c.bf16 %v3070, %v3070
  %v3073 = vpack.c.bf16 %v3071, %v3071
  %v3074 = vld [vmem:[#allocation2 + $0x180] sm:$0xff]
  %v3075 = vld [vmem:[#allocation2 + $0x188] sm:$0xff]
  %v3076 = vld [vmem:[#allocation2 + $0x190] sm:$0xff]
  %v3077 = vld [vmem:[#allocation2 + $0x198] sm:$0xff]
  %v3078 = vld [vmem:[#allocation2 + $0x1a0] sm:$0xff]
  %v3079 = vld [vmem:[#allocation2 + $0x1a8] sm:$0xff]
  %v3080 = vld [vmem:[#allocation2 + $0x1b0] sm:$0xff]
  %v3081 = vld [vmem:[#allocation2 + $0x1b8] sm:$0xff]
  %3082 = vmatpush.bf16.msra.mxu0 %v1162
  %3083 = vmatpush.bf16.msra.mxu0 %v1154
  %3084 = vmatpush.bf16.msra.mxu0 %v1146
  %3085 = vmatpush.bf16.msra.mxu0 %v1138
  %3086 = vmatpush.bf16.msra.mxu0 %v1130
  %3087 = vmatpush.bf16.msra.mxu0 %v1122
  %3088 = vmatpush.bf16.msra.mxu0 %v1114
  %3089 = vmatpush.bf16.msra.mxu0 %v1106
  %3090 = vmatmul.bf16.gmra.mxu0 %v3072
  %v3091 = vpop.f32.mrf.mxu0
  %v3092 = vadd.f32 %v3074, %v3091
  %v3093 = vpop.f32.mrf.mxu0
  %3094 = vdwg.mxu0
  %3095 = vmatpush.bf16.msra.mxu0 %v1226
  %3096 = vmatpush.bf16.msra.mxu0 %v1218
  %3097 = vmatpush.bf16.msra.mxu0 %v1210
  %3098 = vmatpush.bf16.msra.mxu0 %v1202
  %3099 = vmatpush.bf16.msra.mxu0 %v1194
  %3100 = vmatpush.bf16.msra.mxu0 %v1186
  %3101 = vmatpush.bf16.msra.mxu0 %v1178
  %3102 = vmatpush.bf16.msra.mxu0 %v1170
  %3103 = vmatmul.bf16.gmra.mxu0 %v3073
  %v3104 = vpop.f32.mrf.mxu0
  %v3105 = vadd.f32 %v3092, %v3104
  %v3106 = vpop.f32.mrf.mxu0
  %3107 = vdwg.mxu0
  %3108 = vmatpush.bf16.msra.mxu0 %v1163
  %3109 = vmatpush.bf16.msra.mxu0 %v1155
  %3110 = vmatpush.bf16.msra.mxu0 %v1147
  %3111 = vmatpush.bf16.msra.mxu0 %v1139
  %3112 = vmatpush.bf16.msra.mxu0 %v1131
  %3113 = vmatpush.bf16.msra.mxu0 %v1123
  %3114 = vmatpush.bf16.msra.mxu0 %v1115
  %3115 = vmatpush.bf16.msra.mxu0 %v1107
  %3116 = vmatmul.bf16.gmra.mxu0 %v3072
  %v3117 = vpop.f32.mrf.mxu0
  %v3118 = vadd.f32 %v3075, %v3117
  %v3119 = vpop.f32.mrf.mxu0
  %3120 = vdwg.mxu0
  %3121 = vmatpush.bf16.msra.mxu0 %v1227
  %3122 = vmatpush.bf16.msra.mxu0 %v1219
  %3123 = vmatpush.bf16.msra.mxu0 %v1211
  %3124 = vmatpush.bf16.msra.mxu0 %v1203
  %3125 = vmatpush.bf16.msra.mxu0 %v1195
  %3126 = vmatpush.bf16.msra.mxu0 %v1187
  %3127 = vmatpush.bf16.msra.mxu0 %v1179
  %3128 = vmatpush.bf16.msra.mxu0 %v1171
  %3129 = vmatmul.bf16.gmra.mxu0 %v3073
  %v3130 = vpop.f32.mrf.mxu0
  %v3131 = vadd.f32 %v3118, %v3130
  %v3132 = vpop.f32.mrf.mxu0
  %3133 = vdwg.mxu0
  %3134 = vmatpush.bf16.msra.mxu0 %v1164
  %3135 = vmatpush.bf16.msra.mxu0 %v1156
  %3136 = vmatpush.bf16.msra.mxu0 %v1148
  %3137 = vmatpush.bf16.msra.mxu0 %v1140
  %3138 = vmatpush.bf16.msra.mxu0 %v1132
  %3139 = vmatpush.bf16.msra.mxu0 %v1124
  %3140 = vmatpush.bf16.msra.mxu0 %v1116
  %3141 = vmatpush.bf16.msra.mxu0 %v1108
  %3142 = vmatmul.bf16.gmra.mxu0 %v3072
  %v3143 = vpop.f32.mrf.mxu0
  %v3144 = vadd.f32 %v3076, %v3143
  %v3145 = vpop.f32.mrf.mxu0
  %3146 = vdwg.mxu0
  %3147 = vmatpush.bf16.msra.mxu0 %v1228
  %3148 = vmatpush.bf16.msra.mxu0 %v1220
  %3149 = vmatpush.bf16.msra.mxu0 %v1212
  %3150 = vmatpush.bf16.msra.mxu0 %v1204
  %3151 = vmatpush.bf16.msra.mxu0 %v1196
  %3152 = vmatpush.bf16.msra.mxu0 %v1188
  %3153 = vmatpush.bf16.msra.mxu0 %v1180
  %3154 = vmatpush.bf16.msra.mxu0 %v1172
  %3155 = vmatmul.bf16.gmra.mxu0 %v3073
  %v3156 = vpop.f32.mrf.mxu0
  %v3157 = vadd.f32 %v3144, %v3156
  %v3158 = vpop.f32.mrf.mxu0
  %3159 = vdwg.mxu0
  %3160 = vmatpush.bf16.msra.mxu0 %v1165
  %3161 = vmatpush.bf16.msra.mxu0 %v1157
  %3162 = vmatpush.bf16.msra.mxu0 %v1149
  %3163 = vmatpush.bf16.msra.mxu0 %v1141
  %3164 = vmatpush.bf16.msra.mxu0 %v1133
  %3165 = vmatpush.bf16.msra.mxu0 %v1125
  %3166 = vmatpush.bf16.msra.mxu0 %v1117
  %3167 = vmatpush.bf16.msra.mxu0 %v1109
  %3168 = vmatmul.bf16.gmra.mxu0 %v3072
  %v3169 = vpop.f32.mrf.mxu0
  %v3170 = vadd.f32 %v3077, %v3169
  %v3171 = vpop.f32.mrf.mxu0
  %3172 = vdwg.mxu0
  %3173 = vmatpush.bf16.msra.mxu0 %v1229
  %3174 = vmatpush.bf16.msra.mxu0 %v1221
  %3175 = vmatpush.bf16.msra.mxu0 %v1213
  %3176 = vmatpush.bf16.msra.mxu0 %v1205
  %3177 = vmatpush.bf16.msra.mxu0 %v1197
  %3178 = vmatpush.bf16.msra.mxu0 %v1189
  %3179 = vmatpush.bf16.msra.mxu0 %v1181
  %3180 = vmatpush.bf16.msra.mxu0 %v1173
  %3181 = vmatmul.bf16.gmra.mxu0 %v3073
  %v3182 = vpop.f32.mrf.mxu0
  %v3183 = vadd.f32 %v3170, %v3182
  %v3184 = vpop.f32.mrf.mxu0
  %3185 = vdwg.mxu0
  %3186 = vmatpush.bf16.msra.mxu0 %v1166
  %3187 = vmatpush.bf16.msra.mxu0 %v1158
  %3188 = vmatpush.bf16.msra.mxu0 %v1150
  %3189 = vmatpush.bf16.msra.mxu0 %v1142
  %3190 = vmatpush.bf16.msra.mxu0 %v1134
  %3191 = vmatpush.bf16.msra.mxu0 %v1126
  %3192 = vmatpush.bf16.msra.mxu0 %v1118
  %3193 = vmatpush.bf16.msra.mxu0 %v1110
  %3194 = vmatmul.bf16.gmra.mxu0 %v3072
  %v3195 = vpop.f32.mrf.mxu0
  %v3196 = vadd.f32 %v3078, %v3195
  %v3197 = vpop.f32.mrf.mxu0
  %3198 = vdwg.mxu0
  %3199 = vmatpush.bf16.msra.mxu0 %v1230
  %3200 = vmatpush.bf16.msra.mxu0 %v1222
  %3201 = vmatpush.bf16.msra.mxu0 %v1214
  %3202 = vmatpush.bf16.msra.mxu0 %v1206
  %3203 = vmatpush.bf16.msra.mxu0 %v1198
  %3204 = vmatpush.bf16.msra.mxu0 %v1190
  %3205 = vmatpush.bf16.msra.mxu0 %v1182
  %3206 = vmatpush.bf16.msra.mxu0 %v1174
  %3207 = vmatmul.bf16.gmra.mxu0 %v3073
  %v3208 = vpop.f32.mrf.mxu0
  %v3209 = vadd.f32 %v3196, %v3208
  %v3210 = vpop.f32.mrf.mxu0
  %3211 = vdwg.mxu0
  %3212 = vmatpush.bf16.msra.mxu0 %v1167
  %3213 = vmatpush.bf16.msra.mxu0 %v1159
  %3214 = vmatpush.bf16.msra.mxu0 %v1151
  %3215 = vmatpush.bf16.msra.mxu0 %v1143
  %3216 = vmatpush.bf16.msra.mxu0 %v1135
  %3217 = vmatpush.bf16.msra.mxu0 %v1127
  %3218 = vmatpush.bf16.msra.mxu0 %v1119
  %3219 = vmatpush.bf16.msra.mxu0 %v1111
  %3220 = vmatmul.bf16.gmra.mxu0 %v3072
  %v3221 = vpop.f32.mrf.mxu0
  %v3222 = vadd.f32 %v3079, %v3221
  %v3223 = vpop.f32.mrf.mxu0
  %3224 = vdwg.mxu0
  %3225 = vmatpush.bf16.msra.mxu0 %v1231
  %3226 = vmatpush.bf16.msra.mxu0 %v1223
  %3227 = vmatpush.bf16.msra.mxu0 %v1215
  %3228 = vmatpush.bf16.msra.mxu0 %v1207
  %3229 = vmatpush.bf16.msra.mxu0 %v1199
  %3230 = vmatpush.bf16.msra.mxu0 %v1191
  %3231 = vmatpush.bf16.msra.mxu0 %v1183
  %3232 = vmatpush.bf16.msra.mxu0 %v1175
  %3233 = vmatmul.bf16.gmra.mxu0 %v3073
  %v3234 = vpop.f32.mrf.mxu0
  %v3235 = vadd.f32 %v3222, %v3234
  %v3236 = vpop.f32.mrf.mxu0
  %3237 = vdwg.mxu0
  %3238 = vmatpush.bf16.msra.mxu0 %v1168
  %3239 = vmatpush.bf16.msra.mxu0 %v1160
  %3240 = vmatpush.bf16.msra.mxu0 %v1152
  %3241 = vmatpush.bf16.msra.mxu0 %v1144
  %3242 = vmatpush.bf16.msra.mxu0 %v1136
  %3243 = vmatpush.bf16.msra.mxu0 %v1128
  %3244 = vmatpush.bf16.msra.mxu0 %v1120
  %3245 = vmatpush.bf16.msra.mxu0 %v1112
  %3246 = vmatmul.bf16.gmra.mxu0 %v3072
  %v3247 = vpop.f32.mrf.mxu0
  %v3248 = vadd.f32 %v3080, %v3247
  %v3249 = vpop.f32.mrf.mxu0
  %3250 = vdwg.mxu0
  %3251 = vmatpush.bf16.msra.mxu0 %v1232
  %3252 = vmatpush.bf16.msra.mxu0 %v1224
  %3253 = vmatpush.bf16.msra.mxu0 %v1216
  %3254 = vmatpush.bf16.msra.mxu0 %v1208
  %3255 = vmatpush.bf16.msra.mxu0 %v1200
  %3256 = vmatpush.bf16.msra.mxu0 %v1192
  %3257 = vmatpush.bf16.msra.mxu0 %v1184
  %3258 = vmatpush.bf16.msra.mxu0 %v1176
  %3259 = vmatmul.bf16.gmra.mxu0 %v3073
  %v3260 = vpop.f32.mrf.mxu0
  %v3261 = vadd.f32 %v3248, %v3260
  %v3262 = vpop.f32.mrf.mxu0
  %3263 = vdwg.mxu0
  %3264 = vmatpush.bf16.msra.mxu0 %v1169
  %3265 = vmatpush.bf16.msra.mxu0 %v1161
  %3266 = vmatpush.bf16.msra.mxu0 %v1153
  %3267 = vmatpush.bf16.msra.mxu0 %v1145
  %3268 = vmatpush.bf16.msra.mxu0 %v1137
  %3269 = vmatpush.bf16.msra.mxu0 %v1129
  %3270 = vmatpush.bf16.msra.mxu0 %v1121
  %3271 = vmatpush.bf16.msra.mxu0 %v1113
  %3272 = vmatmul.bf16.gmra.mxu0 %v3072
  %v3273 = vpop.f32.mrf.mxu0
  %v3274 = vadd.f32 %v3081, %v3273
  %v3275 = vpop.f32.mrf.mxu0
  %3276 = vdwg.mxu0
  %3277 = vmatpush.bf16.msra.mxu0 %v1233
  %3278 = vmatpush.bf16.msra.mxu0 %v1225
  %3279 = vmatpush.bf16.msra.mxu0 %v1217
  %3280 = vmatpush.bf16.msra.mxu0 %v1209
  %3281 = vmatpush.bf16.msra.mxu0 %v1201
  %3282 = vmatpush.bf16.msra.mxu0 %v1193
  %3283 = vmatpush.bf16.msra.mxu0 %v1185
  %3284 = vmatpush.bf16.msra.mxu0 %v1177
  %3285 = vmatmul.bf16.gmra.mxu0 %v3073
  %v3286 = vpop.f32.mrf.mxu0
  %v3287 = vadd.f32 %v3274, %v3286
  %v3288 = vpop.f32.mrf.mxu0
  %3289 = vdwg.mxu0
  %v3290 = vxor.u32 %v3105, 2147483648
  %v3291 = vxor.u32 %v3131, 2147483648
  %v3292 = vxor.u32 %v3157, 2147483648
  %v3293 = vxor.u32 %v3183, 2147483648
  %v3294 = vxor.u32 %v3209, 2147483648
  %v3295 = vxor.u32 %v3235, 2147483648
  %v3296 = vmul.f32 %v3290, 1.442695
  %v3297 = vpow.pop %v3296
  %v3298 = vmul.f32 %v3291, 1.442695
  %v3299 = vpow.pop %v3298
  %v3300 = vmul.f32 %v3292, 1.442695
  %v3301 = vpow.pop %v3300
  %v3302 = vmul.f32 %v3293, 1.442695
  %v3303 = vpow.pop %v3302
  %v3304 = vmul.f32 %v3294, 1.442695
  %v3305 = vpow.pop %v3304
  %v3306 = vmul.f32 %v3295, 1.442695
  %v3307 = vpow.pop %v3306
  %v3308 = vadd.f32 %v3297, 1.0
  %v3309 = vadd.f32 %v3299, 1.0
  %v3310 = vadd.f32 %v3301, 1.0
  %v3311 = vadd.f32 %v3303, 1.0
  %v3312 = vadd.f32 %v3305, 1.0
  %v3313 = vadd.f32 %v3307, 1.0
  %v3314 = vrcp.pop %v3308
  %v3315 = vmul.f32 %v3308, %v3314
  %v3316 = vsub.f32 1.0, %v3315
  %v3317 = vmul.f32 %v3314, %v3316
  %v3318 = vadd.f32 %v3314, %v3317
  %vm3319 = vweird.f32 %v3308
  %vm3320 = vweird.f32 %v3314
  %vm3321 = vmor %vm3319, %vm3320
  %v3322 = vsel %vm3321, %v3314, %v3318
  %v3323 = vand.u32 2147483647, %v3308
  %vm3324 = vcmp.eq.f32.partialorder %v3323, 8.507059e+37
  %v3325 = vand.u32 %v3308, 2147483648
  %v3326 = vor.u32 1.1754944e-38, %v3325
  %v3327 = vsel %vm3324, %v3326, %v3322
  %v3328 = vmul.f32 1.0, %v3327
  %v3329 = vrcp.pop %v3309
  %v3330 = vmul.f32 %v3309, %v3329
  %v3331 = vsub.f32 1.0, %v3330
  %v3332 = vmul.f32 %v3329, %v3331
  %v3333 = vadd.f32 %v3329, %v3332
  %vm3334 = vweird.f32 %v3309
  %vm3335 = vweird.f32 %v3329
  %vm3336 = vmor %vm3334, %vm3335
  %v3337 = vsel %vm3336, %v3329, %v3333
  %v3338 = vand.u32 2147483647, %v3309
  %vm3339 = vcmp.eq.f32.partialorder %v3338, 8.507059e+37
  %v3340 = vand.u32 %v3309, 2147483648
  %v3341 = vor.u32 1.1754944e-38, %v3340
  %v3342 = vsel %vm3339, %v3341, %v3337
  %v3343 = vmul.f32 1.0, %v3342
  %v3344 = vrcp.pop %v3310
  %v3345 = vmul.f32 %v3310, %v3344
  %v3346 = vsub.f32 1.0, %v3345
  %v3347 = vmul.f32 %v3344, %v3346
  %v3348 = vadd.f32 %v3344, %v3347
  %vm3349 = vweird.f32 %v3310
  %vm3350 = vweird.f32 %v3344
  %vm3351 = vmor %vm3349, %vm3350
  %v3352 = vsel %vm3351, %v3344, %v3348
  %v3353 = vand.u32 2147483647, %v3310
  %vm3354 = vcmp.eq.f32.partialorder %v3353, 8.507059e+37
  %v3355 = vand.u32 %v3310, 2147483648
  %v3356 = vor.u32 1.1754944e-38, %v3355
  %v3357 = vsel %vm3354, %v3356, %v3352
  %v3358 = vmul.f32 1.0, %v3357
  %v3359 = vrcp.pop %v3311
  %v3360 = vmul.f32 %v3311, %v3359
  %v3361 = vsub.f32 1.0, %v3360
  %v3362 = vmul.f32 %v3359, %v3361
  %v3363 = vadd.f32 %v3359, %v3362
  %vm3364 = vweird.f32 %v3311
  %vm3365 = vweird.f32 %v3359
  %vm3366 = vmor %vm3364, %vm3365
  %v3367 = vsel %vm3366, %v3359, %v3363
  %v3368 = vand.u32 2147483647, %v3311
  %vm3369 = vcmp.eq.f32.partialorder %v3368, 8.507059e+37
  %v3370 = vand.u32 %v3311, 2147483648
  %v3371 = vor.u32 1.1754944e-38, %v3370
  %v3372 = vsel %vm3369, %v3371, %v3367
  %v3373 = vmul.f32 1.0, %v3372
  %v3374 = vrcp.pop %v3312
  %v3375 = vmul.f32 %v3312, %v3374
  %v3376 = vsub.f32 1.0, %v3375
  %v3377 = vmul.f32 %v3374, %v3376
  %v3378 = vadd.f32 %v3374, %v3377
  %vm3379 = vweird.f32 %v3312
  %vm3380 = vweird.f32 %v3374
  %vm3381 = vmor %vm3379, %vm3380
  %v3382 = vsel %vm3381, %v3374, %v3378
  %v3383 = vand.u32 2147483647, %v3312
  %vm3384 = vcmp.eq.f32.partialorder %v3383, 8.507059e+37
  %v3385 = vand.u32 %v3312, 2147483648
  %v3386 = vor.u32 1.1754944e-38, %v3385
  %v3387 = vsel %vm3384, %v3386, %v3382
  %v3388 = vmul.f32 1.0, %v3387
  %v3389 = vrcp.pop %v3313
  %v3390 = vmul.f32 %v3313, %v3389
  %v3391 = vsub.f32 1.0, %v3390
  %v3392 = vmul.f32 %v3389, %v3391
  %v3393 = vadd.f32 %v3389, %v3392
  %vm3394 = vweird.f32 %v3313
  %vm3395 = vweird.f32 %v3389
  %vm3396 = vmor %vm3394, %vm3395
  %v3397 = vsel %vm3396, %v3389, %v3393
  %v3398 = vand.u32 2147483647, %v3313
  %vm3399 = vcmp.eq.f32.partialorder %v3398, 8.507059e+37
  %v3400 = vand.u32 %v3313, 2147483648
  %v3401 = vor.u32 1.1754944e-38, %v3400
  %v3402 = vsel %vm3399, %v3401, %v3397
  %v3403 = vmul.f32 1.0, %v3402
  %v3404 = vtanh.pop %v3261
  %v3405 = vtanh.pop %v3287
  %v3406 = vmul.f32 %v3358, %v3066
  %v3407 = vmul.f32 %v3373, %v3067
  %v3408 = vmul.f32 %v3328, %v3404
  %v3409 = vmul.f32 %v3343, %v3405
  %v3410 = vadd.f32 %v3406, %v3408
  %v3411 = vadd.f32 %v3407, %v3409
  %v3412 = vtanh.pop %v3410
  %v3413 = vtanh.pop %v3411
  %v3414 = vmul.f32 %v3388, %v3412
  %v3415 = vmul.f32 %v3403, %v3413
  %v3416 = vpack.c.bf16 %v3414, %v3414
  %v3417 = vpack.c.bf16 %v3415, %v3415
  %v3418 = vld [vmem:[#allocation2 + $0x1c0] sm:$0xff]
  %v3419 = vld [vmem:[#allocation2 + $0x1c8] sm:$0xff]
  %v3420 = vld [vmem:[#allocation2 + $0x1d0] sm:$0xff]
  %v3421 = vld [vmem:[#allocation2 + $0x1d8] sm:$0xff]
  %v3422 = vld [vmem:[#allocation2 + $0x1e0] sm:$0xff]
  %v3423 = vld [vmem:[#allocation2 + $0x1e8] sm:$0xff]
  %v3424 = vld [vmem:[#allocation2 + $0x1f0] sm:$0xff]
  %v3425 = vld [vmem:[#allocation2 + $0x1f8] sm:$0xff]
  %3426 = vmatpush.bf16.msra.mxu0 %v1162
  %3427 = vmatpush.bf16.msra.mxu0 %v1154
  %3428 = vmatpush.bf16.msra.mxu0 %v1146
  %3429 = vmatpush.bf16.msra.mxu0 %v1138
  %3430 = vmatpush.bf16.msra.mxu0 %v1130
  %3431 = vmatpush.bf16.msra.mxu0 %v1122
  %3432 = vmatpush.bf16.msra.mxu0 %v1114
  %3433 = vmatpush.bf16.msra.mxu0 %v1106
  %3434 = vmatmul.bf16.gmra.mxu0 %v3416
  %v3435 = vpop.f32.mrf.mxu0
  %v3436 = vadd.f32 %v3418, %v3435
  %v3437 = vpop.f32.mrf.mxu0
  %3438 = vdwg.mxu0
  %3439 = vmatpush.bf16.msra.mxu0 %v1226
  %3440 = vmatpush.bf16.msra.mxu0 %v1218
  %3441 = vmatpush.bf16.msra.mxu0 %v1210
  %3442 = vmatpush.bf16.msra.mxu0 %v1202
  %3443 = vmatpush.bf16.msra.mxu0 %v1194
  %3444 = vmatpush.bf16.msra.mxu0 %v1186
  %3445 = vmatpush.bf16.msra.mxu0 %v1178
  %3446 = vmatpush.bf16.msra.mxu0 %v1170
  %3447 = vmatmul.bf16.gmra.mxu0 %v3417
  %v3448 = vpop.f32.mrf.mxu0
  %v3449 = vadd.f32 %v3436, %v3448
  %v3450 = vpop.f32.mrf.mxu0
  %3451 = vdwg.mxu0
  %3452 = vmatpush.bf16.msra.mxu0 %v1163
  %3453 = vmatpush.bf16.msra.mxu0 %v1155
  %3454 = vmatpush.bf16.msra.mxu0 %v1147
  %3455 = vmatpush.bf16.msra.mxu0 %v1139
  %3456 = vmatpush.bf16.msra.mxu0 %v1131
  %3457 = vmatpush.bf16.msra.mxu0 %v1123
  %3458 = vmatpush.bf16.msra.mxu0 %v1115
  %3459 = vmatpush.bf16.msra.mxu0 %v1107
  %3460 = vmatmul.bf16.gmra.mxu0 %v3416
  %v3461 = vpop.f32.mrf.mxu0
  %v3462 = vadd.f32 %v3419, %v3461
  %v3463 = vpop.f32.mrf.mxu0
  %3464 = vdwg.mxu0
  %3465 = vmatpush.bf16.msra.mxu0 %v1227
  %3466 = vmatpush.bf16.msra.mxu0 %v1219
  %3467 = vmatpush.bf16.msra.mxu0 %v1211
  %3468 = vmatpush.bf16.msra.mxu0 %v1203
  %3469 = vmatpush.bf16.msra.mxu0 %v1195
  %3470 = vmatpush.bf16.msra.mxu0 %v1187
  %3471 = vmatpush.bf16.msra.mxu0 %v1179
  %3472 = vmatpush.bf16.msra.mxu0 %v1171
  %3473 = vmatmul.bf16.gmra.mxu0 %v3417
  %v3474 = vpop.f32.mrf.mxu0
  %v3475 = vadd.f32 %v3462, %v3474
  %v3476 = vpop.f32.mrf.mxu0
  %3477 = vdwg.mxu0
  %3478 = vmatpush.bf16.msra.mxu0 %v1164
  %3479 = vmatpush.bf16.msra.mxu0 %v1156
  %3480 = vmatpush.bf16.msra.mxu0 %v1148
  %3481 = vmatpush.bf16.msra.mxu0 %v1140
  %3482 = vmatpush.bf16.msra.mxu0 %v1132
  %3483 = vmatpush.bf16.msra.mxu0 %v1124
  %3484 = vmatpush.bf16.msra.mxu0 %v1116
  %3485 = vmatpush.bf16.msra.mxu0 %v1108
  %3486 = vmatmul.bf16.gmra.mxu0 %v3416
  %v3487 = vpop.f32.mrf.mxu0
  %v3488 = vadd.f32 %v3420, %v3487
  %v3489 = vpop.f32.mrf.mxu0
  %3490 = vdwg.mxu0
  %3491 = vmatpush.bf16.msra.mxu0 %v1228
  %3492 = vmatpush.bf16.msra.mxu0 %v1220
  %3493 = vmatpush.bf16.msra.mxu0 %v1212
  %3494 = vmatpush.bf16.msra.mxu0 %v1204
  %3495 = vmatpush.bf16.msra.mxu0 %v1196
  %3496 = vmatpush.bf16.msra.mxu0 %v1188
  %3497 = vmatpush.bf16.msra.mxu0 %v1180
  %3498 = vmatpush.bf16.msra.mxu0 %v1172
  %3499 = vmatmul.bf16.gmra.mxu0 %v3417
  %v3500 = vpop.f32.mrf.mxu0
  %v3501 = vadd.f32 %v3488, %v3500
  %v3502 = vpop.f32.mrf.mxu0
  %3503 = vdwg.mxu0
  %3504 = vmatpush.bf16.msra.mxu0 %v1165
  %3505 = vmatpush.bf16.msra.mxu0 %v1157
  %3506 = vmatpush.bf16.msra.mxu0 %v1149
  %3507 = vmatpush.bf16.msra.mxu0 %v1141
  %3508 = vmatpush.bf16.msra.mxu0 %v1133
  %3509 = vmatpush.bf16.msra.mxu0 %v1125
  %3510 = vmatpush.bf16.msra.mxu0 %v1117
  %3511 = vmatpush.bf16.msra.mxu0 %v1109
  %3512 = vmatmul.bf16.gmra.mxu0 %v3416
  %v3513 = vpop.f32.mrf.mxu0
  %v3514 = vadd.f32 %v3421, %v3513
  %v3515 = vpop.f32.mrf.mxu0
  %3516 = vdwg.mxu0
  %3517 = vmatpush.bf16.msra.mxu0 %v1229
  %3518 = vmatpush.bf16.msra.mxu0 %v1221
  %3519 = vmatpush.bf16.msra.mxu0 %v1213
  %3520 = vmatpush.bf16.msra.mxu0 %v1205
  %3521 = vmatpush.bf16.msra.mxu0 %v1197
  %3522 = vmatpush.bf16.msra.mxu0 %v1189
  %3523 = vmatpush.bf16.msra.mxu0 %v1181
  %3524 = vmatpush.bf16.msra.mxu0 %v1173
  %3525 = vmatmul.bf16.gmra.mxu0 %v3417
  %v3526 = vpop.f32.mrf.mxu0
  %v3527 = vadd.f32 %v3514, %v3526
  %v3528 = vpop.f32.mrf.mxu0
  %3529 = vdwg.mxu0
  %3530 = vmatpush.bf16.msra.mxu0 %v1166
  %3531 = vmatpush.bf16.msra.mxu0 %v1158
  %3532 = vmatpush.bf16.msra.mxu0 %v1150
  %3533 = vmatpush.bf16.msra.mxu0 %v1142
  %3534 = vmatpush.bf16.msra.mxu0 %v1134
  %3535 = vmatpush.bf16.msra.mxu0 %v1126
  %3536 = vmatpush.bf16.msra.mxu0 %v1118
  %3537 = vmatpush.bf16.msra.mxu0 %v1110
  %3538 = vmatmul.bf16.gmra.mxu0 %v3416
  %v3539 = vpop.f32.mrf.mxu0
  %v3540 = vadd.f32 %v3422, %v3539
  %v3541 = vpop.f32.mrf.mxu0
  %3542 = vdwg.mxu0
  %3543 = vmatpush.bf16.msra.mxu0 %v1230
  %3544 = vmatpush.bf16.msra.mxu0 %v1222
  %3545 = vmatpush.bf16.msra.mxu0 %v1214
  %3546 = vmatpush.bf16.msra.mxu0 %v1206
  %3547 = vmatpush.bf16.msra.mxu0 %v1198
  %3548 = vmatpush.bf16.msra.mxu0 %v1190
  %3549 = vmatpush.bf16.msra.mxu0 %v1182
  %3550 = vmatpush.bf16.msra.mxu0 %v1174
  %3551 = vmatmul.bf16.gmra.mxu0 %v3417
  %v3552 = vpop.f32.mrf.mxu0
  %v3553 = vadd.f32 %v3540, %v3552
  %v3554 = vpop.f32.mrf.mxu0
  %3555 = vdwg.mxu0
  %3556 = vmatpush.bf16.msra.mxu0 %v1167
  %3557 = vmatpush.bf16.msra.mxu0 %v1159
  %3558 = vmatpush.bf16.msra.mxu0 %v1151
  %3559 = vmatpush.bf16.msra.mxu0 %v1143
  %3560 = vmatpush.bf16.msra.mxu0 %v1135
  %3561 = vmatpush.bf16.msra.mxu0 %v1127
  %3562 = vmatpush.bf16.msra.mxu0 %v1119
  %3563 = vmatpush.bf16.msra.mxu0 %v1111
  %3564 = vmatmul.bf16.gmra.mxu0 %v3416
  %v3565 = vpop.f32.mrf.mxu0
  %v3566 = vadd.f32 %v3423, %v3565
  %v3567 = vpop.f32.mrf.mxu0
  %3568 = vdwg.mxu0
  %3569 = vmatpush.bf16.msra.mxu0 %v1231
  %3570 = vmatpush.bf16.msra.mxu0 %v1223
  %3571 = vmatpush.bf16.msra.mxu0 %v1215
  %3572 = vmatpush.bf16.msra.mxu0 %v1207
  %3573 = vmatpush.bf16.msra.mxu0 %v1199
  %3574 = vmatpush.bf16.msra.mxu0 %v1191
  %3575 = vmatpush.bf16.msra.mxu0 %v1183
  %3576 = vmatpush.bf16.msra.mxu0 %v1175
  %3577 = vmatmul.bf16.gmra.mxu0 %v3417
  %v3578 = vpop.f32.mrf.mxu0
  %v3579 = vadd.f32 %v3566, %v3578
  %v3580 = vpop.f32.mrf.mxu0
  %3581 = vdwg.mxu0
  %3582 = vmatpush.bf16.msra.mxu0 %v1168
  %3583 = vmatpush.bf16.msra.mxu0 %v1160
  %3584 = vmatpush.bf16.msra.mxu0 %v1152
  %3585 = vmatpush.bf16.msra.mxu0 %v1144
  %3586 = vmatpush.bf16.msra.mxu0 %v1136
  %3587 = vmatpush.bf16.msra.mxu0 %v1128
  %3588 = vmatpush.bf16.msra.mxu0 %v1120
  %3589 = vmatpush.bf16.msra.mxu0 %v1112
  %3590 = vmatmul.bf16.gmra.mxu0 %v3416
  %v3591 = vpop.f32.mrf.mxu0
  %v3592 = vadd.f32 %v3424, %v3591
  %v3593 = vpop.f32.mrf.mxu0
  %3594 = vdwg.mxu0
  %3595 = vmatpush.bf16.msra.mxu0 %v1232
  %3596 = vmatpush.bf16.msra.mxu0 %v1224
  %3597 = vmatpush.bf16.msra.mxu0 %v1216
  %3598 = vmatpush.bf16.msra.mxu0 %v1208
  %3599 = vmatpush.bf16.msra.mxu0 %v1200
  %3600 = vmatpush.bf16.msra.mxu0 %v1192
  %3601 = vmatpush.bf16.msra.mxu0 %v1184
  %3602 = vmatpush.bf16.msra.mxu0 %v1176
  %3603 = vmatmul.bf16.gmra.mxu0 %v3417
  %v3604 = vpop.f32.mrf.mxu0
  %v3605 = vadd.f32 %v3592, %v3604
  %v3606 = vpop.f32.mrf.mxu0
  %3607 = vdwg.mxu0
  %3608 = vmatpush.bf16.msra.mxu0 %v1169
  %3609 = vmatpush.bf16.msra.mxu0 %v1161
  %3610 = vmatpush.bf16.msra.mxu0 %v1153
  %3611 = vmatpush.bf16.msra.mxu0 %v1145
  %3612 = vmatpush.bf16.msra.mxu0 %v1137
  %3613 = vmatpush.bf16.msra.mxu0 %v1129
  %3614 = vmatpush.bf16.msra.mxu0 %v1121
  %3615 = vmatpush.bf16.msra.mxu0 %v1113
  %3616 = vmatmul.bf16.gmra.mxu0 %v3416
  %v3617 = vpop.f32.mrf.mxu0
  %v3618 = vadd.f32 %v3425, %v3617
  %v3619 = vpop.f32.mrf.mxu0
  %3620 = vdwg.mxu0
  %3621 = vmatpush.bf16.msra.mxu0 %v1233
  %3622 = vmatpush.bf16.msra.mxu0 %v1225
  %3623 = vmatpush.bf16.msra.mxu0 %v1217
  %3624 = vmatpush.bf16.msra.mxu0 %v1209
  %3625 = vmatpush.bf16.msra.mxu0 %v1201
  %3626 = vmatpush.bf16.msra.mxu0 %v1193
  %3627 = vmatpush.bf16.msra.mxu0 %v1185
  %3628 = vmatpush.bf16.msra.mxu0 %v1177
  %3629 = vmatmul.bf16.gmra.mxu0 %v3417
  %v3630 = vpop.f32.mrf.mxu0
  %v3631 = vadd.f32 %v3618, %v3630
  %v3632 = vpop.f32.mrf.mxu0
  %3633 = vdwg.mxu0
  %v3634 = vxor.u32 %v3449, 2147483648
  %v3635 = vxor.u32 %v3475, 2147483648
  %v3636 = vxor.u32 %v3501, 2147483648
  %v3637 = vxor.u32 %v3527, 2147483648
  %v3638 = vxor.u32 %v3553, 2147483648
  %v3639 = vxor.u32 %v3579, 2147483648
  %v3640 = vmul.f32 %v3634, 1.442695
  %v3641 = vpow.pop %v3640
  %v3642 = vmul.f32 %v3635, 1.442695
  %v3643 = vpow.pop %v3642
  %v3644 = vmul.f32 %v3636, 1.442695
  %v3645 = vpow.pop %v3644
  %v3646 = vmul.f32 %v3637, 1.442695
  %v3647 = vpow.pop %v3646
  %v3648 = vmul.f32 %v3638, 1.442695
  %v3649 = vpow.pop %v3648
  %v3650 = vmul.f32 %v3639, 1.442695
  %v3651 = vpow.pop %v3650
  %v3652 = vadd.f32 %v3641, 1.0
  %v3653 = vadd.f32 %v3643, 1.0
  %v3654 = vadd.f32 %v3645, 1.0
  %v3655 = vadd.f32 %v3647, 1.0
  %v3656 = vadd.f32 %v3649, 1.0
  %v3657 = vadd.f32 %v3651, 1.0
  %v3658 = vrcp.pop %v3652
  %v3659 = vmul.f32 %v3652, %v3658
  %v3660 = vsub.f32 1.0, %v3659
  %v3661 = vmul.f32 %v3658, %v3660
  %v3662 = vadd.f32 %v3658, %v3661
  %vm3663 = vweird.f32 %v3652
  %vm3664 = vweird.f32 %v3658
  %vm3665 = vmor %vm3663, %vm3664
  %v3666 = vsel %vm3665, %v3658, %v3662
  %v3667 = vand.u32 2147483647, %v3652
  %vm3668 = vcmp.eq.f32.partialorder %v3667, 8.507059e+37
  %v3669 = vand.u32 %v3652, 2147483648
  %v3670 = vor.u32 1.1754944e-38, %v3669
  %v3671 = vsel %vm3668, %v3670, %v3666
  %v3672 = vmul.f32 1.0, %v3671
  %v3673 = vrcp.pop %v3653
  %v3674 = vmul.f32 %v3653, %v3673
  %v3675 = vsub.f32 1.0, %v3674
  %v3676 = vmul.f32 %v3673, %v3675
  %v3677 = vadd.f32 %v3673, %v3676
  %vm3678 = vweird.f32 %v3653
  %vm3679 = vweird.f32 %v3673
  %vm3680 = vmor %vm3678, %vm3679
  %v3681 = vsel %vm3680, %v3673, %v3677
  %v3682 = vand.u32 2147483647, %v3653
  %vm3683 = vcmp.eq.f32.partialorder %v3682, 8.507059e+37
  %v3684 = vand.u32 %v3653, 2147483648
  %v3685 = vor.u32 1.1754944e-38, %v3684
  %v3686 = vsel %vm3683, %v3685, %v3681
  %v3687 = vmul.f32 1.0, %v3686
  %v3688 = vrcp.pop %v3654
  %v3689 = vmul.f32 %v3654, %v3688
  %v3690 = vsub.f32 1.0, %v3689
  %v3691 = vmul.f32 %v3688, %v3690
  %v3692 = vadd.f32 %v3688, %v3691
  %vm3693 = vweird.f32 %v3654
  %vm3694 = vweird.f32 %v3688
  %vm3695 = vmor %vm3693, %vm3694
  %v3696 = vsel %vm3695, %v3688, %v3692
  %v3697 = vand.u32 2147483647, %v3654
  %vm3698 = vcmp.eq.f32.partialorder %v3697, 8.507059e+37
  %v3699 = vand.u32 %v3654, 2147483648
  %v3700 = vor.u32 1.1754944e-38, %v3699
  %v3701 = vsel %vm3698, %v3700, %v3696
  %v3702 = vmul.f32 1.0, %v3701
  %v3703 = vrcp.pop %v3655
  %v3704 = vmul.f32 %v3655, %v3703
  %v3705 = vsub.f32 1.0, %v3704
  %v3706 = vmul.f32 %v3703, %v3705
  %v3707 = vadd.f32 %v3703, %v3706
  %vm3708 = vweird.f32 %v3655
  %vm3709 = vweird.f32 %v3703
  %vm3710 = vmor %vm3708, %vm3709
  %v3711 = vsel %vm3710, %v3703, %v3707
  %v3712 = vand.u32 2147483647, %v3655
  %vm3713 = vcmp.eq.f32.partialorder %v3712, 8.507059e+37
  %v3714 = vand.u32 %v3655, 2147483648
  %v3715 = vor.u32 1.1754944e-38, %v3714
  %v3716 = vsel %vm3713, %v3715, %v3711
  %v3717 = vmul.f32 1.0, %v3716
  %v3718 = vrcp.pop %v3656
  %v3719 = vmul.f32 %v3656, %v3718
  %v3720 = vsub.f32 1.0, %v3719
  %v3721 = vmul.f32 %v3718, %v3720
  %v3722 = vadd.f32 %v3718, %v3721
  %vm3723 = vweird.f32 %v3656
  %vm3724 = vweird.f32 %v3718
  %vm3725 = vmor %vm3723, %vm3724
  %v3726 = vsel %vm3725, %v3718, %v3722
  %v3727 = vand.u32 2147483647, %v3656
  %vm3728 = vcmp.eq.f32.partialorder %v3727, 8.507059e+37
  %v3729 = vand.u32 %v3656, 2147483648
  %v3730 = vor.u32 1.1754944e-38, %v3729
  %v3731 = vsel %vm3728, %v3730, %v3726
  %v3732 = vmul.f32 1.0, %v3731
  %v3733 = vrcp.pop %v3657
  %v3734 = vmul.f32 %v3657, %v3733
  %v3735 = vsub.f32 1.0, %v3734
  %v3736 = vmul.f32 %v3733, %v3735
  %v3737 = vadd.f32 %v3733, %v3736
  %vm3738 = vweird.f32 %v3657
  %vm3739 = vweird.f32 %v3733
  %vm3740 = vmor %vm3738, %vm3739
  %v3741 = vsel %vm3740, %v3733, %v3737
  %v3742 = vand.u32 2147483647, %v3657
  %vm3743 = vcmp.eq.f32.partialorder %v3742, 8.507059e+37
  %v3744 = vand.u32 %v3657, 2147483648
  %v3745 = vor.u32 1.1754944e-38, %v3744
  %v3746 = vsel %vm3743, %v3745, %v3741
  %v3747 = vmul.f32 1.0, %v3746
  %v3748 = vtanh.pop %v3605
  %v3749 = vtanh.pop %v3631
  %v3750 = vmul.f32 %v3702, %v3410
  %v3751 = vmul.f32 %v3717, %v3411
  %v3752 = vmul.f32 %v3672, %v3748
  %v3753 = vmul.f32 %v3687, %v3749
  %v3754 = vadd.f32 %v3750, %v3752
  %v3755 = vadd.f32 %v3751, %v3753
  %v3756 = vtanh.pop %v3754
  %v3757 = vtanh.pop %v3755
  %v3758 = vmul.f32 %v3732, %v3756
  %v3759 = vmul.f32 %v3747, %v3757
  %v3760 = vpack.c.bf16 %v3758, %v3758
  %v3761 = vpack.c.bf16 %v3759, %v3759
  %v3762 = vld [vmem:[#allocation2 + $0x200] sm:$0xff]
  %v3763 = vld [vmem:[#allocation2 + $0x208] sm:$0xff]
  %v3764 = vld [vmem:[#allocation2 + $0x210] sm:$0xff]
  %v3765 = vld [vmem:[#allocation2 + $0x218] sm:$0xff]
  %v3766 = vld [vmem:[#allocation2 + $0x220] sm:$0xff]
  %v3767 = vld [vmem:[#allocation2 + $0x228] sm:$0xff]
  %v3768 = vld [vmem:[#allocation2 + $0x230] sm:$0xff]
  %v3769 = vld [vmem:[#allocation2 + $0x238] sm:$0xff]
  %3770 = vmatpush.bf16.msra.mxu0 %v1162
  %3771 = vmatpush.bf16.msra.mxu0 %v1154
  %3772 = vmatpush.bf16.msra.mxu0 %v1146
  %3773 = vmatpush.bf16.msra.mxu0 %v1138
  %3774 = vmatpush.bf16.msra.mxu0 %v1130
  %3775 = vmatpush.bf16.msra.mxu0 %v1122
  %3776 = vmatpush.bf16.msra.mxu0 %v1114
  %3777 = vmatpush.bf16.msra.mxu0 %v1106
  %3778 = vmatmul.bf16.gmra.mxu0 %v3760
  %v3779 = vpop.f32.mrf.mxu0
  %v3780 = vadd.f32 %v3762, %v3779
  %v3781 = vpop.f32.mrf.mxu0
  %3782 = vdwg.mxu0
  %3783 = vmatpush.bf16.msra.mxu0 %v1226
  %3784 = vmatpush.bf16.msra.mxu0 %v1218
  %3785 = vmatpush.bf16.msra.mxu0 %v1210
  %3786 = vmatpush.bf16.msra.mxu0 %v1202
  %3787 = vmatpush.bf16.msra.mxu0 %v1194
  %3788 = vmatpush.bf16.msra.mxu0 %v1186
  %3789 = vmatpush.bf16.msra.mxu0 %v1178
  %3790 = vmatpush.bf16.msra.mxu0 %v1170
  %3791 = vmatmul.bf16.gmra.mxu0 %v3761
  %v3792 = vpop.f32.mrf.mxu0
  %v3793 = vadd.f32 %v3780, %v3792
  %v3794 = vpop.f32.mrf.mxu0
  %3795 = vdwg.mxu0
  %3796 = vmatpush.bf16.msra.mxu0 %v1163
  %3797 = vmatpush.bf16.msra.mxu0 %v1155
  %3798 = vmatpush.bf16.msra.mxu0 %v1147
  %3799 = vmatpush.bf16.msra.mxu0 %v1139
  %3800 = vmatpush.bf16.msra.mxu0 %v1131
  %3801 = vmatpush.bf16.msra.mxu0 %v1123
  %3802 = vmatpush.bf16.msra.mxu0 %v1115
  %3803 = vmatpush.bf16.msra.mxu0 %v1107
  %3804 = vmatmul.bf16.gmra.mxu0 %v3760
  %v3805 = vpop.f32.mrf.mxu0
  %v3806 = vadd.f32 %v3763, %v3805
  %v3807 = vpop.f32.mrf.mxu0
  %3808 = vdwg.mxu0
  %3809 = vmatpush.bf16.msra.mxu0 %v1227
  %3810 = vmatpush.bf16.msra.mxu0 %v1219
  %3811 = vmatpush.bf16.msra.mxu0 %v1211
  %3812 = vmatpush.bf16.msra.mxu0 %v1203
  %3813 = vmatpush.bf16.msra.mxu0 %v1195
  %3814 = vmatpush.bf16.msra.mxu0 %v1187
  %3815 = vmatpush.bf16.msra.mxu0 %v1179
  %3816 = vmatpush.bf16.msra.mxu0 %v1171
  %3817 = vmatmul.bf16.gmra.mxu0 %v3761
  %v3818 = vpop.f32.mrf.mxu0
  %v3819 = vadd.f32 %v3806, %v3818
  %v3820 = vpop.f32.mrf.mxu0
  %3821 = vdwg.mxu0
  %3822 = vmatpush.bf16.msra.mxu0 %v1164
  %3823 = vmatpush.bf16.msra.mxu0 %v1156
  %3824 = vmatpush.bf16.msra.mxu0 %v1148
  %3825 = vmatpush.bf16.msra.mxu0 %v1140
  %3826 = vmatpush.bf16.msra.mxu0 %v1132
  %3827 = vmatpush.bf16.msra.mxu0 %v1124
  %3828 = vmatpush.bf16.msra.mxu0 %v1116
  %3829 = vmatpush.bf16.msra.mxu0 %v1108
  %3830 = vmatmul.bf16.gmra.mxu0 %v3760
  %v3831 = vpop.f32.mrf.mxu0
  %v3832 = vadd.f32 %v3764, %v3831
  %v3833 = vpop.f32.mrf.mxu0
  %3834 = vdwg.mxu0
  %3835 = vmatpush.bf16.msra.mxu0 %v1228
  %3836 = vmatpush.bf16.msra.mxu0 %v1220
  %3837 = vmatpush.bf16.msra.mxu0 %v1212
  %3838 = vmatpush.bf16.msra.mxu0 %v1204
  %3839 = vmatpush.bf16.msra.mxu0 %v1196
  %3840 = vmatpush.bf16.msra.mxu0 %v1188
  %3841 = vmatpush.bf16.msra.mxu0 %v1180
  %3842 = vmatpush.bf16.msra.mxu0 %v1172
  %3843 = vmatmul.bf16.gmra.mxu0 %v3761
  %v3844 = vpop.f32.mrf.mxu0
  %v3845 = vadd.f32 %v3832, %v3844
  %v3846 = vpop.f32.mrf.mxu0
  %3847 = vdwg.mxu0
  %3848 = vmatpush.bf16.msra.mxu0 %v1165
  %3849 = vmatpush.bf16.msra.mxu0 %v1157
  %3850 = vmatpush.bf16.msra.mxu0 %v1149
  %3851 = vmatpush.bf16.msra.mxu0 %v1141
  %3852 = vmatpush.bf16.msra.mxu0 %v1133
  %3853 = vmatpush.bf16.msra.mxu0 %v1125
  %3854 = vmatpush.bf16.msra.mxu0 %v1117
  %3855 = vmatpush.bf16.msra.mxu0 %v1109
  %3856 = vmatmul.bf16.gmra.mxu0 %v3760
  %v3857 = vpop.f32.mrf.mxu0
  %v3858 = vadd.f32 %v3765, %v3857
  %v3859 = vpop.f32.mrf.mxu0
  %3860 = vdwg.mxu0
  %3861 = vmatpush.bf16.msra.mxu0 %v1229
  %3862 = vmatpush.bf16.msra.mxu0 %v1221
  %3863 = vmatpush.bf16.msra.mxu0 %v1213
  %3864 = vmatpush.bf16.msra.mxu0 %v1205
  %3865 = vmatpush.bf16.msra.mxu0 %v1197
  %3866 = vmatpush.bf16.msra.mxu0 %v1189
  %3867 = vmatpush.bf16.msra.mxu0 %v1181
  %3868 = vmatpush.bf16.msra.mxu0 %v1173
  %3869 = vmatmul.bf16.gmra.mxu0 %v3761
  %v3870 = vpop.f32.mrf.mxu0
  %v3871 = vadd.f32 %v3858, %v3870
  %v3872 = vpop.f32.mrf.mxu0
  %3873 = vdwg.mxu0
  %3874 = vmatpush.bf16.msra.mxu0 %v1166
  %3875 = vmatpush.bf16.msra.mxu0 %v1158
  %3876 = vmatpush.bf16.msra.mxu0 %v1150
  %3877 = vmatpush.bf16.msra.mxu0 %v1142
  %3878 = vmatpush.bf16.msra.mxu0 %v1134
  %3879 = vmatpush.bf16.msra.mxu0 %v1126
  %3880 = vmatpush.bf16.msra.mxu0 %v1118
  %3881 = vmatpush.bf16.msra.mxu0 %v1110
  %3882 = vmatmul.bf16.gmra.mxu0 %v3760
  %v3883 = vpop.f32.mrf.mxu0
  %v3884 = vadd.f32 %v3766, %v3883
  %v3885 = vpop.f32.mrf.mxu0
  %3886 = vdwg.mxu0
  %3887 = vmatpush.bf16.msra.mxu0 %v1230
  %3888 = vmatpush.bf16.msra.mxu0 %v1222
  %3889 = vmatpush.bf16.msra.mxu0 %v1214
  %3890 = vmatpush.bf16.msra.mxu0 %v1206
  %3891 = vmatpush.bf16.msra.mxu0 %v1198
  %3892 = vmatpush.bf16.msra.mxu0 %v1190
  %3893 = vmatpush.bf16.msra.mxu0 %v1182
  %3894 = vmatpush.bf16.msra.mxu0 %v1174
  %3895 = vmatmul.bf16.gmra.mxu0 %v3761
  %v3896 = vpop.f32.mrf.mxu0
  %v3897 = vadd.f32 %v3884, %v3896
  %v3898 = vpop.f32.mrf.mxu0
  %3899 = vdwg.mxu0
  %3900 = vmatpush.bf16.msra.mxu0 %v1167
  %3901 = vmatpush.bf16.msra.mxu0 %v1159
  %3902 = vmatpush.bf16.msra.mxu0 %v1151
  %3903 = vmatpush.bf16.msra.mxu0 %v1143
  %3904 = vmatpush.bf16.msra.mxu0 %v1135
  %3905 = vmatpush.bf16.msra.mxu0 %v1127
  %3906 = vmatpush.bf16.msra.mxu0 %v1119
  %3907 = vmatpush.bf16.msra.mxu0 %v1111
  %3908 = vmatmul.bf16.gmra.mxu0 %v3760
  %v3909 = vpop.f32.mrf.mxu0
  %v3910 = vadd.f32 %v3767, %v3909
  %v3911 = vpop.f32.mrf.mxu0
  %3912 = vdwg.mxu0
  %3913 = vmatpush.bf16.msra.mxu0 %v1231
  %3914 = vmatpush.bf16.msra.mxu0 %v1223
  %3915 = vmatpush.bf16.msra.mxu0 %v1215
  %3916 = vmatpush.bf16.msra.mxu0 %v1207
  %3917 = vmatpush.bf16.msra.mxu0 %v1199
  %3918 = vmatpush.bf16.msra.mxu0 %v1191
  %3919 = vmatpush.bf16.msra.mxu0 %v1183
  %3920 = vmatpush.bf16.msra.mxu0 %v1175
  %3921 = vmatmul.bf16.gmra.mxu0 %v3761
  %v3922 = vpop.f32.mrf.mxu0
  %v3923 = vadd.f32 %v3910, %v3922
  %v3924 = vpop.f32.mrf.mxu0
  %3925 = vdwg.mxu0
  %3926 = vmatpush.bf16.msra.mxu0 %v1168
  %3927 = vmatpush.bf16.msra.mxu0 %v1160
  %3928 = vmatpush.bf16.msra.mxu0 %v1152
  %3929 = vmatpush.bf16.msra.mxu0 %v1144
  %3930 = vmatpush.bf16.msra.mxu0 %v1136
  %3931 = vmatpush.bf16.msra.mxu0 %v1128
  %3932 = vmatpush.bf16.msra.mxu0 %v1120
  %3933 = vmatpush.bf16.msra.mxu0 %v1112
  %3934 = vmatmul.bf16.gmra.mxu0 %v3760
  %v3935 = vpop.f32.mrf.mxu0
  %v3936 = vadd.f32 %v3768, %v3935
  %v3937 = vpop.f32.mrf.mxu0
  %3938 = vdwg.mxu0
  %3939 = vmatpush.bf16.msra.mxu0 %v1232
  %3940 = vmatpush.bf16.msra.mxu0 %v1224
  %3941 = vmatpush.bf16.msra.mxu0 %v1216
  %3942 = vmatpush.bf16.msra.mxu0 %v1208
  %3943 = vmatpush.bf16.msra.mxu0 %v1200
  %3944 = vmatpush.bf16.msra.mxu0 %v1192
  %3945 = vmatpush.bf16.msra.mxu0 %v1184
  %3946 = vmatpush.bf16.msra.mxu0 %v1176
  %3947 = vmatmul.bf16.gmra.mxu0 %v3761
  %v3948 = vpop.f32.mrf.mxu0
  %v3949 = vadd.f32 %v3936, %v3948
  %v3950 = vpop.f32.mrf.mxu0
  %3951 = vdwg.mxu0
  %3952 = vmatpush.bf16.msra.mxu0 %v1169
  %3953 = vmatpush.bf16.msra.mxu0 %v1161
  %3954 = vmatpush.bf16.msra.mxu0 %v1153
  %3955 = vmatpush.bf16.msra.mxu0 %v1145
  %3956 = vmatpush.bf16.msra.mxu0 %v1137
  %3957 = vmatpush.bf16.msra.mxu0 %v1129
  %3958 = vmatpush.bf16.msra.mxu0 %v1121
  %3959 = vmatpush.bf16.msra.mxu0 %v1113
  %3960 = vmatmul.bf16.gmra.mxu0 %v3760
  %v3961 = vpop.f32.mrf.mxu0
  %v3962 = vadd.f32 %v3769, %v3961
  %v3963 = vpop.f32.mrf.mxu0
  %3964 = vdwg.mxu0
  %3965 = vmatpush.bf16.msra.mxu0 %v1233
  %3966 = vmatpush.bf16.msra.mxu0 %v1225
  %3967 = vmatpush.bf16.msra.mxu0 %v1217
  %3968 = vmatpush.bf16.msra.mxu0 %v1209
  %3969 = vmatpush.bf16.msra.mxu0 %v1201
  %3970 = vmatpush.bf16.msra.mxu0 %v1193
  %3971 = vmatpush.bf16.msra.mxu0 %v1185
  %3972 = vmatpush.bf16.msra.mxu0 %v1177
  %3973 = vmatmul.bf16.gmra.mxu0 %v3761
  %v3974 = vpop.f32.mrf.mxu0
  %v3975 = vadd.f32 %v3962, %v3974
  %v3976 = vpop.f32.mrf.mxu0
  %3977 = vdwg.mxu0
  %v3978 = vxor.u32 %v3793, 2147483648
  %v3979 = vxor.u32 %v3819, 2147483648
  %v3980 = vxor.u32 %v3845, 2147483648
  %v3981 = vxor.u32 %v3871, 2147483648
  %v3982 = vxor.u32 %v3897, 2147483648
  %v3983 = vxor.u32 %v3923, 2147483648
  %v3984 = vmul.f32 %v3978, 1.442695
  %v3985 = vpow.pop %v3984
  %v3986 = vmul.f32 %v3979, 1.442695
  %v3987 = vpow.pop %v3986
  %v3988 = vmul.f32 %v3980, 1.442695
  %v3989 = vpow.pop %v3988
  %v3990 = vmul.f32 %v3981, 1.442695
  %v3991 = vpow.pop %v3990
  %v3992 = vmul.f32 %v3982, 1.442695
  %v3993 = vpow.pop %v3992
  %v3994 = vmul.f32 %v3983, 1.442695
  %v3995 = vpow.pop %v3994
  %v3996 = vadd.f32 %v3985, 1.0
  %v3997 = vadd.f32 %v3987, 1.0
  %v3998 = vadd.f32 %v3989, 1.0
  %v3999 = vadd.f32 %v3991, 1.0
  %v4000 = vadd.f32 %v3993, 1.0
  %v4001 = vadd.f32 %v3995, 1.0
  %v4002 = vrcp.pop %v3996
  %v4003 = vmul.f32 %v3996, %v4002
  %v4004 = vsub.f32 1.0, %v4003
  %v4005 = vmul.f32 %v4002, %v4004
  %v4006 = vadd.f32 %v4002, %v4005
  %vm4007 = vweird.f32 %v3996
  %vm4008 = vweird.f32 %v4002
  %vm4009 = vmor %vm4007, %vm4008
  %v4010 = vsel %vm4009, %v4002, %v4006
  %v4011 = vand.u32 2147483647, %v3996
  %vm4012 = vcmp.eq.f32.partialorder %v4011, 8.507059e+37
  %v4013 = vand.u32 %v3996, 2147483648
  %v4014 = vor.u32 1.1754944e-38, %v4013
  %v4015 = vsel %vm4012, %v4014, %v4010
  %v4016 = vmul.f32 1.0, %v4015
  %v4017 = vrcp.pop %v3997
  %v4018 = vmul.f32 %v3997, %v4017
  %v4019 = vsub.f32 1.0, %v4018
  %v4020 = vmul.f32 %v4017, %v4019
  %v4021 = vadd.f32 %v4017, %v4020
  %vm4022 = vweird.f32 %v3997
  %vm4023 = vweird.f32 %v4017
  %vm4024 = vmor %vm4022, %vm4023
  %v4025 = vsel %vm4024, %v4017, %v4021
  %v4026 = vand.u32 2147483647, %v3997
  %vm4027 = vcmp.eq.f32.partialorder %v4026, 8.507059e+37
  %v4028 = vand.u32 %v3997, 2147483648
  %v4029 = vor.u32 1.1754944e-38, %v4028
  %v4030 = vsel %vm4027, %v4029, %v4025
  %v4031 = vmul.f32 1.0, %v4030
  %v4032 = vrcp.pop %v3998
  %v4033 = vmul.f32 %v3998, %v4032
  %v4034 = vsub.f32 1.0, %v4033
  %v4035 = vmul.f32 %v4032, %v4034
  %v4036 = vadd.f32 %v4032, %v4035
  %vm4037 = vweird.f32 %v3998
  %vm4038 = vweird.f32 %v4032
  %vm4039 = vmor %vm4037, %vm4038
  %v4040 = vsel %vm4039, %v4032, %v4036
  %v4041 = vand.u32 2147483647, %v3998
  %vm4042 = vcmp.eq.f32.partialorder %v4041, 8.507059e+37
  %v4043 = vand.u32 %v3998, 2147483648
  %v4044 = vor.u32 1.1754944e-38, %v4043
  %v4045 = vsel %vm4042, %v4044, %v4040
  %v4046 = vmul.f32 1.0, %v4045
  %v4047 = vrcp.pop %v3999
  %v4048 = vmul.f32 %v3999, %v4047
  %v4049 = vsub.f32 1.0, %v4048
  %v4050 = vmul.f32 %v4047, %v4049
  %v4051 = vadd.f32 %v4047, %v4050
  %vm4052 = vweird.f32 %v3999
  %vm4053 = vweird.f32 %v4047
  %vm4054 = vmor %vm4052, %vm4053
  %v4055 = vsel %vm4054, %v4047, %v4051
  %v4056 = vand.u32 2147483647, %v3999
  %vm4057 = vcmp.eq.f32.partialorder %v4056, 8.507059e+37
  %v4058 = vand.u32 %v3999, 2147483648
  %v4059 = vor.u32 1.1754944e-38, %v4058
  %v4060 = vsel %vm4057, %v4059, %v4055
  %v4061 = vmul.f32 1.0, %v4060
  %v4062 = vrcp.pop %v4000
  %v4063 = vmul.f32 %v4000, %v4062
  %v4064 = vsub.f32 1.0, %v4063
  %v4065 = vmul.f32 %v4062, %v4064
  %v4066 = vadd.f32 %v4062, %v4065
  %vm4067 = vweird.f32 %v4000
  %vm4068 = vweird.f32 %v4062
  %vm4069 = vmor %vm4067, %vm4068
  %v4070 = vsel %vm4069, %v4062, %v4066
  %v4071 = vand.u32 2147483647, %v4000
  %vm4072 = vcmp.eq.f32.partialorder %v4071, 8.507059e+37
  %v4073 = vand.u32 %v4000, 2147483648
  %v4074 = vor.u32 1.1754944e-38, %v4073
  %v4075 = vsel %vm4072, %v4074, %v4070
  %v4076 = vmul.f32 1.0, %v4075
  %v4077 = vrcp.pop %v4001
  %v4078 = vmul.f32 %v4001, %v4077
  %v4079 = vsub.f32 1.0, %v4078
  %v4080 = vmul.f32 %v4077, %v4079
  %v4081 = vadd.f32 %v4077, %v4080
  %vm4082 = vweird.f32 %v4001
  %vm4083 = vweird.f32 %v4077
  %vm4084 = vmor %vm4082, %vm4083
  %v4085 = vsel %vm4084, %v4077, %v4081
  %v4086 = vand.u32 2147483647, %v4001
  %vm4087 = vcmp.eq.f32.partialorder %v4086, 8.507059e+37
  %v4088 = vand.u32 %v4001, 2147483648
  %v4089 = vor.u32 1.1754944e-38, %v4088
  %v4090 = vsel %vm4087, %v4089, %v4085
  %v4091 = vmul.f32 1.0, %v4090
  %v4092 = vtanh.pop %v3949
  %v4093 = vtanh.pop %v3975
  %v4094 = vmul.f32 %v4046, %v3754
  %v4095 = vmul.f32 %v4061, %v3755
  %v4096 = vmul.f32 %v4016, %v4092
  %v4097 = vmul.f32 %v4031, %v4093
  %v4098 = vadd.f32 %v4094, %v4096
  %v4099 = vadd.f32 %v4095, %v4097
  %v4100 = vtanh.pop %v4098
  %v4101 = vtanh.pop %v4099
  %v4102 = vmul.f32 %v4076, %v4100
  %v4103 = vmul.f32 %v4091, %v4101
  %v4104 = vpack.c.bf16 %v4103, %v4102
  %v4105 = vld [vmem:[%s4] sm:$0xf]
  %v4106 = vld [vmem:[%s4 + $0x4] sm:$0xf]
  %v4107 = vld [vmem:[%s4 + $0x8] sm:$0xf]
  %v4108 = vld [vmem:[%s4 + $0xc] sm:$0xf]
  %v4109 = vld [vmem:[%s4 + $0x10] sm:$0xf]
  %v4110 = vld [vmem:[%s4 + $0x14] sm:$0xf]
  %v4111 = vld [vmem:[%s4 + $0x18] sm:$0xf]
  %v4112 = vld [vmem:[%s4 + $0x1c] sm:$0xf]
  %v4113 = vld [vmem:[%s4 + $0x20] sm:$0xf]
  %v4114 = vld [vmem:[%s4 + $0x24] sm:$0xf]
  %v4115 = vld [vmem:[%s4 + $0x28] sm:$0xf]
  %v4116 = vld [vmem:[%s4 + $0x2c] sm:$0xf]
  %v4117 = vld [vmem:[%s4 + $0x30] sm:$0xf]
  %v4118 = vld [vmem:[%s4 + $0x34] sm:$0xf]
  %v4119 = vld [vmem:[%s4 + $0x38] sm:$0xf]
  %v4120 = vld [vmem:[%s4 + $0x3c] sm:$0xf]
  %v4121 = vld [vmem:[%s5] sm:$0x1]
  %v4123 = vperm.slane %v4121, 0
  %v4126 = vunpack.c.h.b16 %v4104
  %v4127 = vpack.c.b16 %v4126, %v4126
  %v4145 = vunpack.c.l.b16 %v4105
  %v4146 = vunpack.c.l.b16 %v4106
  %v4147 = vunpack.c.l.b16 %v4107
  %v4148 = vunpack.c.l.b16 %v4108
  %v4149 = vunpack.c.l.b16 %v4109
  %v4150 = vunpack.c.l.b16 %v4110
  %v4151 = vunpack.c.l.b16 %v4111
  %v4152 = vunpack.c.l.b16 %v4112
  %v4153 = vunpack.c.l.b16 %v4113
  %v4154 = vunpack.c.l.b16 %v4114
  %v4155 = vunpack.c.l.b16 %v4115
  %v4156 = vunpack.c.l.b16 %v4116
  %v4157 = vunpack.c.l.b16 %v4117
  %v4158 = vunpack.c.l.b16 %v4118
  %v4159 = vunpack.c.l.b16 %v4119
  %v4160 = vunpack.c.l.b16 %v4120
  %v4161 = vpack.c.b16 %v4146, %v4145
  %v4162 = vpack.c.b16 %v4148, %v4147
  %v4163 = vpack.c.b16 %v4150, %v4149
  %v4164 = vpack.c.b16 %v4152, %v4151
  %v4165 = vpack.c.b16 %v4154, %v4153
  %v4166 = vpack.c.b16 %v4156, %v4155
  %v4167 = vpack.c.b16 %v4158, %v4157
  %v4168 = vpack.c.b16 %v4160, %v4159
  %4177 = vmatpush.bf16.msra.mxu0 %v4168
  %4178 = vmatpush.bf16.msra.mxu0 %v4167
  %4179 = vmatpush.bf16.msra.mxu0 %v4166
  %4180 = vmatpush.bf16.msra.mxu0 %v4165
  %4181 = vmatpush.bf16.msra.mxu0 %v4164
  %4182 = vmatpush.bf16.msra.mxu0 %v4163
  %4183 = vmatpush.bf16.msra.mxu0 %v4162
  %4184 = vmatpush.bf16.msra.mxu0 %v4161
  %4185 = vmatmul.bf16.gmra.mxu0 %v4127
  %v4186 = vpop.f32.mrf.mxu0
  %v4187 = vadd.f32 %v4123, %v4186
  %v4188 = vpop.f32.mrf.mxu0
  %4189 = vdwg.mxu0
  %4190 = vst [vmem:[%s6] sm:$0xff] %v4187
  // Predicated region
  $region26: #{rnn_forward.1} parent=0 // pred_check
    _
  $region27: #{rnn_forward.1} parent=0 // pred_check_branch
    %4192 = sbr.rel (0) target = $region29
  $region28: #{rnn_forward.1} parent=0 // pred_region
    _
  $region29: #{rnn_forward.1} parent=0 // pred_fallthru
    _
  // Predicated region
  $region30: #{rnn_forward.1} parent=0 // pred_check
    _
  $region31: #{rnn_forward.1} parent=0 // pred_check_branch
    %4194 = sbr.rel (0) target = $region33
  $region32: #{rnn_forward.1} parent=0 // pred_region
    _
  $region33: #{rnn_forward.1} parent=0 // pred_fallthru
    _

</llo_original>
